<compile_context>
chip_gen: v6e
topology: v6e:2x2x1
jax: 0.10.0
libtpu: 0.0.40
codegen_flags: <defaults>
</compile_context>

<pallas_src>
import jax
import jax.numpy as jnp
from jax import lax
from jax.experimental import pallas as pl
from jax.experimental.pallas import tpu as pltpu

C_IN = 512        # module input channels (hard-coded in SpatialAttention)
C_MID = 256       # conv1x1 output channels
C_OUT = 512       # branch output channels
K3 = 3 * C_MID    # im2col depth per kernel row (dy)
BN_EPS = 1e-5

# Rough per-pixel VMEM estimate (bytes): x + out double-buffered (f32), colp
# scratch (bf16), and in-kernel matmul temporaries; plus fixed weight cost.
_PER_PIXEL_VMEM = 24 * 1024
_FIXED_VMEM = 8 * 1024 * 1024


# ----------------------------- Pallas kernel ------------------------------ #
def spatial_attention_kernel(x_ref, w1_ref, b1_ref, wc_ref, bc_ref, o_ref, colp_ref):
    # x_ref:   (NB, H, W, C_IN)        input block (NB batch elements)
    # w1_ref:  (C_IN, C_MID)           BN-folded 1x1 conv weight           bf16
    # b1_ref:  (1, C_MID)              BN-folded 1x1 conv bias             f32
    # wc_ref:  (3, 3*C_MID, C_OUT)     combined per-dy packed conv weight  bf16
    # bc_ref:  (1, C_OUT)              combined bias                       f32
    # o_ref:   (NB, H, W, C_IN)        output block
    # colp_ref:(NB, H+2, W, 3*C_MID)   H-padded W-im2col scratch           bf16
    NB, H, W, Cin = x_ref.shape
    M = NB * H * W

    # ---- conv1x1 + BN (folded): single bf16 MXU matmul, f32 accumulation ----
    xbf = x_ref[...].reshape(M, Cin).astype(jnp.bfloat16)
    y1 = jnp.dot(xbf, w1_ref[...], preferred_element_type=jnp.float32) + b1_ref[0]
    y1 = y1.astype(jnp.bfloat16).reshape(NB, H, W, C_MID)

    # ---- zero the small halo / boundary regions (every step: the scratch is
    #      uninitialized, and "parallel" grid sharding means program_id==0 may
    #      never execute on a given TensorCore) ----
    zrow = jnp.zeros((NB, 1, W, K3), jnp.bfloat16)
    colp_ref[:, 0:1, :, :] = zrow                       # top halo row
    colp_ref[:, H + 1:H + 2, :, :] = zrow               # bottom halo row
    zcol = jnp.zeros((NB, H, 1, C_MID), jnp.bfloat16)
    colp_ref[:, 1:H + 1, 0:1, 0:C_MID] = zcol           # left-tap boundary col
    colp_ref[:, 1:H + 1, W - 1:W, 2 * C_MID:3 * C_MID] = zcol  # right-tap boundary

    # ---- W-direction im2col via direct shifted stores (no concat temps) ----
    colp_ref[:, 1:H + 1, :, C_MID:2 * C_MID] = y1                       # dx = 0
    if W > 1:
        colp_ref[:, 1:H + 1, 1:W, 0:C_MID] = y1[:, :, :W - 1, :]        # dx = -1
        colp_ref[:, 1:H + 1, 0:W - 1, 2 * C_MID:3 * C_MID] = y1[:, :, 1:, :]  # dx = +1

    # ---- conv3x3 + conv1x3 + conv3x1 (BN-folded, tap-combined):
    #      3 deep-K (K=768) bf16 matmuls into ONE (M, C_OUT) f32 accumulator --
    acc = jnp.dot(colp_ref[:, 0:H, :, :].reshape(M, K3), wc_ref[0],
                  preferred_element_type=jnp.float32)
    acc = acc + jnp.dot(colp_ref[:, 1:H + 1, :, :].reshape(M, K3), wc_ref[1],
                        preferred_element_type=jnp.float32)
    acc = acc + jnp.dot(colp_ref[:, 2:H + 2, :, :].reshape(M, K3), wc_ref[2],
                        preferred_element_type=jnp.float32)

    # bias added once (single broadcast), then relu + channel-sum (keepdim)
    y = jnp.maximum(acc + bc_ref[0], 0.0)
    s = jnp.sum(y, axis=-1, keepdims=True)              # (M, 1)

    # ---- gate the input (x re-read here so it is not live across the convs) --
    xf = x_ref[...].astype(jnp.float32).reshape(M, Cin)
    o_ref[...] = (xf * s).reshape(NB, H, W, Cin).astype(o_ref.dtype)


# ------------------------------- wrapper ---------------------------------- #
def _vmem_budget():
    """Scoped-VMEM budget derived from the chip; conservative fallback."""
    try:
        cap = pltpu.get_tpu_info().vmem_capacity_bytes
        return int(min(cap * 3 // 4, 100 * 1024 * 1024))
    except Exception:
        return 32 * 1024 * 1024


def _pick_batch_block(n, hw, budget, target_m=1024):
    """Pick NB (a divisor of n) such that:
       * estimated VMEM use fits `budget`,
       * the grid has >= 2 steps whenever n >= 2 (DMA overlap + v7x megacore),
       * M = NB*hw is as large as possible without exceeding ~target_m."""
    divs = [d for d in range(1, n + 1) if n % d == 0]
    fit = [d for d in divs
           if _FIXED_VMEM + d * hw * _PER_PIXEL_VMEM <= budget]
    if not fit:
        fit = [1]
    multi = [d for d in fit if n // d >= 2]
    if multi:
        fit = multi
    under = [d for d in fit if d * hw <= target_m]
    return max(under) if under else min(fit)


def spatial_attention_nhwc(x_nhwc, folded_params, out_dtype=None):
    """Fast path: NHWC in / NHWC out (no layout round-trip through HBM)."""
    w1, b1, wc, bc = folded_params
    N, H, W, C = x_nhwc.shape
    assert C == C_IN
    out_dtype = out_dtype if out_dtype is not None else x_nhwc.dtype

    budget = _vmem_budget()
    NB = _pick_batch_block(N, H * W, budget)
    grid = (N // NB,)

    return pl.pallas_call(
        spatial_attention_kernel,
        out_shape=jax.ShapeDtypeStruct((N, H, W, C), out_dtype),
        grid_spec=pltpu.PrefetchScalarGridSpec(
            num_scalar_prefetch=0,
            grid=grid,
            in_specs=[
                pl.BlockSpec((NB, H, W, C), lambda n: (n, 0, 0, 0)),
                pl.BlockSpec((C_IN, C_MID), lambda n: (0, 0)),
                pl.BlockSpec((1, C_MID), lambda n: (0, 0)),
                pl.BlockSpec((3, K3, C_OUT), lambda n: (0, 0, 0)),
                pl.BlockSpec((1, C_OUT), lambda n: (0, 0)),
            ],
            out_specs=pl.BlockSpec((NB, H, W, C), lambda n: (n, 0, 0, 0)),
            scratch_shapes=[pltpu.VMEM((NB, H + 2, W, K3), jnp.bfloat16)],
        ),
        compiler_params=pltpu.CompilerParams(
            dimension_semantics=("parallel",),
            vmem_limit_bytes=budget,
        ),
    )(x_nhwc, w1, b1, wc, bc)


def spatial_attention(x_nchw, folded_params, out_dtype=None):
    """NCHW compatibility wrapper (matches the PyTorch module).
    NOTE: each transpose is a full HBM read+write of the activation; if the
    surrounding model can live in NHWC, call spatial_attention_nhwc directly."""
    x = jnp.transpose(x_nchw, (0, 2, 3, 1))             # NCHW -> NHWC
    out = spatial_attention_nhwc(x, folded_params, out_dtype)
    return jnp.transpose(out, (0, 3, 1, 2))             # back to NCHW


# ----------------------- deterministic parameter init --------------------- #
def init_params(key):
    ks = jax.random.split(key, 12)

    def conv_w(k, kh, kw, ci, co):                      # HWIO
        return 0.02 * jax.random.normal(k, (kh, kw, ci, co), jnp.float32)

    def bn_params(k, c):
        k1, k2, k3, k4 = jax.random.split(k, 4)
        gamma = 1.0 + 0.1 * jax.random.normal(k1, (c,), jnp.float32)
        beta = 0.05 * jax.random.normal(k2, (c,), jnp.float32)
        mean = 0.01 * jax.random.normal(k3, (c,), jnp.float32)
        var = jax.random.uniform(k4, (c,), jnp.float32, minval=0.5, maxval=1.5)
        return gamma, beta, mean, var

    p = {
        "w1": conv_w(ks[0], 1, 1, C_IN, C_MID),
        "b1": 0.01 * jax.random.normal(ks[1], (C_MID,), jnp.float32),
        "bn1": bn_params(ks[2], C_MID),
        "w3": conv_w(ks[3], 3, 3, C_MID, C_OUT),
        "b3": 0.01 * jax.random.normal(ks[4], (C_OUT,), jnp.float32),
        "bn3": bn_params(ks[5], C_OUT),
        "w13": conv_w(ks[6], 1, 3, C_MID, C_OUT),
        "b13": 0.01 * jax.random.normal(ks[7], (C_OUT,), jnp.float32),
        "bn13": bn_params(ks[8], C_OUT),
        "w31": conv_w(ks[9], 3, 1, C_MID, C_OUT),
        "b31": 0.01 * jax.random.normal(ks[10], (C_OUT,), jnp.float32),
        "bn31": bn_params(ks[11], C_OUT),
    }
    return p


def fold_params(p):
    def fold_bn(w, b, bn):
        g, be, m, v = bn
        scale = g / jnp.sqrt(v + BN_EPS)                # per out-channel
        return w * scale, (b - m) * scale + be

    w1, b1 = fold_bn(p["w1"], p["b1"], p["bn1"])
    w1 = w1.reshape(C_IN, C_MID).astype(jnp.bfloat16)   # 1x1 conv == matmul

    w3, b3 = fold_bn(p["w3"], p["b3"], p["bn3"])
    w13, b13 = fold_bn(p["w13"], p["b13"], p["bn13"])
    w31, b31 = fold_bn(p["w31"], p["b31"], p["bn31"])

    # Combine the three branches into one 3x3 tap grid (HWIO).
    wc = w3
    wc = wc.at[1, :, :, :].add(w13[0])                  # 1x3 lives on the center row
    wc = wc.at[:, 1, :, :].add(w31[:, 0])               # 3x1 lives on the center col
    bc = b3 + b13 + b31

    # Pack per kernel-row dy: (dy, dx*C_MID + ci, co) — dx-major matches the
    # in-kernel im2col layout (left | center | right).
    wc = wc.reshape(3, K3, C_OUT).astype(jnp.bfloat16)

    return (w1,
            b1.reshape(1, C_MID).astype(jnp.float32),
            wc,
            bc.reshape(1, C_OUT).astype(jnp.float32))


# ------------------------------ JAX reference ------------------------------ #
def reference(x_nchw, p):
    dn = ("NHWC", "HWIO", "NHWC")
    x = jnp.transpose(x_nchw, (0, 2, 3, 1))

    def conv_bn(inp, w, b, bn, pad):
        z = lax.conv_general_dilated(inp, w, (1, 1), pad, dimension_numbers=dn) + b
        g, be, m, v = bn
        return g * (z - m) / jnp.sqrt(v + BN_EPS) + be

    y1 = conv_bn(x, p["w1"], p["b1"], p["bn1"], [(0, 0), (0, 0)])
    y3 = conv_bn(y1, p["w3"], p["b3"], p["bn3"], [(1, 1), (1, 1)])
    y13 = conv_bn(y1, p["w13"], p["b13"], p["bn13"], [(0, 0), (1, 1)])
    y31 = conv_bn(y1, p["w31"], p["b31"], p["bn31"], [(1, 1), (0, 0)])
    y = jnp.maximum(y3 + y13 + y31, 0.0)
    s = jnp.sum(y, axis=-1, keepdims=True)
    out = x * s
    return jnp.transpose(out, (0, 3, 1, 2))


# ---------------------------------- main ----------------------------------- #
if __name__ == "__main__":
    key = jax.random.PRNGKey(0)
    pkey, xkey = jax.random.split(key)

    params = init_params(pkey)
    folded = fold_params(params)

    N, H, W = 2, 8, 8
    x = jax.random.normal(xkey, (N, C_IN, H, W), jnp.float32)  # NCHW, like PyTorch

    out = spatial_attention(x, folded)
    out = jax.block_until_ready(out)

    ref = reference(x, params)
    rel_err = float(jnp.max(jnp.abs(out - ref)) / (jnp.max(jnp.abs(ref)) + 1e-6))
    # bf16 MXU operands (f32 accumulation) -> relaxed tolerance vs the f32 ref.
    assert rel_err < 1e-2, f"kernel/reference mismatch: rel err {rel_err}"

    print("KERNEL_OK")
</pallas_src>

<mosaic_0001>
module attributes {stable_mosaic.version = 11 : i64} {
  func.func @spatial_attention_kernel(%arg0: i32, %arg1: memref<1x8x8x512xf32, #tpu.memory_space<vmem>>, %arg2: memref<512x256xbf16, #tpu.memory_space<vmem>>, %arg3: memref<1x256xf32, #tpu.memory_space<vmem>>, %arg4: memref<3x768x512xbf16, #tpu.memory_space<vmem>>, %arg5: memref<1x512xf32, #tpu.memory_space<vmem>>, %arg6: memref<1x8x8x512xf32, #tpu.memory_space<vmem>>, %arg7: memref<1x10x8x768xbf16, #tpu.memory_space<vmem>>) attributes {dimension_semantics = [#tpu.dimension_semantics<parallel>], iteration_bounds = array<i64: 2>, scalar_prefetch = 0 : i64, scratch_operands = 1 : i64, tpu.core_type = #tpu.core_type<tc>, window_params = [{transform_indices = @transform_0, window_bounds = array<i64: 1, 8, 8, 512>}, {pipeline_mode = #tpu.pipeline_mode<synchronous>, transform_indices = @transform_1, window_bounds = array<i64: 512, 256>}, {pipeline_mode = #tpu.pipeline_mode<synchronous>, transform_indices = @transform_2, window_bounds = array<i64: 1, 256>}, {pipeline_mode = #tpu.pipeline_mode<synchronous>, transform_indices = @transform_3, window_bounds = array<i64: 3, 768, 512>}, {pipeline_mode = #tpu.pipeline_mode<synchronous>, transform_indices = @transform_4, window_bounds = array<i64: 1, 512>}, {transform_indices = @transform_5, window_bounds = array<i64: 1, 8, 8, 512>}]} {
    %c0 = arith.constant 0 : index
    %c0_0 = arith.constant 0 : index
    %c0_1 = arith.constant 0 : index
    %c0_2 = arith.constant 0 : index
    %0 = vector.load %arg1[%c0, %c0_0, %c0_1, %c0_2] : memref<1x8x8x512xf32, #tpu.memory_space<vmem>>, vector<1x8x8x512xf32>
    %1 = vector.shape_cast %0 : vector<1x8x8x512xf32> to vector<64x512xf32>
    %2 = arith.truncf %1 : vector<64x512xf32> to vector<64x512xbf16>
    %c0_3 = arith.constant 0 : index
    %c0_4 = arith.constant 0 : index
    %3 = vector.load %arg2[%c0_3, %c0_4] : memref<512x256xbf16, #tpu.memory_space<vmem>>, vector<512x256xbf16>
    %cst = arith.constant dense<0.000000e+00> : vector<64x256xf32>
    %4 = tpu.matmul %2, %3, %cst {dimension_numbers = #tpu.dot_dimension_numbers<[1], [0], [0], [1], [0, 0, 1, 1], [], []>} : vector<64x512xbf16>, vector<512x256xbf16>, vector<64x256xf32> -> vector<64x256xf32>
    %c0_5 = arith.constant 0 : index
    %c0_6 = arith.constant 0 : index
    %5 = vector.load %arg3[%c0_5, %c0_6] : memref<1x256xf32, #tpu.memory_space<vmem>>, vector<1x256xf32>
    %6 = vector.shape_cast %5 : vector<1x256xf32> to vector<256xf32>
    %7 = vector.shape_cast %6 : vector<256xf32> to vector<1x256xf32>
    %8 = vector.broadcast %7 : vector<1x256xf32> to vector<64x256xf32>
    %9 = arith.addf %4, %8 : vector<64x256xf32>
    %10 = arith.truncf %9 : vector<64x256xf32> to vector<64x256xbf16>
    %11 = vector.shape_cast %10 : vector<64x256xbf16> to vector<1x8x8x256xbf16>
    %cst_7 = arith.constant 0.000000e+00 : bf16
    %12 = vector.broadcast %cst_7 : bf16 to vector<1x1x8x768xbf16>
    %c0_8 = arith.constant 0 : index
    %c0_9 = arith.constant 0 : index
    %c0_10 = arith.constant 0 : index
    %c0_11 = arith.constant 0 : index
    %13 = vector.load %arg7[%c0_8, %c0_9, %c0_10, %c0_11] : memref<1x10x8x768xbf16, #tpu.memory_space<vmem>>, vector<1x1x8x768xbf16>
    tpu.vector_store %arg7[%c0_8, %c0_9, %c0_10, %c0_11], %12 {strides = array<i32>} : memref<1x10x8x768xbf16, #tpu.memory_space<vmem>>, vector<1x1x8x768xbf16>,
    %c0_12 = arith.constant 0 : index
    %c9 = arith.constant 9 : index
    %c0_13 = arith.constant 0 : index
    %c0_14 = arith.constant 0 : index
    %14 = vector.load %arg7[%c0_12, %c9, %c0_13, %c0_14] : memref<1x10x8x768xbf16, #tpu.memory_space<vmem>>, vector<1x1x8x768xbf16>
    tpu.vector_store %arg7[%c0_12, %c9, %c0_13, %c0_14], %12 {strides = array<i32>} : memref<1x10x8x768xbf16, #tpu.memory_space<vmem>>, vector<1x1x8x768xbf16>,
    %cst_15 = arith.constant 0.000000e+00 : bf16
    %15 = vector.broadcast %cst_15 : bf16 to vector<1x8x1x256xbf16>
    %c0_16 = arith.constant 0 : index
    %c1 = arith.constant 1 : index
    %c0_17 = arith.constant 0 : index
    %c0_18 = arith.constant 0 : index
    %16 = vector.load %arg7[%c0_16, %c1, %c0_17, %c0_18] : memref<1x10x8x768xbf16, #tpu.memory_space<vmem>>, vector<1x8x1x256xbf16>
    tpu.vector_store %arg7[%c0_16, %c1, %c0_17, %c0_18], %15 {strides = array<i32>} : memref<1x10x8x768xbf16, #tpu.memory_space<vmem>>, vector<1x8x1x256xbf16>,
    %c0_19 = arith.constant 0 : index
    %c1_20 = arith.constant 1 : index
    %c7 = arith.constant 7 : index
    %c512 = arith.constant 512 : index
    %17 = vector.load %arg7[%c0_19, %c1_20, %c7, %c512] : memref<1x10x8x768xbf16, #tpu.memory_space<vmem>>, vector<1x8x1x256xbf16>
    tpu.vector_store %arg7[%c0_19, %c1_20, %c7, %c512], %15 {strides = array<i32>} : memref<1x10x8x768xbf16, #tpu.memory_space<vmem>>, vector<1x8x1x256xbf16>,
    %c0_21 = arith.constant 0 : index
    %c1_22 = arith.constant 1 : index
    %c0_23 = arith.constant 0 : index
    %c256 = arith.constant 256 : index
    %18 = vector.load %arg7[%c0_21, %c1_22, %c0_23, %c256] : memref<1x10x8x768xbf16, #tpu.memory_space<vmem>>, vector<1x8x8x256xbf16>
    tpu.vector_store %arg7[%c0_21, %c1_22, %c0_23, %c256], %11 {strides = array<i32>} : memref<1x10x8x768xbf16, #tpu.memory_space<vmem>>, vector<1x8x8x256xbf16>,
    %19 = vector.extract_strided_slice %11 {offsets = [0, 0, 0, 0], sizes = [1, 8, 7, 256], strides = [1, 1, 1, 1]} : vector<1x8x8x256xbf16> to vector<1x8x7x256xbf16>
    %c0_24 = arith.constant 0 : index
    %c1_25 = arith.constant 1 : index
    %c1_26 = arith.constant 1 : index
    %c0_27 = arith.constant 0 : index
    %20 = vector.load %arg7[%c0_24, %c1_25, %c1_26, %c0_27] : memref<1x10x8x768xbf16, #tpu.memory_space<vmem>>, vector<1x8x7x256xbf16>
    tpu.vector_store %arg7[%c0_24, %c1_25, %c1_26, %c0_27], %19 {strides = array<i32>} : memref<1x10x8x768xbf16, #tpu.memory_space<vmem>>, vector<1x8x7x256xbf16>,
    %21 = vector.extract_strided_slice %11 {offsets = [0, 0, 1, 0], sizes = [1, 8, 7, 256], strides = [1, 1, 1, 1]} : vector<1x8x8x256xbf16> to vector<1x8x7x256xbf16>
    %c0_28 = arith.constant 0 : index
    %c1_29 = arith.constant 1 : index
    %c0_30 = arith.constant 0 : index
    %c512_31 = arith.constant 512 : index
    %22 = vector.load %arg7[%c0_28, %c1_29, %c0_30, %c512_31] : memref<1x10x8x768xbf16, #tpu.memory_space<vmem>>, vector<1x8x7x256xbf16>
    tpu.vector_store %arg7[%c0_28, %c1_29, %c0_30, %c512_31], %21 {strides = array<i32>} : memref<1x10x8x768xbf16, #tpu.memory_space<vmem>>, vector<1x8x7x256xbf16>,
    %c0_32 = arith.constant 0 : index
    %c0_33 = arith.constant 0 : index
    %c0_34 = arith.constant 0 : index
    %c0_35 = arith.constant 0 : index
    %23 = vector.load %arg7[%c0_32, %c0_33, %c0_34, %c0_35] : memref<1x10x8x768xbf16, #tpu.memory_space<vmem>>, vector<1x8x8x768xbf16>
    %24 = vector.shape_cast %23 : vector<1x8x8x768xbf16> to vector<64x768xbf16>
    %c0_36 = arith.constant 0 : index
    %c0_37 = arith.constant 0 : index
    %c0_38 = arith.constant 0 : index
    %25 = vector.load %arg4[%c0_36, %c0_37, %c0_38] : memref<3x768x512xbf16, #tpu.memory_space<vmem>>, vector<1x768x512xbf16>
    %26 = vector.shape_cast %25 : vector<1x768x512xbf16> to vector<768x512xbf16>
    %cst_39 = arith.constant dense<0.000000e+00> : vector<64x512xf32>
    %27 = tpu.matmul %24, %26, %cst_39 {dimension_numbers = #tpu.dot_dimension_numbers<[1], [0], [0], [1], [0, 0, 1, 1], [], []>} : vector<64x768xbf16>, vector<768x512xbf16>, vector<64x512xf32> -> vector<64x512xf32>
    %c0_40 = arith.constant 0 : index
    %c1_41 = arith.constant 1 : index
    %c0_42 = arith.constant 0 : index
    %c0_43 = arith.constant 0 : index
    %28 = vector.load %arg7[%c0_40, %c1_41, %c0_42, %c0_43] : memref<1x10x8x768xbf16, #tpu.memory_space<vmem>>, vector<1x8x8x768xbf16>
    %29 = vector.shape_cast %28 : vector<1x8x8x768xbf16> to vector<64x768xbf16>
    %c1_44 = arith.constant 1 : index
    %c0_45 = arith.constant 0 : index
    %c0_46 = arith.constant 0 : index
    %30 = vector.load %arg4[%c1_44, %c0_45, %c0_46] : memref<3x768x512xbf16, #tpu.memory_space<vmem>>, vector<1x768x512xbf16>
    %31 = vector.shape_cast %30 : vector<1x768x512xbf16> to vector<768x512xbf16>
    %cst_47 = arith.constant dense<0.000000e+00> : vector<64x512xf32>
    %32 = tpu.matmul %29, %31, %cst_47 {dimension_numbers = #tpu.dot_dimension_numbers<[1], [0], [0], [1], [0, 0, 1, 1], [], []>} : vector<64x768xbf16>, vector<768x512xbf16>, vector<64x512xf32> -> vector<64x512xf32>
    %33 = arith.addf %27, %32 : vector<64x512xf32>
    %c0_48 = arith.constant 0 : index
    %c2 = arith.constant 2 : index
    %c0_49 = arith.constant 0 : index
    %c0_50 = arith.constant 0 : index
    %34 = vector.load %arg7[%c0_48, %c2, %c0_49, %c0_50] : memref<1x10x8x768xbf16, #tpu.memory_space<vmem>>, vector<1x8x8x768xbf16>
    %35 = vector.shape_cast %34 : vector<1x8x8x768xbf16> to vector<64x768xbf16>
    %c2_51 = arith.constant 2 : index
    %c0_52 = arith.constant 0 : index
    %c0_53 = arith.constant 0 : index
    %36 = vector.load %arg4[%c2_51, %c0_52, %c0_53] : memref<3x768x512xbf16, #tpu.memory_space<vmem>>, vector<1x768x512xbf16>
    %37 = vector.shape_cast %36 : vector<1x768x512xbf16> to vector<768x512xbf16>
    %cst_54 = arith.constant dense<0.000000e+00> : vector<64x512xf32>
    %38 = tpu.matmul %35, %37, %cst_54 {dimension_numbers = #tpu.dot_dimension_numbers<[1], [0], [0], [1], [0, 0, 1, 1], [], []>} : vector<64x768xbf16>, vector<768x512xbf16>, vector<64x512xf32> -> vector<64x512xf32>
    %39 = arith.addf %33, %38 : vector<64x512xf32>
    %c0_55 = arith.constant 0 : index
    %c0_56 = arith.constant 0 : index
    %40 = vector.load %arg5[%c0_55, %c0_56] : memref<1x512xf32, #tpu.memory_space<vmem>>, vector<1x512xf32>
    %41 = vector.shape_cast %40 : vector<1x512xf32> to vector<512xf32>
    %42 = vector.shape_cast %41 : vector<512xf32> to vector<1x512xf32>
    %43 = vector.broadcast %42 : vector<1x512xf32> to vector<64x512xf32>
    %44 = arith.addf %39, %43 : vector<64x512xf32>
    %cst_57 = arith.constant 0.000000e+00 : f32
    %45 = vector.broadcast %cst_57 : f32 to vector<64x512xf32>
    %46 = arith.maximumf %44, %45 : vector<64x512xf32>
    %cst_58 = arith.constant dense<0.000000e+00> : vector<64xf32>
    %47 = vector.multi_reduction <add>, %46, %cst_58 [1] : vector<64x512xf32> to vector<64xf32>
    %48 = vector.shape_cast %47 : vector<64xf32> to vector<64x1xf32>
    %c0_59 = arith.constant 0 : index
    %c0_60 = arith.constant 0 : index
    %c0_61 = arith.constant 0 : index
    %c0_62 = arith.constant 0 : index
    %49 = vector.load %arg1[%c0_59, %c0_60, %c0_61, %c0_62] : memref<1x8x8x512xf32, #tpu.memory_space<vmem>>, vector<1x8x8x512xf32>
    %50 = vector.shape_cast %49 : vector<1x8x8x512xf32> to vector<64x512xf32>
    %51 = vector.broadcast %48 : vector<64x1xf32> to vector<64x512xf32>
    %52 = arith.mulf %50, %51 : vector<64x512xf32>
    %53 = vector.shape_cast %52 : vector<64x512xf32> to vector<1x8x8x512xf32>
    %c0_63 = arith.constant 0 : index
    %c0_64 = arith.constant 0 : index
    %c0_65 = arith.constant 0 : index
    %c0_66 = arith.constant 0 : index
    %54 = vector.load %arg6[%c0_63, %c0_64, %c0_65, %c0_66] : memref<1x8x8x512xf32, #tpu.memory_space<vmem>>, vector<1x8x8x512xf32>
    tpu.vector_store %arg6[%c0_63, %c0_64, %c0_65, %c0_66], %53 {strides = array<i32>} : memref<1x8x8x512xf32, #tpu.memory_space<vmem>>, vector<1x8x8x512xf32>,
    return
  }
  func.func @transform_0(%arg0: i32) -> (i32, i32, i32, i32) {
    %c0_i32 = arith.constant 0 : i32
    %c0_i32_0 = arith.constant 0 : i32
    %c0_i32_1 = arith.constant 0 : i32
    %c0_i32_2 = arith.constant 0 : i32
    return %arg0, %c0_i32, %c0_i32_0, %c0_i32_1 : i32, i32, i32, i32
  }
  func.func @transform_1(%arg0: i32) -> (i32, i32) {
    %c0_i32 = arith.constant 0 : i32
    %c0_i32_0 = arith.constant 0 : i32
    %c0_i32_1 = arith.constant 0 : i32
    return %c0_i32, %c0_i32_0 : i32, i32
  }
  func.func @transform_2(%arg0: i32) -> (i32, i32) {
    %c0_i32 = arith.constant 0 : i32
    %c0_i32_0 = arith.constant 0 : i32
    %c0_i32_1 = arith.constant 0 : i32
    return %c0_i32, %c0_i32_0 : i32, i32
  }
  func.func @transform_3(%arg0: i32) -> (i32, i32, i32) {
    %c0_i32 = arith.constant 0 : i32
    %c0_i32_0 = arith.constant 0 : i32
    %c0_i32_1 = arith.constant 0 : i32
    %c0_i32_2 = arith.constant 0 : i32
    return %c0_i32, %c0_i32_0, %c0_i32_1 : i32, i32, i32
  }
  func.func @transform_4(%arg0: i32) -> (i32, i32) {
    %c0_i32 = arith.constant 0 : i32
    %c0_i32_0 = arith.constant 0 : i32
    %c0_i32_1 = arith.constant 0 : i32
    return %c0_i32, %c0_i32_0 : i32, i32
  }
  func.func @transform_5(%arg0: i32) -> (i32, i32, i32, i32) {
    %c0_i32 = arith.constant 0 : i32
    %c0_i32_0 = arith.constant 0 : i32
    %c0_i32_1 = arith.constant 0 : i32
    %c0_i32_2 = arith.constant 0 : i32
    return %arg0, %c0_i32, %c0_i32_0, %c0_i32_1 : i32, i32, i32, i32
  }
}

</mosaic_0001>

<llo_original>
// kernel: tpu_custom_call.1
$region0: #{tpu_custom_call.1}
  #allocation0 [shape = 'u32[]', space=smem, size = 0x4, offset = 0x4, fixed_abs, tag = 'smem constant byte address 0x4 - core index']
  #allocation1 [shape = 'u32[144,128]{1,0:T(1,128)}', space=vmem, size = 0x12000, scoped, tag = 'internal scratch']
  #allocation2 [shape = 'bf16[1,10,8,768]{3,2,1,0:T(8,128)(2,1)}', space=vmem, size = 0x1e000, scoped, tag = 'scratch operand']
  %s0 = inlined_call_operand.hbm [shape: f32[2,8,8,512], index: 0, kind: input, shape index: {}]
  %s1 = inlined_call_operand.hbm [shape: bf16[512,256], index: 1, kind: input, shape index: {}]
  %s2 = inlined_call_operand.hbm [shape: f32[1,256], index: 2, kind: input, shape index: {}]
  %s3 = inlined_call_operand.hbm [shape: bf16[3,768,512], index: 3, kind: input, shape index: {}]
  %s4 = inlined_call_operand.hbm [shape: f32[1,512], index: 4, kind: input, shape index: {}]
  %s5 = inlined_call_operand.hbm [shape: f32[2,8,8,512], index: 5, kind: output, shape index: {}]
  %s6 = sld [smem:[#allocation0]]
  $region73: #{tpu_custom_call.1} parent=0
    _
  %s8 = ssub.s32 1, %s6
  %s9 = scalar_select 0, %s8, %s6
  $region1: #{tpu_custom_call.1} parent=0
    #allocation3 [shape = 'u8[262144]{0}', space=vmem, size = 0x40000, scoped, tag = 'input window, operand 0']
    #allocation4 [shape = 's32[2]{0}', space=sflag, size = 0x8, scoped, tag = 'scoped memory for tpu_custom_call.1']
    #allocation5 [shape = 's32[2]{0}', space=sflag, size = 0x8, scoped, tag = 'scoped memory for tpu_custom_call.1']
    #allocation6 [shape = 'u8[262144]{0}', space=vmem, size = 0x40000, scoped, tag = 'input window, operand 1, single buffered']
    #allocation7 [shape = 's32[1]{0}', space=sflag, size = 0x4, scoped, tag = 'scoped memory for tpu_custom_call.1']
    #allocation8 [shape = 'u8[1024]{0}', space=vmem, size = 0x400, scoped, tag = 'input window, operand 2, single buffered']
    #allocation9 [shape = 'u8[2359296]{0}', space=vmem, size = 0x240000, scoped, tag = 'input window, operand 3, single buffered']
    #allocation10 [shape = 's32[1]{0}', space=sflag, size = 0x4, scoped, tag = 'scoped memory for tpu_custom_call.1']
    #allocation11 [shape = 'u8[2048]{0}', space=vmem, size = 0x800, scoped, tag = 'input window, operand 4, single buffered']
    #allocation12 [shape = 'u8[262144]{0}', space=vmem, size = 0x40000, scoped, tag = 'output window, operand 0']
    %10 = vsyncpa [#allocation4], 0
    %s11 = scalar_lea.sflag [#allocation4], 1
    %12 = vsyncpa %s11, 0
    %13 = vsyncpa [#allocation7], 0
    %14 = vsyncpa [#allocation10], 0
    %15 = vsyncpa [#allocation5], 0
    %s16 = scalar_lea.sflag [#allocation5], 1
    %17 = vsyncpa %s16, 0
    loop: start=0, step=1, limit=4
    $region2: #{tpu_custom_call.1} parent=1 // loop_pre_header
      _
    $region3: #{tpu_custom_call.1} parent=1 // loop_header
      %s19 = sphi 0, %s23
      %p20 = scmp.ge.s32.totalorder %s19, 4
      %s29 = sphi 0, %s31
      %s32 = sphi 0, %s29
      %s33 = sphi 0, %s32
      %s49 = sphi 0, %s33
      %s53 = sphi 0, %s53
      %s55 = sphi 0, %s53
      %s56 = sphi 0, %s55
      %s70 = sphi 0, %s56
      %s74 = sphi 0, %s74
      %s76 = sphi 0, %s74
      %s77 = sphi 0, %s76
      %s91 = sphi 0, %s77
      %s95 = sphi 0, %s95
      %s97 = sphi 0, %s95
      %s98 = sphi 0, %s97
      %s112 = sphi 0, %s98
      %s116 = sphi 0, %s116
      %s118 = sphi 0, %s116
      %s119 = sphi 0, %s118
      %s133 = sphi 0, %s119
      %s139 = sphi 0, %s141
      %s142 = sphi 0, %s139
      %s143 = sphi 0, %s142
      %s159 = sphi 0, %s143
    $region4: #{tpu_custom_call.1} parent=1 // loop_header_branch
      %22 = sbr.rel (%p20) target = $region8
    $region5: #{tpu_custom_call.1} parent=1 // loop_body
      %s24 = ssub.s32 %s19, 1
      %s25 = ssub.s32 %s19, 2
      %s26 = sadd.s32 %s19, 1
      %s27 = ssub.s32 %s19, %s26
      %p28 = scmp.eq.s32.totalorder %s27, 0
      %s30 = sadd.s32 %s29, 1
      %s31 = scalar_select %p28, %s29, %s30
      %p34 = pneg %p28
      %p35 = scmp.eq.s32.totalorder %s19, 1
      %p36 = por %p34, %p35
      %p37 = scmp.ne.s32.totalorder %s29, %s32
      %p38 = scmp.eq.s32.totalorder %s19, 0
      %p39 = por %p37, %p38
      %p40 = scmp.ne.s32.totalorder %s29, %s32
      %p41 = scmp.eq.s32.totalorder %s24, 1
      %p42 = por %p40, %p41
      %p43 = scmp.ne.s32.totalorder %s32, %s33
      %p44 = scmp.eq.s32.totalorder %s24, 0
      %p45 = por %p43, %p44
      %p46 = scmp.ne.s32.totalorder %s32, %s33
      %p47 = scmp.eq.s32.totalorder %s25, 1
      %p48 = por %p46, %p47
      %p50 = scmp.ne.s32.totalorder %s33, %s49
      %p51 = scmp.eq.s32.totalorder %s25, 0
      %p52 = por %p50, %p51
      %s54 = sadd.s32 %s53, 1
      %p57 = scmp.eq.s32.totalorder %s19, 1
      %p58 = scmp.ne.s32.totalorder %s53, %s55
      %p59 = scmp.eq.s32.totalorder %s19, 0
      %p60 = por %p58, %p59
      %p61 = scmp.ne.s32.totalorder %s53, %s55
      %p62 = scmp.eq.s32.totalorder %s24, 1
      %p63 = por %p61, %p62
      %p64 = scmp.ne.s32.totalorder %s55, %s56
      %p65 = scmp.eq.s32.totalorder %s24, 0
      %p66 = por %p64, %p65
      %p67 = scmp.ne.s32.totalorder %s55, %s56
      %p68 = scmp.eq.s32.totalorder %s25, 1
      %p69 = por %p67, %p68
      %p71 = scmp.ne.s32.totalorder %s56, %s70
      %p72 = scmp.eq.s32.totalorder %s25, 0
      %p73 = por %p71, %p72
      %s75 = sadd.s32 %s74, 1
      %p78 = scmp.eq.s32.totalorder %s19, 1
      %p79 = scmp.ne.s32.totalorder %s74, %s76
      %p80 = scmp.eq.s32.totalorder %s19, 0
      %p81 = por %p79, %p80
      %p82 = scmp.ne.s32.totalorder %s74, %s76
      %p83 = scmp.eq.s32.totalorder %s24, 1
      %p84 = por %p82, %p83
      %p85 = scmp.ne.s32.totalorder %s76, %s77
      %p86 = scmp.eq.s32.totalorder %s24, 0
      %p87 = por %p85, %p86
      %p88 = scmp.ne.s32.totalorder %s76, %s77
      %p89 = scmp.eq.s32.totalorder %s25, 1
      %p90 = por %p88, %p89
      %p92 = scmp.ne.s32.totalorder %s77, %s91
      %p93 = scmp.eq.s32.totalorder %s25, 0
      %p94 = por %p92, %p93
      %s96 = sadd.s32 %s95, 1
      %p99 = scmp.eq.s32.totalorder %s19, 1
      %p100 = scmp.ne.s32.totalorder %s95, %s97
      %p101 = scmp.eq.s32.totalorder %s19, 0
      %p102 = por %p100, %p101
      %p103 = scmp.ne.s32.totalorder %s95, %s97
      %p104 = scmp.eq.s32.totalorder %s24, 1
      %p105 = por %p103, %p104
      %p106 = scmp.ne.s32.totalorder %s97, %s98
      %p107 = scmp.eq.s32.totalorder %s24, 0
      %p108 = por %p106, %p107
      %p109 = scmp.ne.s32.totalorder %s97, %s98
      %p110 = scmp.eq.s32.totalorder %s25, 1
      %p111 = por %p109, %p110
      %p113 = scmp.ne.s32.totalorder %s98, %s112
      %p114 = scmp.eq.s32.totalorder %s25, 0
      %p115 = por %p113, %p114
      %s117 = sadd.s32 %s116, 1
      %p120 = scmp.eq.s32.totalorder %s19, 1
      %p121 = scmp.ne.s32.totalorder %s116, %s118
      %p122 = scmp.eq.s32.totalorder %s19, 0
      %p123 = por %p121, %p122
      %p124 = scmp.ne.s32.totalorder %s116, %s118
      %p125 = scmp.eq.s32.totalorder %s24, 1
      %p126 = por %p124, %p125
      %p127 = scmp.ne.s32.totalorder %s118, %s119
      %p128 = scmp.eq.s32.totalorder %s24, 0
      %p129 = por %p127, %p128
      %p130 = scmp.ne.s32.totalorder %s118, %s119
      %p131 = scmp.eq.s32.totalorder %s25, 1
      %p132 = por %p130, %p131
      %p134 = scmp.ne.s32.totalorder %s119, %s133
      %p135 = scmp.eq.s32.totalorder %s25, 0
      %p136 = por %p134, %p135
      %s137 = ssub.s32 %s19, %s26
      %p138 = scmp.eq.s32.totalorder %s137, 0
      %s140 = sadd.s32 %s139, 1
      %s141 = scalar_select %p138, %s139, %s140
      %p144 = pneg %p138
      %p145 = scmp.eq.s32.totalorder %s19, 1
      %p146 = por %p144, %p145
      %p147 = scmp.ne.s32.totalorder %s139, %s142
      %p148 = scmp.eq.s32.totalorder %s19, 0
      %p149 = por %p147, %p148
      %p150 = scmp.ne.s32.totalorder %s139, %s142
      %p151 = scmp.eq.s32.totalorder %s24, 1
      %p152 = por %p150, %p151
      %p153 = scmp.ne.s32.totalorder %s142, %s143
      %p154 = scmp.eq.s32.totalorder %s24, 0
      %p155 = por %p153, %p154
      %p156 = scmp.ne.s32.totalorder %s142, %s143
      %p157 = scmp.eq.s32.totalorder %s25, 1
      %p158 = por %p156, %p157
      %p160 = scmp.ne.s32.totalorder %s143, %s159
      %p161 = scmp.eq.s32.totalorder %s25, 0
      %p162 = por %p160, %p161
      %p163 = scmp.le.s32.totalorder 1, %s19
      %p164 = scmp.lt.s32.totalorder %s19, 3
      %p165 = pnand %p163, %p164
      %p166 = pneg %p165
      // Predicated region
      $region9: #{tpu_custom_call.1} parent=5 // pred_check
        _
      $region10: #{tpu_custom_call.1} parent=5 // pred_check_branch
        %168 = sbr.rel (%p165) target = $region12
      $region11: #{tpu_custom_call.1} parent=5 // pred_region
        %s169 = ssub.s32 %s19, 1
        // Predicated region
        $region13: #{tpu_custom_call.1} parent=11 // pred_check
          %p170 = pneg %p66
        $region14: #{tpu_custom_call.1} parent=11 // pred_check_branch
          %172 = sbr.rel (%p170) target = $region16
        $region15: #{tpu_custom_call.1} parent=11 // pred_region
          %s174 = ssub.s32 8192, 8192
          %175 = vsyncadd [#allocation7], %s174
          %s176 = sshll.u32 [#allocation6], 4
          %s177 = int_to_ptr.vmem [resolvable:$true] %s176
          %182 = dma.hbm_to_vmem [thread:$0]  %s1, 8192, %s177, [#allocation7], 128, 128, 8
        $region16: #{tpu_custom_call.1} parent=11 // pred_fallthru
          _
        // Predicated region
        $region17: #{tpu_custom_call.1} parent=11 // pred_check
          %p183 = pneg %p87
        $region18: #{tpu_custom_call.1} parent=11 // pred_check_branch
          %185 = sbr.rel (%p183) target = $region20
        $region19: #{tpu_custom_call.1} parent=11 // pred_region
          %s187 = ssub.s32 32, 32
          %188 = vsyncadd [#allocation7], %s187
          %s190 = sshll.u32 [#allocation8], 4
          %s191 = int_to_ptr.vmem [resolvable:$true] %s190
          %193 = dma.hbm_to_vmem [thread:$0]  %s2, 32, %s191, [#allocation7]
        $region20: #{tpu_custom_call.1} parent=11 // pred_fallthru
          _
        // Predicated region
        $region21: #{tpu_custom_call.1} parent=11 // pred_check
          %p194 = pneg %p108
        $region22: #{tpu_custom_call.1} parent=11 // pred_check_branch
          %196 = sbr.rel (%p194) target = $region24
        $region23: #{tpu_custom_call.1} parent=11 // pred_region
          %s198 = ssub.s32 73728, 73728
          %199 = vsyncadd [#allocation10], %s198
          %s200 = sshll.u32 [#allocation9], 4
          %s201 = int_to_ptr.vmem [resolvable:$true] %s200
          %206 = dma.hbm_to_vmem [thread:$0]  %s3, 73728, %s201, [#allocation10], 256, 256, 16
        $region24: #{tpu_custom_call.1} parent=11 // pred_fallthru
          _
        // Predicated region
        $region25: #{tpu_custom_call.1} parent=11 // pred_check
          %p207 = pneg %p129
        $region26: #{tpu_custom_call.1} parent=11 // pred_check_branch
          %209 = sbr.rel (%p207) target = $region28
        $region27: #{tpu_custom_call.1} parent=11 // pred_region
          %s211 = ssub.s32 64, 64
          %212 = vsyncadd [#allocation10], %s211
          %s214 = sshll.u32 [#allocation11], 4
          %s215 = int_to_ptr.vmem [resolvable:$true] %s214
          %217 = dma.hbm_to_vmem [thread:$0]  %s4, 64, %s215, [#allocation10]
        $region28: #{tpu_custom_call.1} parent=11 // pred_fallthru
          _
      $region12: #{tpu_custom_call.1} parent=5 // pred_fallthru
        _
      %p218 = scmp.lt.s32.totalorder %s19, 2
      // Predicated region
      $region29: #{tpu_custom_call.1} parent=5 // pred_check
        %p219 = pneg %p218
      $region30: #{tpu_custom_call.1} parent=5 // pred_check_branch
        %221 = sbr.rel (%p219) target = $region32
      $region31: #{tpu_custom_call.1} parent=5 // pred_region
        // Predicated region
        $region33: #{tpu_custom_call.1} parent=31 // pred_check
          %p222 = pneg %p39
        $region34: #{tpu_custom_call.1} parent=31 // pred_check_branch
          %224 = sbr.rel (%p222) target = $region36
        $region35: #{tpu_custom_call.1} parent=31 // pred_region
          %s225 = sand.u32 %s29, 1
          %s226 = scalar_lea.sflag [#allocation4], %s225
          %s227 = sand.u32 %s29, 1
          %s228 = smul.addr %s227, 256
          %s229 = scalar_lea.vmem [#allocation3], %s228
          %s231 = ssub.s32 4096, 4096
          %232 = vsyncadd %s226, %s231
          %s233 = smul.addr %s19, 32
          %s234 = smul.addr %s233, 128
          %s235 = scalar_lea.hbm %s0, %s234
          %s236 = sshll.u32 %s229, 4
          %s237 = int_to_ptr.vmem [resolvable:$true] %s236
          %242 = dma.hbm_to_vmem [thread:$0]  %s235, 4096, %s237, %s226, 512, 512, 32
        $region36: #{tpu_custom_call.1} parent=31 // pred_fallthru
          _
      $region32: #{tpu_custom_call.1} parent=5 // pred_fallthru
        _
      %p243 = scmp.le.s32.totalorder 1, %s19
      %p244 = scmp.lt.s32.totalorder %s19, 3
      %p245 = pnand %p243, %p244
      %p246 = pneg %p245
      // Predicated region
      $region37: #{tpu_custom_call.1} parent=5 // pred_check
        _
      $region38: #{tpu_custom_call.1} parent=5 // pred_check_branch
        %248 = sbr.rel (%p245) target = $region40
      $region39: #{tpu_custom_call.1} parent=5 // pred_region
        %s249 = ssub.s32 %s19, 1
        %s250 = sand.u32 %s32, 1
        %s251 = scalar_lea.sflag [#allocation4], %s250
        %s252 = sand.u32 %s32, 1
        %s253 = smul.addr %s252, 256
        %s254 = scalar_lea.vmem [#allocation3], %s253
        // Predicated region
        $region41: #{tpu_custom_call.1} parent=39 // pred_check
          %p255 = pneg %p45
        $region42: #{tpu_custom_call.1} parent=39 // pred_check_branch
          %257 = sbr.rel (%p255) target = $region44
        $region43: #{tpu_custom_call.1} parent=39 // pred_region
          %258 = dma.done %s251, 4096
        $region44: #{tpu_custom_call.1} parent=39 // pred_fallthru
          _
        // Predicated region
        $region45: #{tpu_custom_call.1} parent=39 // pred_check
          %p259 = pneg %p66
        $region46: #{tpu_custom_call.1} parent=39 // pred_check_branch
          %261 = sbr.rel (%p259) target = $region48
        $region47: #{tpu_custom_call.1} parent=39 // pred_region
          %262 = dma.done [#allocation7], 8192
        $region48: #{tpu_custom_call.1} parent=39 // pred_fallthru
          _
        // Predicated region
        $region49: #{tpu_custom_call.1} parent=39 // pred_check
          %p263 = pneg %p87
        $region50: #{tpu_custom_call.1} parent=39 // pred_check_branch
          %265 = sbr.rel (%p263) target = $region52
        $region51: #{tpu_custom_call.1} parent=39 // pred_region
          %266 = dma.done [#allocation7], 32
        $region52: #{tpu_custom_call.1} parent=39 // pred_fallthru
          _
        // Predicated region
        $region53: #{tpu_custom_call.1} parent=39 // pred_check
          %p267 = pneg %p108
        $region54: #{tpu_custom_call.1} parent=39 // pred_check_branch
          %269 = sbr.rel (%p267) target = $region56
        $region55: #{tpu_custom_call.1} parent=39 // pred_region
          %270 = dma.done [#allocation10], 73728
        $region56: #{tpu_custom_call.1} parent=39 // pred_fallthru
          _
        // Predicated region
        $region57: #{tpu_custom_call.1} parent=39 // pred_check
          %p271 = pneg %p129
        $region58: #{tpu_custom_call.1} parent=39 // pred_check_branch
          %273 = sbr.rel (%p271) target = $region60
        $region59: #{tpu_custom_call.1} parent=39 // pred_region
          %274 = dma.done [#allocation10], 64
        $region60: #{tpu_custom_call.1} parent=39 // pred_fallthru
          _
        %s275 = sand.u32 %s32, 1
        %s276 = scalar_lea.sflag [#allocation4], %s275
        %s277 = sand.u32 %s32, 1
        %s278 = smul.addr %s277, 256
        %s279 = scalar_lea.vmem [#allocation3], %s278
        %p280 = pneg %p45
        %p281 = pneg %p42
        %p282 = pneg %p66
        %p283 = pneg %p63
        %p284 = pneg %p87
        %p285 = pneg %p84
        %p286 = pneg %p108
        %p287 = pneg %p105
        %p288 = pneg %p129
        %p289 = pneg %p126
        %p290 = pneg %p155
        %p291 = pneg %p152
        %s292 = sand.u32 %s142, 1
        %s293 = scalar_lea.sflag [#allocation5], %s292
        %s294 = sand.u32 %s142, 1
        %s295 = smul.addr %s294, 256
        %s296 = scalar_lea.vmem [#allocation12], %s295
        %v298 = vld [vmem:[%s254] sm:$0xff]
        %v299 = vld [vmem:[%s254 + $0x8] sm:$0xff]
        %v300 = vld [vmem:[%s254 + $0x10] sm:$0xff]
        %v301 = vld [vmem:[%s254 + $0x18] sm:$0xff]
        %v302 = vld [vmem:[%s254 + $0x20] sm:$0xff]
        %v303 = vld [vmem:[%s254 + $0x28] sm:$0xff]
        %v304 = vld [vmem:[%s254 + $0x30] sm:$0xff]
        %v305 = vld [vmem:[%s254 + $0x38] sm:$0xff]
        %v306 = vld [vmem:[%s254 + $0x40] sm:$0xff]
        %v307 = vld [vmem:[%s254 + $0x48] sm:$0xff]
        %v308 = vld [vmem:[%s254 + $0x50] sm:$0xff]
        %v309 = vld [vmem:[%s254 + $0x58] sm:$0xff]
        %v310 = vld [vmem:[%s254 + $0x60] sm:$0xff]
        %v311 = vld [vmem:[%s254 + $0x68] sm:$0xff]
        %v312 = vld [vmem:[%s254 + $0x70] sm:$0xff]
        %v313 = vld [vmem:[%s254 + $0x78] sm:$0xff]
        %v314 = vld [vmem:[%s254 + $0x80] sm:$0xff]
        %v315 = vld [vmem:[%s254 + $0x88] sm:$0xff]
        %v316 = vld [vmem:[%s254 + $0x90] sm:$0xff]
        %v317 = vld [vmem:[%s254 + $0x98] sm:$0xff]
        %v318 = vld [vmem:[%s254 + $0xa0] sm:$0xff]
        %v319 = vld [vmem:[%s254 + $0xa8] sm:$0xff]
        %v320 = vld [vmem:[%s254 + $0xb0] sm:$0xff]
        %v321 = vld [vmem:[%s254 + $0xb8] sm:$0xff]
        %v322 = vld [vmem:[%s254 + $0xc0] sm:$0xff]
        %v323 = vld [vmem:[%s254 + $0xc8] sm:$0xff]
        %v324 = vld [vmem:[%s254 + $0xd0] sm:$0xff]
        %v325 = vld [vmem:[%s254 + $0xd8] sm:$0xff]
        %v326 = vld [vmem:[%s254 + $0xe0] sm:$0xff]
        %v327 = vld [vmem:[%s254 + $0xe8] sm:$0xff]
        %v328 = vld [vmem:[%s254 + $0xf0] sm:$0xff]
        %v329 = vld [vmem:[%s254 + $0xf8] sm:$0xff]
        %v330 = vpack.c.bf16 %v302, %v298
        %v331 = vpack.c.bf16 %v303, %v299
        %v332 = vpack.c.bf16 %v304, %v300
        %v333 = vpack.c.bf16 %v305, %v301
        %v334 = vpack.c.bf16 %v310, %v306
        %v335 = vpack.c.bf16 %v311, %v307
        %v336 = vpack.c.bf16 %v312, %v308
        %v337 = vpack.c.bf16 %v313, %v309
        %v338 = vpack.c.bf16 %v318, %v314
        %v339 = vpack.c.bf16 %v319, %v315
        %v340 = vpack.c.bf16 %v320, %v316
        %v341 = vpack.c.bf16 %v321, %v317
        %v342 = vpack.c.bf16 %v326, %v322
        %v343 = vpack.c.bf16 %v327, %v323
        %v344 = vpack.c.bf16 %v328, %v324
        %v345 = vpack.c.bf16 %v329, %v325
        %v346 = vld [vmem:[#allocation6] sm:$0xff]
        %v347 = vld [vmem:[#allocation6 + $0x8] sm:$0xff]
        %v348 = vld [vmem:[#allocation6 + $0x10] sm:$0xff]
        %v349 = vld [vmem:[#allocation6 + $0x18] sm:$0xff]
        %v350 = vld [vmem:[#allocation6 + $0x20] sm:$0xff]
        %v351 = vld [vmem:[#allocation6 + $0x28] sm:$0xff]
        %v352 = vld [vmem:[#allocation6 + $0x30] sm:$0xff]
        %v353 = vld [vmem:[#allocation6 + $0x38] sm:$0xff]
        %v354 = vld [vmem:[#allocation6 + $0x40] sm:$0xff]
        %v355 = vld [vmem:[#allocation6 + $0x48] sm:$0xff]
        %v356 = vld [vmem:[#allocation6 + $0x50] sm:$0xff]
        %v357 = vld [vmem:[#allocation6 + $0x58] sm:$0xff]
        %v358 = vld [vmem:[#allocation6 + $0x60] sm:$0xff]
        %v359 = vld [vmem:[#allocation6 + $0x68] sm:$0xff]
        %v360 = vld [vmem:[#allocation6 + $0x70] sm:$0xff]
        %v361 = vld [vmem:[#allocation6 + $0x78] sm:$0xff]
        %v362 = vld [vmem:[#allocation6 + $0x80] sm:$0xff]
        %v363 = vld [vmem:[#allocation6 + $0x88] sm:$0xff]
        %v364 = vld [vmem:[#allocation6 + $0x90] sm:$0xff]
        %v365 = vld [vmem:[#allocation6 + $0x98] sm:$0xff]
        %v366 = vld [vmem:[#allocation6 + $0xa0] sm:$0xff]
        %v367 = vld [vmem:[#allocation6 + $0xa8] sm:$0xff]
        %v368 = vld [vmem:[#allocation6 + $0xb0] sm:$0xff]
        %v369 = vld [vmem:[#allocation6 + $0xb8] sm:$0xff]
        %v370 = vld [vmem:[#allocation6 + $0xc0] sm:$0xff]
        %v371 = vld [vmem:[#allocation6 + $0xc8] sm:$0xff]
        %v372 = vld [vmem:[#allocation6 + $0xd0] sm:$0xff]
        %v373 = vld [vmem:[#allocation6 + $0xd8] sm:$0xff]
        %v374 = vld [vmem:[#allocation6 + $0xe0] sm:$0xff]
        %v375 = vld [vmem:[#allocation6 + $0xe8] sm:$0xff]
        %v376 = vld [vmem:[#allocation6 + $0xf0] sm:$0xff]
        %v377 = vld [vmem:[#allocation6 + $0xf8] sm:$0xff]
        %v378 = vld [vmem:[#allocation6 + $0x100] sm:$0xff]
        %v379 = vld [vmem:[#allocation6 + $0x108] sm:$0xff]
        %v380 = vld [vmem:[#allocation6 + $0x110] sm:$0xff]
        %v381 = vld [vmem:[#allocation6 + $0x118] sm:$0xff]
        %v382 = vld [vmem:[#allocation6 + $0x120] sm:$0xff]
        %v383 = vld [vmem:[#allocation6 + $0x128] sm:$0xff]
        %v384 = vld [vmem:[#allocation6 + $0x130] sm:$0xff]
        %v385 = vld [vmem:[#allocation6 + $0x138] sm:$0xff]
        %v386 = vld [vmem:[#allocation6 + $0x140] sm:$0xff]
        %v387 = vld [vmem:[#allocation6 + $0x148] sm:$0xff]
        %v388 = vld [vmem:[#allocation6 + $0x150] sm:$0xff]
        %v389 = vld [vmem:[#allocation6 + $0x158] sm:$0xff]
        %v390 = vld [vmem:[#allocation6 + $0x160] sm:$0xff]
        %v391 = vld [vmem:[#allocation6 + $0x168] sm:$0xff]
        %v392 = vld [vmem:[#allocation6 + $0x170] sm:$0xff]
        %v393 = vld [vmem:[#allocation6 + $0x178] sm:$0xff]
        %v394 = vld [vmem:[#allocation6 + $0x180] sm:$0xff]
        %v395 = vld [vmem:[#allocation6 + $0x188] sm:$0xff]
        %v396 = vld [vmem:[#allocation6 + $0x190] sm:$0xff]
        %v397 = vld [vmem:[#allocation6 + $0x198] sm:$0xff]
        %v398 = vld [vmem:[#allocation6 + $0x1a0] sm:$0xff]
        %v399 = vld [vmem:[#allocation6 + $0x1a8] sm:$0xff]
        %v400 = vld [vmem:[#allocation6 + $0x1b0] sm:$0xff]
        %v401 = vld [vmem:[#allocation6 + $0x1b8] sm:$0xff]
        %v402 = vld [vmem:[#allocation6 + $0x1c0] sm:$0xff]
        %v403 = vld [vmem:[#allocation6 + $0x1c8] sm:$0xff]
        %v404 = vld [vmem:[#allocation6 + $0x1d0] sm:$0xff]
        %v405 = vld [vmem:[#allocation6 + $0x1d8] sm:$0xff]
        %v406 = vld [vmem:[#allocation6 + $0x1e0] sm:$0xff]
        %v407 = vld [vmem:[#allocation6 + $0x1e8] sm:$0xff]
        %v408 = vld [vmem:[#allocation6 + $0x1f0] sm:$0xff]
        %v409 = vld [vmem:[#allocation6 + $0x1f8] sm:$0xff]
        %v410 = vld [vmem:[#allocation8] sm:$0x3]
        %v412 = vlaneseq
        %v413 = vshrl.u32 %v412, 7
        %v414 = vsub.s32 0, %v413
        %v415 = vrot.slane %v410, %v414
        %v416 = vlaneseq
        %v417 = vshrl.u32 %v416, 7
        %v418 = vsub.s32 1, %v417
        %v419 = vrot.slane %v410, %v418
        %v486 = vunpack.c.l.b16 %v346
        %v487 = vunpack.c.h.b16 %v346
        %v488 = vunpack.c.l.b16 %v347
        %v489 = vunpack.c.h.b16 %v347
        %v490 = vunpack.c.l.b16 %v348
        %v491 = vunpack.c.h.b16 %v348
        %v492 = vunpack.c.l.b16 %v349
        %v493 = vunpack.c.h.b16 %v349
        %v494 = vunpack.c.l.b16 %v350
        %v495 = vunpack.c.h.b16 %v350
        %v496 = vunpack.c.l.b16 %v351
        %v497 = vunpack.c.h.b16 %v351
        %v498 = vunpack.c.l.b16 %v352
        %v499 = vunpack.c.h.b16 %v352
        %v500 = vunpack.c.l.b16 %v353
        %v501 = vunpack.c.h.b16 %v353
        %v502 = vunpack.c.l.b16 %v354
        %v503 = vunpack.c.h.b16 %v354
        %v504 = vunpack.c.l.b16 %v355
        %v505 = vunpack.c.h.b16 %v355
        %v506 = vunpack.c.l.b16 %v356
        %v507 = vunpack.c.h.b16 %v356
        %v508 = vunpack.c.l.b16 %v357
        %v509 = vunpack.c.h.b16 %v357
        %v510 = vunpack.c.l.b16 %v358
        %v511 = vunpack.c.h.b16 %v358
        %v512 = vunpack.c.l.b16 %v359
        %v513 = vunpack.c.h.b16 %v359
        %v514 = vunpack.c.l.b16 %v360
        %v515 = vunpack.c.h.b16 %v360
        %v516 = vunpack.c.l.b16 %v361
        %v517 = vunpack.c.h.b16 %v361
        %v518 = vunpack.c.l.b16 %v362
        %v519 = vunpack.c.h.b16 %v362
        %v520 = vunpack.c.l.b16 %v363
        %v521 = vunpack.c.h.b16 %v363
        %v522 = vunpack.c.l.b16 %v364
        %v523 = vunpack.c.h.b16 %v364
        %v524 = vunpack.c.l.b16 %v365
        %v525 = vunpack.c.h.b16 %v365
        %v526 = vunpack.c.l.b16 %v366
        %v527 = vunpack.c.h.b16 %v366
        %v528 = vunpack.c.l.b16 %v367
        %v529 = vunpack.c.h.b16 %v367
        %v530 = vunpack.c.l.b16 %v368
        %v531 = vunpack.c.h.b16 %v368
        %v532 = vunpack.c.l.b16 %v369
        %v533 = vunpack.c.h.b16 %v369
        %v534 = vunpack.c.l.b16 %v370
        %v535 = vunpack.c.h.b16 %v370
        %v536 = vunpack.c.l.b16 %v371
        %v537 = vunpack.c.h.b16 %v371
        %v538 = vunpack.c.l.b16 %v372
        %v539 = vunpack.c.h.b16 %v372
        %v540 = vunpack.c.l.b16 %v373
        %v541 = vunpack.c.h.b16 %v373
        %v542 = vunpack.c.l.b16 %v374
        %v543 = vunpack.c.h.b16 %v374
        %v544 = vunpack.c.l.b16 %v375
        %v545 = vunpack.c.h.b16 %v375
        %v546 = vunpack.c.l.b16 %v376
        %v547 = vunpack.c.h.b16 %v376
        %v548 = vunpack.c.l.b16 %v377
        %v549 = vunpack.c.h.b16 %v377
        %v550 = vunpack.c.l.b16 %v378
        %v551 = vunpack.c.h.b16 %v378
        %v552 = vunpack.c.l.b16 %v379
        %v553 = vunpack.c.h.b16 %v379
        %v554 = vunpack.c.l.b16 %v380
        %v555 = vunpack.c.h.b16 %v380
        %v556 = vunpack.c.l.b16 %v381
        %v557 = vunpack.c.h.b16 %v381
        %v558 = vunpack.c.l.b16 %v382
        %v559 = vunpack.c.h.b16 %v382
        %v560 = vunpack.c.l.b16 %v383
        %v561 = vunpack.c.h.b16 %v383
        %v562 = vunpack.c.l.b16 %v384
        %v563 = vunpack.c.h.b16 %v384
        %v564 = vunpack.c.l.b16 %v385
        %v565 = vunpack.c.h.b16 %v385
        %v566 = vunpack.c.l.b16 %v386
        %v567 = vunpack.c.h.b16 %v386
        %v568 = vunpack.c.l.b16 %v387
        %v569 = vunpack.c.h.b16 %v387
        %v570 = vunpack.c.l.b16 %v388
        %v571 = vunpack.c.h.b16 %v388
        %v572 = vunpack.c.l.b16 %v389
        %v573 = vunpack.c.h.b16 %v389
        %v574 = vunpack.c.l.b16 %v390
        %v575 = vunpack.c.h.b16 %v390
        %v576 = vunpack.c.l.b16 %v391
        %v577 = vunpack.c.h.b16 %v391
        %v578 = vunpack.c.l.b16 %v392
        %v579 = vunpack.c.h.b16 %v392
        %v580 = vunpack.c.l.b16 %v393
        %v581 = vunpack.c.h.b16 %v393
        %v582 = vunpack.c.l.b16 %v394
        %v583 = vunpack.c.h.b16 %v394
        %v584 = vunpack.c.l.b16 %v395
        %v585 = vunpack.c.h.b16 %v395
        %v586 = vunpack.c.l.b16 %v396
        %v587 = vunpack.c.h.b16 %v396
        %v588 = vunpack.c.l.b16 %v397
        %v589 = vunpack.c.h.b16 %v397
        %v590 = vunpack.c.l.b16 %v398
        %v591 = vunpack.c.h.b16 %v398
        %v592 = vunpack.c.l.b16 %v399
        %v593 = vunpack.c.h.b16 %v399
        %v594 = vunpack.c.l.b16 %v400
        %v595 = vunpack.c.h.b16 %v400
        %v596 = vunpack.c.l.b16 %v401
        %v597 = vunpack.c.h.b16 %v401
        %v598 = vunpack.c.l.b16 %v402
        %v599 = vunpack.c.h.b16 %v402
        %v600 = vunpack.c.l.b16 %v403
        %v601 = vunpack.c.h.b16 %v403
        %v602 = vunpack.c.l.b16 %v404
        %v603 = vunpack.c.h.b16 %v404
        %v604 = vunpack.c.l.b16 %v405
        %v605 = vunpack.c.h.b16 %v405
        %v606 = vunpack.c.l.b16 %v406
        %v607 = vunpack.c.h.b16 %v406
        %v608 = vunpack.c.l.b16 %v407
        %v609 = vunpack.c.h.b16 %v407
        %v610 = vunpack.c.l.b16 %v408
        %v611 = vunpack.c.h.b16 %v408
        %v612 = vunpack.c.l.b16 %v409
        %v613 = vunpack.c.h.b16 %v409
        %v614 = vpack.c.b16 %v488, %v486
        %v615 = vpack.c.b16 %v489, %v487
        %v616 = vpack.c.b16 %v492, %v490
        %v617 = vpack.c.b16 %v493, %v491
        %v618 = vpack.c.b16 %v496, %v494
        %v619 = vpack.c.b16 %v497, %v495
        %v620 = vpack.c.b16 %v500, %v498
        %v621 = vpack.c.b16 %v501, %v499
        %v622 = vpack.c.b16 %v504, %v502
        %v623 = vpack.c.b16 %v505, %v503
        %v624 = vpack.c.b16 %v508, %v506
        %v625 = vpack.c.b16 %v509, %v507
        %v626 = vpack.c.b16 %v512, %v510
        %v627 = vpack.c.b16 %v513, %v511
        %v628 = vpack.c.b16 %v516, %v514
        %v629 = vpack.c.b16 %v517, %v515
        %v630 = vpack.c.b16 %v520, %v518
        %v631 = vpack.c.b16 %v521, %v519
        %v632 = vpack.c.b16 %v524, %v522
        %v633 = vpack.c.b16 %v525, %v523
        %v634 = vpack.c.b16 %v528, %v526
        %v635 = vpack.c.b16 %v529, %v527
        %v636 = vpack.c.b16 %v532, %v530
        %v637 = vpack.c.b16 %v533, %v531
        %v638 = vpack.c.b16 %v536, %v534
        %v639 = vpack.c.b16 %v537, %v535
        %v640 = vpack.c.b16 %v540, %v538
        %v641 = vpack.c.b16 %v541, %v539
        %v642 = vpack.c.b16 %v544, %v542
        %v643 = vpack.c.b16 %v545, %v543
        %v644 = vpack.c.b16 %v548, %v546
        %v645 = vpack.c.b16 %v549, %v547
        %v646 = vpack.c.b16 %v552, %v550
        %v647 = vpack.c.b16 %v553, %v551
        %v648 = vpack.c.b16 %v556, %v554
        %v649 = vpack.c.b16 %v557, %v555
        %v650 = vpack.c.b16 %v560, %v558
        %v651 = vpack.c.b16 %v561, %v559
        %v652 = vpack.c.b16 %v564, %v562
        %v653 = vpack.c.b16 %v565, %v563
        %v654 = vpack.c.b16 %v568, %v566
        %v655 = vpack.c.b16 %v569, %v567
        %v656 = vpack.c.b16 %v572, %v570
        %v657 = vpack.c.b16 %v573, %v571
        %v658 = vpack.c.b16 %v576, %v574
        %v659 = vpack.c.b16 %v577, %v575
        %v660 = vpack.c.b16 %v580, %v578
        %v661 = vpack.c.b16 %v581, %v579
        %v662 = vpack.c.b16 %v584, %v582
        %v663 = vpack.c.b16 %v585, %v583
        %v664 = vpack.c.b16 %v588, %v586
        %v665 = vpack.c.b16 %v589, %v587
        %v666 = vpack.c.b16 %v592, %v590
        %v667 = vpack.c.b16 %v593, %v591
        %v668 = vpack.c.b16 %v596, %v594
        %v669 = vpack.c.b16 %v597, %v595
        %v670 = vpack.c.b16 %v600, %v598
        %v671 = vpack.c.b16 %v601, %v599
        %v672 = vpack.c.b16 %v604, %v602
        %v673 = vpack.c.b16 %v605, %v603
        %v674 = vpack.c.b16 %v608, %v606
        %v675 = vpack.c.b16 %v609, %v607
        %v676 = vpack.c.b16 %v612, %v610
        %v677 = vpack.c.b16 %v613, %v611
        %742 = vmatprep.subr.bf16.mxu0 %v629
        %743 = vmatpush1.bf16.msra.mxu0 %v628
        %744 = vmatprep.subr.bf16.mxu0 %v627
        %745 = vmatpush1.bf16.msra.mxu0 %v626
        %746 = vmatprep.subr.bf16.mxu0 %v625
        %747 = vmatpush1.bf16.msra.mxu0 %v624
        %748 = vmatprep.subr.bf16.mxu0 %v623
        %749 = vmatpush1.bf16.msra.mxu0 %v622
        %750 = vmatprep.subr.bf16.mxu0 %v621
        %751 = vmatpush1.bf16.msra.mxu0 %v620
        %752 = vmatprep.subr.bf16.mxu0 %v619
        %753 = vmatpush1.bf16.msra.mxu0 %v618
        %754 = vmatprep.subr.bf16.mxu0 %v617
        %755 = vmatpush1.bf16.msra.mxu0 %v616
        %756 = vmatprep.subr.bf16.mxu0 %v615
        %757 = vmatpush1.bf16.msra.mxu0 %v614
        %758 = vmatprep.subr.bf16.mxu0 %v645
        %759 = vmatpush2.bf16.msra.mxu0 %v644
        %760 = vmatprep.subr.bf16.mxu0 %v643
        %761 = vmatpush2.bf16.msra.mxu0 %v642
        %762 = vmatprep.subr.bf16.mxu0 %v641
        %763 = vmatpush2.bf16.msra.mxu0 %v640
        %764 = vmatprep.subr.bf16.mxu0 %v639
        %765 = vmatpush2.bf16.msra.mxu0 %v638
        %766 = vmatprep.subr.bf16.mxu0 %v637
        %767 = vmatpush2.bf16.msra.mxu0 %v636
        %768 = vmatprep.subr.bf16.mxu0 %v635
        %769 = vmatpush2.bf16.msra.mxu0 %v634
        %770 = vmatprep.subr.bf16.mxu0 %v633
        %771 = vmatpush2.bf16.msra.mxu0 %v632
        %772 = vmatprep.subr.bf16.mxu0 %v631
        %773 = vmatpush2.bf16.msra.mxu0 %v630
        %774 = vmatprep.mubr.bf16.mxu0 %v331
        %775 = vmatmul.mubr.bf16.gmra.mxu0 %v330
        %v776 = vpop.f32.mrf.mxu0
        %v777 = vadd.f32 %v415, %v776
        %v778 = vpop.f32.mrf.mxu0
        %v779 = vadd.f32 %v419, %v778
        %v780 = vpop.f32.mrf.mxu0
        %v781 = vadd.f32 %v415, %v780
        %v782 = vpop.f32.mrf.mxu0
        %v783 = vadd.f32 %v419, %v782
        %784 = vmatprep.mubr.bf16.mxu0 %v335
        %785 = vmatmul.mubr.bf16.gmra.mxu0 %v334
        %v786 = vpop.f32.mrf.mxu0
        %v787 = vadd.f32 %v415, %v786
        %v788 = vpop.f32.mrf.mxu0
        %v789 = vadd.f32 %v419, %v788
        %v790 = vpop.f32.mrf.mxu0
        %v791 = vadd.f32 %v415, %v790
        %v792 = vpop.f32.mrf.mxu0
        %v793 = vadd.f32 %v419, %v792
        %794 = vmatprep.mubr.bf16.mxu0 %v339
        %795 = vmatmul.mubr.bf16.gmra.mxu0 %v338
        %v796 = vpop.f32.mrf.mxu0
        %v797 = vadd.f32 %v415, %v796
        %v798 = vpop.f32.mrf.mxu0
        %v799 = vadd.f32 %v419, %v798
        %v800 = vpop.f32.mrf.mxu0
        %v801 = vadd.f32 %v415, %v800
        %v802 = vpop.f32.mrf.mxu0
        %v803 = vadd.f32 %v419, %v802
        %804 = vmatprep.mubr.bf16.mxu0 %v343
        %805 = vmatmul.mubr.bf16.gmra.mxu0 %v342
        %v806 = vpop.f32.mrf.mxu0
        %v807 = vadd.f32 %v415, %v806
        %v808 = vpop.f32.mrf.mxu0
        %v809 = vadd.f32 %v419, %v808
        %v810 = vpop.f32.mrf.mxu0
        %v811 = vadd.f32 %v415, %v810
        %v812 = vpop.f32.mrf.mxu0
        %v813 = vadd.f32 %v419, %v812
        %814 = vdwg.mxu0
        %815 = vmatprep.subr.bf16.mxu0 %v661
        %816 = vmatpush1.bf16.msra.mxu0 %v660
        %817 = vmatprep.subr.bf16.mxu0 %v659
        %818 = vmatpush1.bf16.msra.mxu0 %v658
        %819 = vmatprep.subr.bf16.mxu0 %v657
        %820 = vmatpush1.bf16.msra.mxu0 %v656
        %821 = vmatprep.subr.bf16.mxu0 %v655
        %822 = vmatpush1.bf16.msra.mxu0 %v654
        %823 = vmatprep.subr.bf16.mxu0 %v653
        %824 = vmatpush1.bf16.msra.mxu0 %v652
        %825 = vmatprep.subr.bf16.mxu0 %v651
        %826 = vmatpush1.bf16.msra.mxu0 %v650
        %827 = vmatprep.subr.bf16.mxu0 %v649
        %828 = vmatpush1.bf16.msra.mxu0 %v648
        %829 = vmatprep.subr.bf16.mxu0 %v647
        %830 = vmatpush1.bf16.msra.mxu0 %v646
        %831 = vmatprep.subr.bf16.mxu0 %v677
        %832 = vmatpush2.bf16.msra.mxu0 %v676
        %833 = vmatprep.subr.bf16.mxu0 %v675
        %834 = vmatpush2.bf16.msra.mxu0 %v674
        %835 = vmatprep.subr.bf16.mxu0 %v673
        %836 = vmatpush2.bf16.msra.mxu0 %v672
        %837 = vmatprep.subr.bf16.mxu0 %v671
        %838 = vmatpush2.bf16.msra.mxu0 %v670
        %839 = vmatprep.subr.bf16.mxu0 %v669
        %840 = vmatpush2.bf16.msra.mxu0 %v668
        %841 = vmatprep.subr.bf16.mxu0 %v667
        %842 = vmatpush2.bf16.msra.mxu0 %v666
        %843 = vmatprep.subr.bf16.mxu0 %v665
        %844 = vmatpush2.bf16.msra.mxu0 %v664
        %845 = vmatprep.subr.bf16.mxu0 %v663
        %846 = vmatpush2.bf16.msra.mxu0 %v662
        %847 = vmatprep.mubr.bf16.mxu0 %v333
        %848 = vmatmul.mubr.bf16.gmra.mxu0 %v332
        %v849 = vpop.f32.mrf.mxu0
        %v850 = vadd.f32 %v777, %v849
        %v851 = vpop.f32.mrf.mxu0
        %v852 = vadd.f32 %v779, %v851
        %v853 = vpop.f32.mrf.mxu0
        %v854 = vadd.f32 %v781, %v853
        %v855 = vpop.f32.mrf.mxu0
        %v856 = vadd.f32 %v783, %v855
        %857 = vmatprep.mubr.bf16.mxu0 %v337
        %858 = vmatmul.mubr.bf16.gmra.mxu0 %v336
        %v859 = vpop.f32.mrf.mxu0
        %v860 = vadd.f32 %v787, %v859
        %v861 = vpop.f32.mrf.mxu0
        %v862 = vadd.f32 %v789, %v861
        %v863 = vpop.f32.mrf.mxu0
        %v864 = vadd.f32 %v791, %v863
        %v865 = vpop.f32.mrf.mxu0
        %v866 = vadd.f32 %v793, %v865
        %867 = vmatprep.mubr.bf16.mxu0 %v341
        %868 = vmatmul.mubr.bf16.gmra.mxu0 %v340
        %v869 = vpop.f32.mrf.mxu0
        %v870 = vadd.f32 %v797, %v869
        %v871 = vpop.f32.mrf.mxu0
        %v872 = vadd.f32 %v799, %v871
        %v873 = vpop.f32.mrf.mxu0
        %v874 = vadd.f32 %v801, %v873
        %v875 = vpop.f32.mrf.mxu0
        %v876 = vadd.f32 %v803, %v875
        %877 = vmatprep.mubr.bf16.mxu0 %v345
        %878 = vmatmul.mubr.bf16.gmra.mxu0 %v344
        %v879 = vpop.f32.mrf.mxu0
        %v880 = vadd.f32 %v807, %v879
        %v881 = vpop.f32.mrf.mxu0
        %v882 = vadd.f32 %v809, %v881
        %v883 = vpop.f32.mrf.mxu0
        %v884 = vadd.f32 %v811, %v883
        %v885 = vpop.f32.mrf.mxu0
        %v886 = vadd.f32 %v813, %v885
        %887 = vdwg.mxu0
        %v888 = vpack.c.bf16 %v854, %v850
        %v889 = vpack.c.bf16 %v856, %v852
        %v890 = vpack.c.bf16 %v864, %v860
        %v891 = vpack.c.bf16 %v866, %v862
        %v892 = vpack.c.bf16 %v874, %v870
        %v893 = vpack.c.bf16 %v876, %v872
        %v894 = vpack.c.bf16 %v884, %v880
        %v895 = vpack.c.bf16 %v886, %v882
        %v904 = vunpack.c.l.b16 %v888
        %v905 = vunpack.c.l.b16 %v889
        %v906 = vunpack.c.h.b16 %v888
        %v907 = vunpack.c.h.b16 %v889
        %v908 = vunpack.c.l.b16 %v890
        %v909 = vunpack.c.l.b16 %v891
        %v910 = vunpack.c.h.b16 %v890
        %v911 = vunpack.c.h.b16 %v891
        %v912 = vunpack.c.l.b16 %v892
        %v913 = vunpack.c.l.b16 %v893
        %v914 = vunpack.c.h.b16 %v892
        %v915 = vunpack.c.h.b16 %v893
        %v916 = vunpack.c.l.b16 %v894
        %v917 = vunpack.c.l.b16 %v895
        %v918 = vunpack.c.h.b16 %v894
        %v919 = vunpack.c.h.b16 %v895
        %v920 = vpack.c.b16 %v905, %v904
        %v921 = vpack.c.b16 %v907, %v906
        %v922 = vpack.c.b16 %v909, %v908
        %v923 = vpack.c.b16 %v911, %v910
        %v924 = vpack.c.b16 %v913, %v912
        %v925 = vpack.c.b16 %v915, %v914
        %v926 = vpack.c.b16 %v917, %v916
        %v927 = vpack.c.b16 %v919, %v918
        %936 = vst [vmem:[#allocation2] sm:$0xff] 0
        %937 = vst [vmem:[#allocation2 + $0x8] sm:$0xff] 0
        %938 = vst [vmem:[#allocation2 + $0x10] sm:$0xff] 0
        %s939 = scalar_lea.vmem [#allocation2], 216
        %940 = vst [vmem:[%s939] sm:$0xff] 0
        %941 = vst [vmem:[%s939 + $0x8] sm:$0xff] 0
        %942 = vst [vmem:[%s939 + $0x10] sm:$0xff] 0
        %s943 = scalar_lea.vmem [#allocation2], 24
        %vm944 = vcmask 1040384
        %vm945 = vsmask.f32 256
        %vm946 = vmand %vm944, %vm945
        %vm947 = vcmask 1044484
        %vm948 = vsmask.f32 4352
        %vm949 = vmand %vm947, %vm948
        %vm950 = vmor %vm949, %vm946
        %v951 = vld [vmem:[%s943] sm:$0x11]
        %v952 = vsel %vm950, 0, %v951
        %953 = vst [vmem:[%s943] sm:$0x11] %v952
        %v954 = vld [vmem:[%s943 + $0x18] sm:$0x11]
        %v955 = vsel %vm950, 0, %v954
        %956 = vst [vmem:[%s943 + $0x18] sm:$0x11] %v955
        %v957 = vld [vmem:[%s943 + $0x30] sm:$0x11]
        %v958 = vsel %vm950, 0, %v957
        %959 = vst [vmem:[%s943 + $0x30] sm:$0x11] %v958
        %v960 = vld [vmem:[%s943 + $0x48] sm:$0x11]
        %v961 = vsel %vm950, 0, %v960
        %962 = vst [vmem:[%s943 + $0x48] sm:$0x11] %v961
        %v963 = vld [vmem:[%s943 + $0x60] sm:$0x11]
        %v964 = vsel %vm950, 0, %v963
        %965 = vst [vmem:[%s943 + $0x60] sm:$0x11] %v964
        %v966 = vld [vmem:[%s943 + $0x78] sm:$0x11]
        %v967 = vsel %vm950, 0, %v966
        %968 = vst [vmem:[%s943 + $0x78] sm:$0x11] %v967
        %v969 = vld [vmem:[%s943 + $0x90] sm:$0x11]
        %v970 = vsel %vm950, 0, %v969
        %971 = vst [vmem:[%s943 + $0x90] sm:$0x11] %v970
        %v972 = vld [vmem:[%s943 + $0xa8] sm:$0x11]
        %v973 = vsel %vm950, 0, %v972
        %974 = vst [vmem:[%s943 + $0xa8] sm:$0x11] %v973
        %vm975 = vcmask 1043459
        %vm976 = vsmask.f32 7950
        %vm977 = vmand %vm975, %vm976
        %vm978 = vcmask 1047559
        %vm979 = vsmask.f32 7966
        %vm980 = vmand %vm978, %vm979
        %vm981 = vmor %vm980, %vm977
        %v982 = vld [vmem:[%s943 + $0x10] sm:$0x88]
        %v983 = vsel %vm981, 0, %v982
        %984 = vst [vmem:[%s943 + $0x10] sm:$0x88] %v983
        %v985 = vld [vmem:[%s943 + $0x28] sm:$0x88]
        %v986 = vsel %vm981, 0, %v985
        %987 = vst [vmem:[%s943 + $0x28] sm:$0x88] %v986
        %v988 = vld [vmem:[%s943 + $0x40] sm:$0x88]
        %v989 = vsel %vm981, 0, %v988
        %990 = vst [vmem:[%s943 + $0x40] sm:$0x88] %v989
        %v991 = vld [vmem:[%s943 + $0x58] sm:$0x88]
        %v992 = vsel %vm981, 0, %v991
        %993 = vst [vmem:[%s943 + $0x58] sm:$0x88] %v992
        %v994 = vld [vmem:[%s943 + $0x70] sm:$0x88]
        %v995 = vsel %vm981, 0, %v994
        %996 = vst [vmem:[%s943 + $0x70] sm:$0x88] %v995
        %v997 = vld [vmem:[%s943 + $0x88] sm:$0x88]
        %v998 = vsel %vm981, 0, %v997
        %999 = vst [vmem:[%s943 + $0x88] sm:$0x88] %v998
        %v1000 = vld [vmem:[%s943 + $0xa0] sm:$0x88]
        %v1001 = vsel %vm981, 0, %v1000
        %1002 = vst [vmem:[%s943 + $0xa0] sm:$0x88] %v1001
        %v1003 = vld [vmem:[%s943 + $0xb8] sm:$0x88]
        %v1004 = vsel %vm981, 0, %v1003
        %1005 = vst [vmem:[%s943 + $0xb8] sm:$0x88] %v1004
        %1006 = vst [vmem:[%s943 + $0x8] sm:$0xff] %v920
        %1007 = vst [vmem:[%s943 + $0x20] sm:$0xff] %v921
        %1008 = vst [vmem:[%s943 + $0x38] sm:$0xff] %v922
        %1009 = vst [vmem:[%s943 + $0x50] sm:$0xff] %v923
        %1010 = vst [vmem:[%s943 + $0x68] sm:$0xff] %v924
        %1011 = vst [vmem:[%s943 + $0x80] sm:$0xff] %v925
        %1012 = vst [vmem:[%s943 + $0x98] sm:$0xff] %v926
        %1013 = vst [vmem:[%s943 + $0xb0] sm:$0xff] %v927
        %v1015 = vshrl.u32 %v920, 16
        %v1017 = vrot.slane %v1015, 7
        %v1018 = vshll.u32 %v920, 16
        %v1020 = vor.u32 %v1017, %v1018
        %v1022 = vshrl.u32 %v921, 16
        %v1024 = vrot.slane %v1022, 7
        %v1025 = vshll.u32 %v921, 16
        %v1027 = vor.u32 %v1024, %v1025
        %v1029 = vshrl.u32 %v922, 16
        %v1031 = vrot.slane %v1029, 7
        %v1032 = vshll.u32 %v922, 16
        %v1034 = vor.u32 %v1031, %v1032
        %v1036 = vshrl.u32 %v923, 16
        %v1038 = vrot.slane %v1036, 7
        %v1039 = vshll.u32 %v923, 16
        %v1041 = vor.u32 %v1038, %v1039
        %v1043 = vshrl.u32 %v924, 16
        %v1045 = vrot.slane %v1043, 7
        %v1046 = vshll.u32 %v924, 16
        %v1048 = vor.u32 %v1045, %v1046
        %v1050 = vshrl.u32 %v925, 16
        %v1052 = vrot.slane %v1050, 7
        %v1053 = vshll.u32 %v925, 16
        %v1055 = vor.u32 %v1052, %v1053
        %v1057 = vshrl.u32 %v926, 16
        %v1059 = vrot.slane %v1057, 7
        %v1060 = vshll.u32 %v926, 16
        %v1062 = vor.u32 %v1059, %v1060
        %v1064 = vshrl.u32 %v927, 16
        %v1066 = vrot.slane %v1064, 7
        %v1067 = vshll.u32 %v927, 16
        %v1069 = vor.u32 %v1066, %v1067
        %vm1078 = vcmask 1043456
        %vm1079 = vsmask.f32 7938
        %vm1080 = vmand %vm1078, %vm1079
        %vm1081 = vcmask 1047556
        %vm1082 = vsmask.f32 7954
        %vm1083 = vmand %vm1081, %vm1082
        %vm1084 = vmor %vm1083, %vm1080
        %v1085 = vld [vmem:[%s943] sm:$0xff]
        %v1086 = vsel %vm1084, %v1020, %v1085
        %1087 = vst [vmem:[%s943] sm:$0xff] %v1086
        %v1088 = vld [vmem:[%s943 + $0x18] sm:$0xff]
        %v1089 = vsel %vm1084, %v1027, %v1088
        %1090 = vst [vmem:[%s943 + $0x18] sm:$0xff] %v1089
        %v1091 = vld [vmem:[%s943 + $0x30] sm:$0xff]
        %v1092 = vsel %vm1084, %v1034, %v1091
        %1093 = vst [vmem:[%s943 + $0x30] sm:$0xff] %v1092
        %v1094 = vld [vmem:[%s943 + $0x48] sm:$0xff]
        %v1095 = vsel %vm1084, %v1041, %v1094
        %1096 = vst [vmem:[%s943 + $0x48] sm:$0xff] %v1095
        %v1097 = vld [vmem:[%s943 + $0x60] sm:$0xff]
        %v1098 = vsel %vm1084, %v1048, %v1097
        %1099 = vst [vmem:[%s943 + $0x60] sm:$0xff] %v1098
        %v1100 = vld [vmem:[%s943 + $0x78] sm:$0xff]
        %v1101 = vsel %vm1084, %v1055, %v1100
        %1102 = vst [vmem:[%s943 + $0x78] sm:$0xff] %v1101
        %v1103 = vld [vmem:[%s943 + $0x90] sm:$0xff]
        %v1104 = vsel %vm1084, %v1062, %v1103
        %1105 = vst [vmem:[%s943 + $0x90] sm:$0xff] %v1104
        %v1106 = vld [vmem:[%s943 + $0xa8] sm:$0xff]
        %v1107 = vsel %vm1084, %v1069, %v1106
        %1108 = vst [vmem:[%s943 + $0xa8] sm:$0xff] %v1107
        %v1109 = vrot.slane %v1015, 4
        %v1110 = vrot.slane %v1018, 5
        %v1111 = vor.u32 %v1109, %v1110
        %v1112 = vrot.slane %v1111, 4
        %v1113 = vrot.slane %v1022, 4
        %v1114 = vrot.slane %v1025, 5
        %v1115 = vor.u32 %v1113, %v1114
        %v1116 = vrot.slane %v1115, 4
        %v1117 = vrot.slane %v1029, 4
        %v1118 = vrot.slane %v1032, 5
        %v1119 = vor.u32 %v1117, %v1118
        %v1120 = vrot.slane %v1119, 4
        %v1121 = vrot.slane %v1036, 4
        %v1122 = vrot.slane %v1039, 5
        %v1123 = vor.u32 %v1121, %v1122
        %v1124 = vrot.slane %v1123, 4
        %v1125 = vrot.slane %v1043, 4
        %v1126 = vrot.slane %v1046, 5
        %v1127 = vor.u32 %v1125, %v1126
        %v1128 = vrot.slane %v1127, 4
        %v1129 = vrot.slane %v1050, 4
        %v1130 = vrot.slane %v1053, 5
        %v1131 = vor.u32 %v1129, %v1130
        %v1132 = vrot.slane %v1131, 4
        %v1133 = vrot.slane %v1057, 4
        %v1134 = vrot.slane %v1060, 5
        %v1135 = vor.u32 %v1133, %v1134
        %v1136 = vrot.slane %v1135, 4
        %v1137 = vrot.slane %v1064, 4
        %v1138 = vrot.slane %v1067, 5
        %v1139 = vor.u32 %v1137, %v1138
        %v1140 = vrot.slane %v1139, 4
        %vm1149 = vsmask.f32 3328
        %vm1150 = vmand %vm1078, %vm1149
        %vm1151 = vsmask.f32 7424
        %vm1152 = vmand %vm1081, %vm1151
        %vm1153 = vmor %vm1152, %vm1150
        %v1154 = vld [vmem:[%s943 + $0x10] sm:$0xff]
        %v1155 = vsel %vm1153, %v1112, %v1154
        %1156 = vst [vmem:[%s943 + $0x10] sm:$0xff] %v1155
        %v1157 = vld [vmem:[%s943 + $0x28] sm:$0xff]
        %v1158 = vsel %vm1153, %v1116, %v1157
        %1159 = vst [vmem:[%s943 + $0x28] sm:$0xff] %v1158
        %v1160 = vld [vmem:[%s943 + $0x40] sm:$0xff]
        %v1161 = vsel %vm1153, %v1120, %v1160
        %1162 = vst [vmem:[%s943 + $0x40] sm:$0xff] %v1161
        %v1163 = vld [vmem:[%s943 + $0x58] sm:$0xff]
        %v1164 = vsel %vm1153, %v1124, %v1163
        %1165 = vst [vmem:[%s943 + $0x58] sm:$0xff] %v1164
        %v1166 = vld [vmem:[%s943 + $0x70] sm:$0xff]
        %v1167 = vsel %vm1153, %v1128, %v1166
        %1168 = vst [vmem:[%s943 + $0x70] sm:$0xff] %v1167
        %v1169 = vld [vmem:[%s943 + $0x88] sm:$0xff]
        %v1170 = vsel %vm1153, %v1132, %v1169
        %1171 = vst [vmem:[%s943 + $0x88] sm:$0xff] %v1170
        %v1172 = vld [vmem:[%s943 + $0xa0] sm:$0xff]
        %v1173 = vsel %vm1153, %v1136, %v1172
        %1174 = vst [vmem:[%s943 + $0xa0] sm:$0xff] %v1173
        %v1175 = vld [vmem:[%s943 + $0xb8] sm:$0xff]
        %v1176 = vsel %vm1153, %v1140, %v1175
        %1177 = vst [vmem:[%s943 + $0xb8] sm:$0xff] %v1176
        %v1178 = vld [vmem:[#allocation2] sm:$0xff]
        %v1179 = vld [vmem:[#allocation2 + $0x8] sm:$0xff]
        %v1180 = vld [vmem:[#allocation2 + $0x10] sm:$0xff]
        %v1181 = vld [vmem:[#allocation2 + $0x18] sm:$0xff]
        %v1182 = vld [vmem:[#allocation2 + $0x20] sm:$0xff]
        %v1183 = vld [vmem:[#allocation2 + $0x28] sm:$0xff]
        %v1184 = vld [vmem:[#allocation2 + $0x30] sm:$0xff]
        %v1185 = vld [vmem:[#allocation2 + $0x38] sm:$0xff]
        %v1186 = vld [vmem:[#allocation2 + $0x40] sm:$0xff]
        %v1187 = vld [vmem:[#allocation2 + $0x48] sm:$0xff]
        %v1188 = vld [vmem:[#allocation2 + $0x50] sm:$0xff]
        %v1189 = vld [vmem:[#allocation2 + $0x58] sm:$0xff]
        %v1190 = vld [vmem:[#allocation2 + $0x60] sm:$0xff]
        %v1191 = vld [vmem:[#allocation2 + $0x68] sm:$0xff]
        %v1192 = vld [vmem:[#allocation2 + $0x70] sm:$0xff]
        %v1193 = vld [vmem:[#allocation2 + $0x78] sm:$0xff]
        %v1194 = vld [vmem:[#allocation2 + $0x80] sm:$0xff]
        %v1195 = vld [vmem:[#allocation2 + $0x88] sm:$0xff]
        %v1196 = vld [vmem:[#allocation2 + $0x90] sm:$0xff]
        %v1197 = vld [vmem:[#allocation2 + $0x98] sm:$0xff]
        %v1198 = vld [vmem:[#allocation2 + $0xa0] sm:$0xff]
        %v1199 = vld [vmem:[#allocation2 + $0xa8] sm:$0xff]
        %v1200 = vld [vmem:[#allocation2 + $0xb0] sm:$0xff]
        %v1201 = vld [vmem:[#allocation2 + $0xb8] sm:$0xff]
        %v1202 = vld [vmem:[#allocation9] sm:$0xff]
        %v1203 = vld [vmem:[#allocation9 + $0x8] sm:$0xff]
        %v1204 = vld [vmem:[#allocation9 + $0x10] sm:$0xff]
        %v1205 = vld [vmem:[#allocation9 + $0x18] sm:$0xff]
        %v1206 = vld [vmem:[#allocation9 + $0x20] sm:$0xff]
        %v1207 = vld [vmem:[#allocation9 + $0x28] sm:$0xff]
        %v1208 = vld [vmem:[#allocation9 + $0x30] sm:$0xff]
        %v1209 = vld [vmem:[#allocation9 + $0x38] sm:$0xff]
        %v1210 = vld [vmem:[#allocation9 + $0x40] sm:$0xff]
        %v1211 = vld [vmem:[#allocation9 + $0x48] sm:$0xff]
        %v1212 = vld [vmem:[#allocation9 + $0x50] sm:$0xff]
        %v1213 = vld [vmem:[#allocation9 + $0x58] sm:$0xff]
        %v1214 = vld [vmem:[#allocation9 + $0x60] sm:$0xff]
        %v1215 = vld [vmem:[#allocation9 + $0x68] sm:$0xff]
        %v1216 = vld [vmem:[#allocation9 + $0x70] sm:$0xff]
        %v1217 = vld [vmem:[#allocation9 + $0x78] sm:$0xff]
        %v1218 = vld [vmem:[#allocation9 + $0x80] sm:$0xff]
        %v1219 = vld [vmem:[#allocation9 + $0x88] sm:$0xff]
        %v1220 = vld [vmem:[#allocation9 + $0x90] sm:$0xff]
        %v1221 = vld [vmem:[#allocation9 + $0x98] sm:$0xff]
        %v1222 = vld [vmem:[#allocation9 + $0xa0] sm:$0xff]
        %v1223 = vld [vmem:[#allocation9 + $0xa8] sm:$0xff]
        %v1224 = vld [vmem:[#allocation9 + $0xb0] sm:$0xff]
        %v1225 = vld [vmem:[#allocation9 + $0xb8] sm:$0xff]
        %v1226 = vld [vmem:[#allocation9 + $0xc0] sm:$0xff]
        %v1227 = vld [vmem:[#allocation9 + $0xc8] sm:$0xff]
        %v1228 = vld [vmem:[#allocation9 + $0xd0] sm:$0xff]
        %v1229 = vld [vmem:[#allocation9 + $0xd8] sm:$0xff]
        %v1230 = vld [vmem:[#allocation9 + $0xe0] sm:$0xff]
        %v1231 = vld [vmem:[#allocation9 + $0xe8] sm:$0xff]
        %v1232 = vld [vmem:[#allocation9 + $0xf0] sm:$0xff]
        %v1233 = vld [vmem:[#allocation9 + $0xf8] sm:$0xff]
        %v1234 = vld [vmem:[#allocation9 + $0x100] sm:$0xff]
        %v1235 = vld [vmem:[#allocation9 + $0x108] sm:$0xff]
        %v1236 = vld [vmem:[#allocation9 + $0x110] sm:$0xff]
        %v1237 = vld [vmem:[#allocation9 + $0x118] sm:$0xff]
        %v1238 = vld [vmem:[#allocation9 + $0x120] sm:$0xff]
        %v1239 = vld [vmem:[#allocation9 + $0x128] sm:$0xff]
        %v1240 = vld [vmem:[#allocation9 + $0x130] sm:$0xff]
        %v1241 = vld [vmem:[#allocation9 + $0x138] sm:$0xff]
        %v1242 = vld [vmem:[#allocation9 + $0x140] sm:$0xff]
        %v1243 = vld [vmem:[#allocation9 + $0x148] sm:$0xff]
        %v1244 = vld [vmem:[#allocation9 + $0x150] sm:$0xff]
        %v1245 = vld [vmem:[#allocation9 + $0x158] sm:$0xff]
        %v1246 = vld [vmem:[#allocation9 + $0x160] sm:$0xff]
        %v1247 = vld [vmem:[#allocation9 + $0x168] sm:$0xff]
        %v1248 = vld [vmem:[#allocation9 + $0x170] sm:$0xff]
        %v1249 = vld [vmem:[#allocation9 + $0x178] sm:$0xff]
        %v1250 = vld [vmem:[#allocation9 + $0x180] sm:$0xff]
        %v1251 = vld [vmem:[#allocation9 + $0x188] sm:$0xff]
        %v1252 = vld [vmem:[#allocation9 + $0x190] sm:$0xff]
        %v1253 = vld [vmem:[#allocation9 + $0x198] sm:$0xff]
        %v1254 = vld [vmem:[#allocation9 + $0x1a0] sm:$0xff]
        %v1255 = vld [vmem:[#allocation9 + $0x1a8] sm:$0xff]
        %v1256 = vld [vmem:[#allocation9 + $0x1b0] sm:$0xff]
        %v1257 = vld [vmem:[#allocation9 + $0x1b8] sm:$0xff]
        %v1258 = vld [vmem:[#allocation9 + $0x1c0] sm:$0xff]
        %v1259 = vld [vmem:[#allocation9 + $0x1c8] sm:$0xff]
        %v1260 = vld [vmem:[#allocation9 + $0x1d0] sm:$0xff]
        %v1261 = vld [vmem:[#allocation9 + $0x1d8] sm:$0xff]
        %v1262 = vld [vmem:[#allocation9 + $0x1e0] sm:$0xff]
        %v1263 = vld [vmem:[#allocation9 + $0x1e8] sm:$0xff]
        %v1264 = vld [vmem:[#allocation9 + $0x1f0] sm:$0xff]
        %v1265 = vld [vmem:[#allocation9 + $0x1f8] sm:$0xff]
        %v1266 = vld [vmem:[#allocation9 + $0x200] sm:$0xff]
        %v1267 = vld [vmem:[#allocation9 + $0x208] sm:$0xff]
        %v1268 = vld [vmem:[#allocation9 + $0x210] sm:$0xff]
        %v1269 = vld [vmem:[#allocation9 + $0x218] sm:$0xff]
        %v1270 = vld [vmem:[#allocation9 + $0x220] sm:$0xff]
        %v1271 = vld [vmem:[#allocation9 + $0x228] sm:$0xff]
        %v1272 = vld [vmem:[#allocation9 + $0x230] sm:$0xff]
        %v1273 = vld [vmem:[#allocation9 + $0x238] sm:$0xff]
        %v1274 = vld [vmem:[#allocation9 + $0x240] sm:$0xff]
        %v1275 = vld [vmem:[#allocation9 + $0x248] sm:$0xff]
        %v1276 = vld [vmem:[#allocation9 + $0x250] sm:$0xff]
        %v1277 = vld [vmem:[#allocation9 + $0x258] sm:$0xff]
        %v1278 = vld [vmem:[#allocation9 + $0x260] sm:$0xff]
        %v1279 = vld [vmem:[#allocation9 + $0x268] sm:$0xff]
        %v1280 = vld [vmem:[#allocation9 + $0x270] sm:$0xff]
        %v1281 = vld [vmem:[#allocation9 + $0x278] sm:$0xff]
        %v1282 = vld [vmem:[#allocation9 + $0x280] sm:$0xff]
        %v1283 = vld [vmem:[#allocation9 + $0x288] sm:$0xff]
        %v1284 = vld [vmem:[#allocation9 + $0x290] sm:$0xff]
        %v1285 = vld [vmem:[#allocation9 + $0x298] sm:$0xff]
        %v1286 = vld [vmem:[#allocation9 + $0x2a0] sm:$0xff]
        %v1287 = vld [vmem:[#allocation9 + $0x2a8] sm:$0xff]
        %v1288 = vld [vmem:[#allocation9 + $0x2b0] sm:$0xff]
        %v1289 = vld [vmem:[#allocation9 + $0x2b8] sm:$0xff]
        %v1290 = vld [vmem:[#allocation9 + $0x2c0] sm:$0xff]
        %v1291 = vld [vmem:[#allocation9 + $0x2c8] sm:$0xff]
        %v1292 = vld [vmem:[#allocation9 + $0x2d0] sm:$0xff]
        %v1293 = vld [vmem:[#allocation9 + $0x2d8] sm:$0xff]
        %v1294 = vld [vmem:[#allocation9 + $0x2e0] sm:$0xff]
        %v1295 = vld [vmem:[#allocation9 + $0x2e8] sm:$0xff]
        %v1296 = vld [vmem:[#allocation9 + $0x2f0] sm:$0xff]
        %v1297 = vld [vmem:[#allocation9 + $0x2f8] sm:$0xff]
        %v1298 = vld [vmem:[#allocation9 + $0x300] sm:$0xff]
        %v1299 = vld [vmem:[#allocation9 + $0x308] sm:$0xff]
        %v1300 = vld [vmem:[#allocation9 + $0x310] sm:$0xff]
        %v1301 = vld [vmem:[#allocation9 + $0x318] sm:$0xff]
        %v1302 = vld [vmem:[#allocation9 + $0x320] sm:$0xff]
        %v1303 = vld [vmem:[#allocation9 + $0x328] sm:$0xff]
        %v1304 = vld [vmem:[#allocation9 + $0x330] sm:$0xff]
        %v1305 = vld [vmem:[#allocation9 + $0x338] sm:$0xff]
        %v1306 = vld [vmem:[#allocation9 + $0x340] sm:$0xff]
        %v1307 = vld [vmem:[#allocation9 + $0x348] sm:$0xff]
        %v1308 = vld [vmem:[#allocation9 + $0x350] sm:$0xff]
        %v1309 = vld [vmem:[#allocation9 + $0x358] sm:$0xff]
        %v1310 = vld [vmem:[#allocation9 + $0x360] sm:$0xff]
        %v1311 = vld [vmem:[#allocation9 + $0x368] sm:$0xff]
        %v1312 = vld [vmem:[#allocation9 + $0x370] sm:$0xff]
        %v1313 = vld [vmem:[#allocation9 + $0x378] sm:$0xff]
        %v1314 = vld [vmem:[#allocation9 + $0x380] sm:$0xff]
        %v1315 = vld [vmem:[#allocation9 + $0x388] sm:$0xff]
        %v1316 = vld [vmem:[#allocation9 + $0x390] sm:$0xff]
        %v1317 = vld [vmem:[#allocation9 + $0x398] sm:$0xff]
        %v1318 = vld [vmem:[#allocation9 + $0x3a0] sm:$0xff]
        %v1319 = vld [vmem:[#allocation9 + $0x3a8] sm:$0xff]
        %v1320 = vld [vmem:[#allocation9 + $0x3b0] sm:$0xff]
        %v1321 = vld [vmem:[#allocation9 + $0x3b8] sm:$0xff]
        %v1322 = vld [vmem:[#allocation9 + $0x3c0] sm:$0xff]
        %v1323 = vld [vmem:[#allocation9 + $0x3c8] sm:$0xff]
        %v1324 = vld [vmem:[#allocation9 + $0x3d0] sm:$0xff]
        %v1325 = vld [vmem:[#allocation9 + $0x3d8] sm:$0xff]
        %v1326 = vld [vmem:[#allocation9 + $0x3e0] sm:$0xff]
        %v1327 = vld [vmem:[#allocation9 + $0x3e8] sm:$0xff]
        %v1328 = vld [vmem:[#allocation9 + $0x3f0] sm:$0xff]
        %v1329 = vld [vmem:[#allocation9 + $0x3f8] sm:$0xff]
        %v1330 = vld [vmem:[#allocation9 + $0x400] sm:$0xff]
        %v1331 = vld [vmem:[#allocation9 + $0x408] sm:$0xff]
        %v1332 = vld [vmem:[#allocation9 + $0x410] sm:$0xff]
        %v1333 = vld [vmem:[#allocation9 + $0x418] sm:$0xff]
        %v1334 = vld [vmem:[#allocation9 + $0x420] sm:$0xff]
        %v1335 = vld [vmem:[#allocation9 + $0x428] sm:$0xff]
        %v1336 = vld [vmem:[#allocation9 + $0x430] sm:$0xff]
        %v1337 = vld [vmem:[#allocation9 + $0x438] sm:$0xff]
        %v1338 = vld [vmem:[#allocation9 + $0x440] sm:$0xff]
        %v1339 = vld [vmem:[#allocation9 + $0x448] sm:$0xff]
        %v1340 = vld [vmem:[#allocation9 + $0x450] sm:$0xff]
        %v1341 = vld [vmem:[#allocation9 + $0x458] sm:$0xff]
        %v1342 = vld [vmem:[#allocation9 + $0x460] sm:$0xff]
        %v1343 = vld [vmem:[#allocation9 + $0x468] sm:$0xff]
        %v1344 = vld [vmem:[#allocation9 + $0x470] sm:$0xff]
        %v1345 = vld [vmem:[#allocation9 + $0x478] sm:$0xff]
        %v1346 = vld [vmem:[#allocation9 + $0x480] sm:$0xff]
        %v1347 = vld [vmem:[#allocation9 + $0x488] sm:$0xff]
        %v1348 = vld [vmem:[#allocation9 + $0x490] sm:$0xff]
        %v1349 = vld [vmem:[#allocation9 + $0x498] sm:$0xff]
        %v1350 = vld [vmem:[#allocation9 + $0x4a0] sm:$0xff]
        %v1351 = vld [vmem:[#allocation9 + $0x4a8] sm:$0xff]
        %v1352 = vld [vmem:[#allocation9 + $0x4b0] sm:$0xff]
        %v1353 = vld [vmem:[#allocation9 + $0x4b8] sm:$0xff]
        %v1354 = vld [vmem:[#allocation9 + $0x4c0] sm:$0xff]
        %v1355 = vld [vmem:[#allocation9 + $0x4c8] sm:$0xff]
        %v1356 = vld [vmem:[#allocation9 + $0x4d0] sm:$0xff]
        %v1357 = vld [vmem:[#allocation9 + $0x4d8] sm:$0xff]
        %v1358 = vld [vmem:[#allocation9 + $0x4e0] sm:$0xff]
        %v1359 = vld [vmem:[#allocation9 + $0x4e8] sm:$0xff]
        %v1360 = vld [vmem:[#allocation9 + $0x4f0] sm:$0xff]
        %v1361 = vld [vmem:[#allocation9 + $0x4f8] sm:$0xff]
        %v1362 = vld [vmem:[#allocation9 + $0x500] sm:$0xff]
        %v1363 = vld [vmem:[#allocation9 + $0x508] sm:$0xff]
        %v1364 = vld [vmem:[#allocation9 + $0x510] sm:$0xff]
        %v1365 = vld [vmem:[#allocation9 + $0x518] sm:$0xff]
        %v1366 = vld [vmem:[#allocation9 + $0x520] sm:$0xff]
        %v1367 = vld [vmem:[#allocation9 + $0x528] sm:$0xff]
        %v1368 = vld [vmem:[#allocation9 + $0x530] sm:$0xff]
        %v1369 = vld [vmem:[#allocation9 + $0x538] sm:$0xff]
        %v1370 = vld [vmem:[#allocation9 + $0x540] sm:$0xff]
        %v1371 = vld [vmem:[#allocation9 + $0x548] sm:$0xff]
        %v1372 = vld [vmem:[#allocation9 + $0x550] sm:$0xff]
        %v1373 = vld [vmem:[#allocation9 + $0x558] sm:$0xff]
        %v1374 = vld [vmem:[#allocation9 + $0x560] sm:$0xff]
        %v1375 = vld [vmem:[#allocation9 + $0x568] sm:$0xff]
        %v1376 = vld [vmem:[#allocation9 + $0x570] sm:$0xff]
        %v1377 = vld [vmem:[#allocation9 + $0x578] sm:$0xff]
        %v1378 = vld [vmem:[#allocation9 + $0x580] sm:$0xff]
        %v1379 = vld [vmem:[#allocation9 + $0x588] sm:$0xff]
        %v1380 = vld [vmem:[#allocation9 + $0x590] sm:$0xff]
        %v1381 = vld [vmem:[#allocation9 + $0x598] sm:$0xff]
        %v1382 = vld [vmem:[#allocation9 + $0x5a0] sm:$0xff]
        %v1383 = vld [vmem:[#allocation9 + $0x5a8] sm:$0xff]
        %v1384 = vld [vmem:[#allocation9 + $0x5b0] sm:$0xff]
        %v1385 = vld [vmem:[#allocation9 + $0x5b8] sm:$0xff]
        %v1386 = vld [vmem:[#allocation9 + $0x5c0] sm:$0xff]
        %v1387 = vld [vmem:[#allocation9 + $0x5c8] sm:$0xff]
        %v1388 = vld [vmem:[#allocation9 + $0x5d0] sm:$0xff]
        %v1389 = vld [vmem:[#allocation9 + $0x5d8] sm:$0xff]
        %v1390 = vld [vmem:[#allocation9 + $0x5e0] sm:$0xff]
        %v1391 = vld [vmem:[#allocation9 + $0x5e8] sm:$0xff]
        %v1392 = vld [vmem:[#allocation9 + $0x5f0] sm:$0xff]
        %v1393 = vld [vmem:[#allocation9 + $0x5f8] sm:$0xff]
        %v1394 = vld [vmem:[%s943] sm:$0xff]
        %v1395 = vld [vmem:[%s943 + $0x8] sm:$0xff]
        %v1396 = vld [vmem:[%s943 + $0x10] sm:$0xff]
        %v1397 = vld [vmem:[%s943 + $0x18] sm:$0xff]
        %v1398 = vld [vmem:[%s943 + $0x20] sm:$0xff]
        %v1399 = vld [vmem:[%s943 + $0x28] sm:$0xff]
        %v1400 = vld [vmem:[%s943 + $0x30] sm:$0xff]
        %v1401 = vld [vmem:[%s943 + $0x38] sm:$0xff]
        %v1402 = vld [vmem:[%s943 + $0x40] sm:$0xff]
        %v1403 = vld [vmem:[%s943 + $0x48] sm:$0xff]
        %v1404 = vld [vmem:[%s943 + $0x50] sm:$0xff]
        %v1405 = vld [vmem:[%s943 + $0x58] sm:$0xff]
        %v1406 = vld [vmem:[%s943 + $0x60] sm:$0xff]
        %v1407 = vld [vmem:[%s943 + $0x68] sm:$0xff]
        %v1408 = vld [vmem:[%s943 + $0x70] sm:$0xff]
        %v1409 = vld [vmem:[%s943 + $0x78] sm:$0xff]
        %v1410 = vld [vmem:[%s943 + $0x80] sm:$0xff]
        %v1411 = vld [vmem:[%s943 + $0x88] sm:$0xff]
        %v1412 = vld [vmem:[%s943 + $0x90] sm:$0xff]
        %v1413 = vld [vmem:[%s943 + $0x98] sm:$0xff]
        %v1414 = vld [vmem:[%s943 + $0xa0] sm:$0xff]
        %v1415 = vld [vmem:[%s943 + $0xa8] sm:$0xff]
        %v1416 = vld [vmem:[%s943 + $0xb0] sm:$0xff]
        %v1417 = vld [vmem:[%s943 + $0xb8] sm:$0xff]
        %s1418 = scalar_lea.vmem [#allocation9], 1536
        %v1419 = vld [vmem:[%s1418] sm:$0xff]
        %v1420 = vld [vmem:[%s1418 + $0x8] sm:$0xff]
        %v1421 = vld [vmem:[%s1418 + $0x10] sm:$0xff]
        %v1422 = vld [vmem:[%s1418 + $0x18] sm:$0xff]
        %v1423 = vld [vmem:[%s1418 + $0x20] sm:$0xff]
        %v1424 = vld [vmem:[%s1418 + $0x28] sm:$0xff]
        %v1425 = vld [vmem:[%s1418 + $0x30] sm:$0xff]
        %v1426 = vld [vmem:[%s1418 + $0x38] sm:$0xff]
        %v1427 = vld [vmem:[%s1418 + $0x40] sm:$0xff]
        %v1428 = vld [vmem:[%s1418 + $0x48] sm:$0xff]
        %v1429 = vld [vmem:[%s1418 + $0x50] sm:$0xff]
        %v1430 = vld [vmem:[%s1418 + $0x58] sm:$0xff]
        %v1431 = vld [vmem:[%s1418 + $0x60] sm:$0xff]
        %v1432 = vld [vmem:[%s1418 + $0x68] sm:$0xff]
        %v1433 = vld [vmem:[%s1418 + $0x70] sm:$0xff]
        %v1434 = vld [vmem:[%s1418 + $0x78] sm:$0xff]
        %v1435 = vld [vmem:[%s1418 + $0x80] sm:$0xff]
        %v1436 = vld [vmem:[%s1418 + $0x88] sm:$0xff]
        %v1437 = vld [vmem:[%s1418 + $0x90] sm:$0xff]
        %v1438 = vld [vmem:[%s1418 + $0x98] sm:$0xff]
        %v1439 = vld [vmem:[%s1418 + $0xa0] sm:$0xff]
        %v1440 = vld [vmem:[%s1418 + $0xa8] sm:$0xff]
        %v1441 = vld [vmem:[%s1418 + $0xb0] sm:$0xff]
        %v1442 = vld [vmem:[%s1418 + $0xb8] sm:$0xff]
        %v1443 = vld [vmem:[%s1418 + $0xc0] sm:$0xff]
        %v1444 = vld [vmem:[%s1418 + $0xc8] sm:$0xff]
        %v1445 = vld [vmem:[%s1418 + $0xd0] sm:$0xff]
        %v1446 = vld [vmem:[%s1418 + $0xd8] sm:$0xff]
        %v1447 = vld [vmem:[%s1418 + $0xe0] sm:$0xff]
        %v1448 = vld [vmem:[%s1418 + $0xe8] sm:$0xff]
        %v1449 = vld [vmem:[%s1418 + $0xf0] sm:$0xff]
        %v1450 = vld [vmem:[%s1418 + $0xf8] sm:$0xff]
        %v1451 = vld [vmem:[%s1418 + $0x100] sm:$0xff]
        %v1452 = vld [vmem:[%s1418 + $0x108] sm:$0xff]
        %v1453 = vld [vmem:[%s1418 + $0x110] sm:$0xff]
        %v1454 = vld [vmem:[%s1418 + $0x118] sm:$0xff]
        %v1455 = vld [vmem:[%s1418 + $0x120] sm:$0xff]
        %v1456 = vld [vmem:[%s1418 + $0x128] sm:$0xff]
        %v1457 = vld [vmem:[%s1418 + $0x130] sm:$0xff]
        %v1458 = vld [vmem:[%s1418 + $0x138] sm:$0xff]
        %v1459 = vld [vmem:[%s1418 + $0x140] sm:$0xff]
        %v1460 = vld [vmem:[%s1418 + $0x148] sm:$0xff]
        %v1461 = vld [vmem:[%s1418 + $0x150] sm:$0xff]
        %v1462 = vld [vmem:[%s1418 + $0x158] sm:$0xff]
        %v1463 = vld [vmem:[%s1418 + $0x160] sm:$0xff]
        %v1464 = vld [vmem:[%s1418 + $0x168] sm:$0xff]
        %v1465 = vld [vmem:[%s1418 + $0x170] sm:$0xff]
        %v1466 = vld [vmem:[%s1418 + $0x178] sm:$0xff]
        %v1467 = vld [vmem:[%s1418 + $0x180] sm:$0xff]
        %v1468 = vld [vmem:[%s1418 + $0x188] sm:$0xff]
        %v1469 = vld [vmem:[%s1418 + $0x190] sm:$0xff]
        %v1470 = vld [vmem:[%s1418 + $0x198] sm:$0xff]
        %v1471 = vld [vmem:[%s1418 + $0x1a0] sm:$0xff]
        %v1472 = vld [vmem:[%s1418 + $0x1a8] sm:$0xff]
        %v1473 = vld [vmem:[%s1418 + $0x1b0] sm:$0xff]
        %v1474 = vld [vmem:[%s1418 + $0x1b8] sm:$0xff]
        %v1475 = vld [vmem:[%s1418 + $0x1c0] sm:$0xff]
        %v1476 = vld [vmem:[%s1418 + $0x1c8] sm:$0xff]
        %v1477 = vld [vmem:[%s1418 + $0x1d0] sm:$0xff]
        %v1478 = vld [vmem:[%s1418 + $0x1d8] sm:$0xff]
        %v1479 = vld [vmem:[%s1418 + $0x1e0] sm:$0xff]
        %v1480 = vld [vmem:[%s1418 + $0x1e8] sm:$0xff]
        %v1481 = vld [vmem:[%s1418 + $0x1f0] sm:$0xff]
        %v1482 = vld [vmem:[%s1418 + $0x1f8] sm:$0xff]
        %v1483 = vld [vmem:[%s1418 + $0x200] sm:$0xff]
        %v1484 = vld [vmem:[%s1418 + $0x208] sm:$0xff]
        %v1485 = vld [vmem:[%s1418 + $0x210] sm:$0xff]
        %v1486 = vld [vmem:[%s1418 + $0x218] sm:$0xff]
        %v1487 = vld [vmem:[%s1418 + $0x220] sm:$0xff]
        %v1488 = vld [vmem:[%s1418 + $0x228] sm:$0xff]
        %v1489 = vld [vmem:[%s1418 + $0x230] sm:$0xff]
        %v1490 = vld [vmem:[%s1418 + $0x238] sm:$0xff]
        %v1491 = vld [vmem:[%s1418 + $0x240] sm:$0xff]
        %v1492 = vld [vmem:[%s1418 + $0x248] sm:$0xff]
        %v1493 = vld [vmem:[%s1418 + $0x250] sm:$0xff]
        %v1494 = vld [vmem:[%s1418 + $0x258] sm:$0xff]
        %v1495 = vld [vmem:[%s1418 + $0x260] sm:$0xff]
        %v1496 = vld [vmem:[%s1418 + $0x268] sm:$0xff]
        %v1497 = vld [vmem:[%s1418 + $0x270] sm:$0xff]
        %v1498 = vld [vmem:[%s1418 + $0x278] sm:$0xff]
        %v1499 = vld [vmem:[%s1418 + $0x280] sm:$0xff]
        %v1500 = vld [vmem:[%s1418 + $0x288] sm:$0xff]
        %v1501 = vld [vmem:[%s1418 + $0x290] sm:$0xff]
        %v1502 = vld [vmem:[%s1418 + $0x298] sm:$0xff]
        %v1503 = vld [vmem:[%s1418 + $0x2a0] sm:$0xff]
        %v1504 = vld [vmem:[%s1418 + $0x2a8] sm:$0xff]
        %v1505 = vld [vmem:[%s1418 + $0x2b0] sm:$0xff]
        %v1506 = vld [vmem:[%s1418 + $0x2b8] sm:$0xff]
        %v1507 = vld [vmem:[%s1418 + $0x2c0] sm:$0xff]
        %v1508 = vld [vmem:[%s1418 + $0x2c8] sm:$0xff]
        %v1509 = vld [vmem:[%s1418 + $0x2d0] sm:$0xff]
        %v1510 = vld [vmem:[%s1418 + $0x2d8] sm:$0xff]
        %v1511 = vld [vmem:[%s1418 + $0x2e0] sm:$0xff]
        %v1512 = vld [vmem:[%s1418 + $0x2e8] sm:$0xff]
        %v1513 = vld [vmem:[%s1418 + $0x2f0] sm:$0xff]
        %v1514 = vld [vmem:[%s1418 + $0x2f8] sm:$0xff]
        %v1515 = vld [vmem:[%s1418 + $0x300] sm:$0xff]
        %v1516 = vld [vmem:[%s1418 + $0x308] sm:$0xff]
        %v1517 = vld [vmem:[%s1418 + $0x310] sm:$0xff]
        %v1518 = vld [vmem:[%s1418 + $0x318] sm:$0xff]
        %v1519 = vld [vmem:[%s1418 + $0x320] sm:$0xff]
        %v1520 = vld [vmem:[%s1418 + $0x328] sm:$0xff]
        %v1521 = vld [vmem:[%s1418 + $0x330] sm:$0xff]
        %v1522 = vld [vmem:[%s1418 + $0x338] sm:$0xff]
        %v1523 = vld [vmem:[%s1418 + $0x340] sm:$0xff]
        %v1524 = vld [vmem:[%s1418 + $0x348] sm:$0xff]
        %v1525 = vld [vmem:[%s1418 + $0x350] sm:$0xff]
        %v1526 = vld [vmem:[%s1418 + $0x358] sm:$0xff]
        %v1527 = vld [vmem:[%s1418 + $0x360] sm:$0xff]
        %v1528 = vld [vmem:[%s1418 + $0x368] sm:$0xff]
        %v1529 = vld [vmem:[%s1418 + $0x370] sm:$0xff]
        %v1530 = vld [vmem:[%s1418 + $0x378] sm:$0xff]
        %v1531 = vld [vmem:[%s1418 + $0x380] sm:$0xff]
        %v1532 = vld [vmem:[%s1418 + $0x388] sm:$0xff]
        %v1533 = vld [vmem:[%s1418 + $0x390] sm:$0xff]
        %v1534 = vld [vmem:[%s1418 + $0x398] sm:$0xff]
        %v1535 = vld [vmem:[%s1418 + $0x3a0] sm:$0xff]
        %v1536 = vld [vmem:[%s1418 + $0x3a8] sm:$0xff]
        %v1537 = vld [vmem:[%s1418 + $0x3b0] sm:$0xff]
        %v1538 = vld [vmem:[%s1418 + $0x3b8] sm:$0xff]
        %v1539 = vld [vmem:[%s1418 + $0x3c0] sm:$0xff]
        %v1540 = vld [vmem:[%s1418 + $0x3c8] sm:$0xff]
        %v1541 = vld [vmem:[%s1418 + $0x3d0] sm:$0xff]
        %v1542 = vld [vmem:[%s1418 + $0x3d8] sm:$0xff]
        %v1543 = vld [vmem:[%s1418 + $0x3e0] sm:$0xff]
        %v1544 = vld [vmem:[%s1418 + $0x3e8] sm:$0xff]
        %v1545 = vld [vmem:[%s1418 + $0x3f0] sm:$0xff]
        %v1546 = vld [vmem:[%s1418 + $0x3f8] sm:$0xff]
        %v1547 = vld [vmem:[%s1418 + $0x400] sm:$0xff]
        %v1548 = vld [vmem:[%s1418 + $0x408] sm:$0xff]
        %v1549 = vld [vmem:[%s1418 + $0x410] sm:$0xff]
        %v1550 = vld [vmem:[%s1418 + $0x418] sm:$0xff]
        %v1551 = vld [vmem:[%s1418 + $0x420] sm:$0xff]
        %v1552 = vld [vmem:[%s1418 + $0x428] sm:$0xff]
        %v1553 = vld [vmem:[%s1418 + $0x430] sm:$0xff]
        %v1554 = vld [vmem:[%s1418 + $0x438] sm:$0xff]
        %v1555 = vld [vmem:[%s1418 + $0x440] sm:$0xff]
        %v1556 = vld [vmem:[%s1418 + $0x448] sm:$0xff]
        %v1557 = vld [vmem:[%s1418 + $0x450] sm:$0xff]
        %v1558 = vld [vmem:[%s1418 + $0x458] sm:$0xff]
        %v1559 = vld [vmem:[%s1418 + $0x460] sm:$0xff]
        %v1560 = vld [vmem:[%s1418 + $0x468] sm:$0xff]
        %v1561 = vld [vmem:[%s1418 + $0x470] sm:$0xff]
        %v1562 = vld [vmem:[%s1418 + $0x478] sm:$0xff]
        %v1563 = vld [vmem:[%s1418 + $0x480] sm:$0xff]
        %v1564 = vld [vmem:[%s1418 + $0x488] sm:$0xff]
        %v1565 = vld [vmem:[%s1418 + $0x490] sm:$0xff]
        %v1566 = vld [vmem:[%s1418 + $0x498] sm:$0xff]
        %v1567 = vld [vmem:[%s1418 + $0x4a0] sm:$0xff]
        %v1568 = vld [vmem:[%s1418 + $0x4a8] sm:$0xff]
        %v1569 = vld [vmem:[%s1418 + $0x4b0] sm:$0xff]
        %v1570 = vld [vmem:[%s1418 + $0x4b8] sm:$0xff]
        %v1571 = vld [vmem:[%s1418 + $0x4c0] sm:$0xff]
        %v1572 = vld [vmem:[%s1418 + $0x4c8] sm:$0xff]
        %v1573 = vld [vmem:[%s1418 + $0x4d0] sm:$0xff]
        %v1574 = vld [vmem:[%s1418 + $0x4d8] sm:$0xff]
        %v1575 = vld [vmem:[%s1418 + $0x4e0] sm:$0xff]
        %v1576 = vld [vmem:[%s1418 + $0x4e8] sm:$0xff]
        %v1577 = vld [vmem:[%s1418 + $0x4f0] sm:$0xff]
        %v1578 = vld [vmem:[%s1418 + $0x4f8] sm:$0xff]
        %v1579 = vld [vmem:[%s1418 + $0x500] sm:$0xff]
        %v1580 = vld [vmem:[%s1418 + $0x508] sm:$0xff]
        %v1581 = vld [vmem:[%s1418 + $0x510] sm:$0xff]
        %v1582 = vld [vmem:[%s1418 + $0x518] sm:$0xff]
        %v1583 = vld [vmem:[%s1418 + $0x520] sm:$0xff]
        %v1584 = vld [vmem:[%s1418 + $0x528] sm:$0xff]
        %v1585 = vld [vmem:[%s1418 + $0x530] sm:$0xff]
        %v1586 = vld [vmem:[%s1418 + $0x538] sm:$0xff]
        %v1587 = vld [vmem:[%s1418 + $0x540] sm:$0xff]
        %v1588 = vld [vmem:[%s1418 + $0x548] sm:$0xff]
        %v1589 = vld [vmem:[%s1418 + $0x550] sm:$0xff]
        %v1590 = vld [vmem:[%s1418 + $0x558] sm:$0xff]
        %v1591 = vld [vmem:[%s1418 + $0x560] sm:$0xff]
        %v1592 = vld [vmem:[%s1418 + $0x568] sm:$0xff]
        %v1593 = vld [vmem:[%s1418 + $0x570] sm:$0xff]
        %v1594 = vld [vmem:[%s1418 + $0x578] sm:$0xff]
        %v1595 = vld [vmem:[%s1418 + $0x580] sm:$0xff]
        %v1596 = vld [vmem:[%s1418 + $0x588] sm:$0xff]
        %v1597 = vld [vmem:[%s1418 + $0x590] sm:$0xff]
        %v1598 = vld [vmem:[%s1418 + $0x598] sm:$0xff]
        %v1599 = vld [vmem:[%s1418 + $0x5a0] sm:$0xff]
        %v1600 = vld [vmem:[%s1418 + $0x5a8] sm:$0xff]
        %v1601 = vld [vmem:[%s1418 + $0x5b0] sm:$0xff]
        %v1602 = vld [vmem:[%s1418 + $0x5b8] sm:$0xff]
        %v1603 = vld [vmem:[%s1418 + $0x5c0] sm:$0xff]
        %v1604 = vld [vmem:[%s1418 + $0x5c8] sm:$0xff]
        %v1605 = vld [vmem:[%s1418 + $0x5d0] sm:$0xff]
        %v1606 = vld [vmem:[%s1418 + $0x5d8] sm:$0xff]
        %v1607 = vld [vmem:[%s1418 + $0x5e0] sm:$0xff]
        %v1608 = vld [vmem:[%s1418 + $0x5e8] sm:$0xff]
        %v1609 = vld [vmem:[%s1418 + $0x5f0] sm:$0xff]
        %v1610 = vld [vmem:[%s1418 + $0x5f8] sm:$0xff]
        %v1635 = vunpack.c.l.b16 %v1394
        %v1636 = vunpack.c.h.b16 %v1394
        %v1637 = vunpack.c.l.b16 %v1395
        %v1638 = vunpack.c.h.b16 %v1395
        %v1639 = vunpack.c.l.b16 %v1396
        %v1640 = vunpack.c.h.b16 %v1396
        %v1641 = vunpack.c.l.b16 %v1397
        %v1642 = vunpack.c.h.b16 %v1397
        %v1643 = vunpack.c.l.b16 %v1398
        %v1644 = vunpack.c.h.b16 %v1398
        %v1645 = vunpack.c.l.b16 %v1399
        %v1646 = vunpack.c.h.b16 %v1399
        %v1647 = vunpack.c.l.b16 %v1400
        %v1648 = vunpack.c.h.b16 %v1400
        %v1649 = vunpack.c.l.b16 %v1401
        %v1650 = vunpack.c.h.b16 %v1401
        %v1651 = vunpack.c.l.b16 %v1402
        %v1652 = vunpack.c.h.b16 %v1402
        %v1653 = vunpack.c.l.b16 %v1403
        %v1654 = vunpack.c.h.b16 %v1403
        %v1655 = vunpack.c.l.b16 %v1404
        %v1656 = vunpack.c.h.b16 %v1404
        %v1657 = vunpack.c.l.b16 %v1405
        %v1658 = vunpack.c.h.b16 %v1405
        %v1659 = vunpack.c.l.b16 %v1406
        %v1660 = vunpack.c.h.b16 %v1406
        %v1661 = vunpack.c.l.b16 %v1407
        %v1662 = vunpack.c.h.b16 %v1407
        %v1663 = vunpack.c.l.b16 %v1408
        %v1664 = vunpack.c.h.b16 %v1408
        %v1665 = vunpack.c.l.b16 %v1409
        %v1666 = vunpack.c.h.b16 %v1409
        %v1667 = vunpack.c.l.b16 %v1410
        %v1668 = vunpack.c.h.b16 %v1410
        %v1669 = vunpack.c.l.b16 %v1411
        %v1670 = vunpack.c.h.b16 %v1411
        %v1671 = vunpack.c.l.b16 %v1412
        %v1672 = vunpack.c.h.b16 %v1412
        %v1673 = vunpack.c.l.b16 %v1413
        %v1674 = vunpack.c.h.b16 %v1413
        %v1675 = vunpack.c.l.b16 %v1414
        %v1676 = vunpack.c.h.b16 %v1414
        %v1677 = vunpack.c.l.b16 %v1415
        %v1678 = vunpack.c.h.b16 %v1415
        %v1679 = vunpack.c.l.b16 %v1416
        %v1680 = vunpack.c.h.b16 %v1416
        %v1681 = vunpack.c.l.b16 %v1417
        %v1682 = vunpack.c.h.b16 %v1417
        %v1683 = vpack.c.b16 %v1641, %v1635
        %v1684 = vpack.c.b16 %v1642, %v1636
        %v1685 = vpack.c.b16 %v1643, %v1637
        %v1686 = vpack.c.b16 %v1644, %v1638
        %v1687 = vpack.c.b16 %v1645, %v1639
        %v1688 = vpack.c.b16 %v1646, %v1640
        %v1689 = vpack.c.b16 %v1653, %v1647
        %v1690 = vpack.c.b16 %v1654, %v1648
        %v1691 = vpack.c.b16 %v1655, %v1649
        %v1692 = vpack.c.b16 %v1656, %v1650
        %v1693 = vpack.c.b16 %v1657, %v1651
        %v1694 = vpack.c.b16 %v1658, %v1652
        %v1695 = vpack.c.b16 %v1665, %v1659
        %v1696 = vpack.c.b16 %v1666, %v1660
        %v1697 = vpack.c.b16 %v1667, %v1661
        %v1698 = vpack.c.b16 %v1668, %v1662
        %v1699 = vpack.c.b16 %v1669, %v1663
        %v1700 = vpack.c.b16 %v1670, %v1664
        %v1701 = vpack.c.b16 %v1677, %v1671
        %v1702 = vpack.c.b16 %v1678, %v1672
        %v1703 = vpack.c.b16 %v1679, %v1673
        %v1704 = vpack.c.b16 %v1680, %v1674
        %v1705 = vpack.c.b16 %v1681, %v1675
        %v1706 = vpack.c.b16 %v1682, %v1676
        %v1923 = vunpack.c.l.b16 %v1419
        %v1924 = vunpack.c.h.b16 %v1419
        %v1925 = vunpack.c.l.b16 %v1420
        %v1926 = vunpack.c.h.b16 %v1420
        %v1927 = vunpack.c.l.b16 %v1421
        %v1928 = vunpack.c.h.b16 %v1421
        %v1929 = vunpack.c.l.b16 %v1422
        %v1930 = vunpack.c.h.b16 %v1422
        %v1931 = vunpack.c.l.b16 %v1423
        %v1932 = vunpack.c.h.b16 %v1423
        %v1933 = vunpack.c.l.b16 %v1424
        %v1934 = vunpack.c.h.b16 %v1424
        %v1935 = vunpack.c.l.b16 %v1425
        %v1936 = vunpack.c.h.b16 %v1425
        %v1937 = vunpack.c.l.b16 %v1426
        %v1938 = vunpack.c.h.b16 %v1426
        %v1939 = vunpack.c.l.b16 %v1427
        %v1940 = vunpack.c.h.b16 %v1427
        %v1941 = vunpack.c.l.b16 %v1428
        %v1942 = vunpack.c.h.b16 %v1428
        %v1943 = vunpack.c.l.b16 %v1429
        %v1944 = vunpack.c.h.b16 %v1429
        %v1945 = vunpack.c.l.b16 %v1430
        %v1946 = vunpack.c.h.b16 %v1430
        %v1947 = vunpack.c.l.b16 %v1431
        %v1948 = vunpack.c.h.b16 %v1431
        %v1949 = vunpack.c.l.b16 %v1432
        %v1950 = vunpack.c.h.b16 %v1432
        %v1951 = vunpack.c.l.b16 %v1433
        %v1952 = vunpack.c.h.b16 %v1433
        %v1953 = vunpack.c.l.b16 %v1434
        %v1954 = vunpack.c.h.b16 %v1434
        %v1955 = vunpack.c.l.b16 %v1435
        %v1956 = vunpack.c.h.b16 %v1435
        %v1957 = vunpack.c.l.b16 %v1436
        %v1958 = vunpack.c.h.b16 %v1436
        %v1959 = vunpack.c.l.b16 %v1437
        %v1960 = vunpack.c.h.b16 %v1437
        %v1961 = vunpack.c.l.b16 %v1438
        %v1962 = vunpack.c.h.b16 %v1438
        %v1963 = vunpack.c.l.b16 %v1439
        %v1964 = vunpack.c.h.b16 %v1439
        %v1965 = vunpack.c.l.b16 %v1440
        %v1966 = vunpack.c.h.b16 %v1440
        %v1967 = vunpack.c.l.b16 %v1441
        %v1968 = vunpack.c.h.b16 %v1441
        %v1969 = vunpack.c.l.b16 %v1442
        %v1970 = vunpack.c.h.b16 %v1442
        %v1971 = vunpack.c.l.b16 %v1443
        %v1972 = vunpack.c.h.b16 %v1443
        %v1973 = vunpack.c.l.b16 %v1444
        %v1974 = vunpack.c.h.b16 %v1444
        %v1975 = vunpack.c.l.b16 %v1445
        %v1976 = vunpack.c.h.b16 %v1445
        %v1977 = vunpack.c.l.b16 %v1446
        %v1978 = vunpack.c.h.b16 %v1446
        %v1979 = vunpack.c.l.b16 %v1447
        %v1980 = vunpack.c.h.b16 %v1447
        %v1981 = vunpack.c.l.b16 %v1448
        %v1982 = vunpack.c.h.b16 %v1448
        %v1983 = vunpack.c.l.b16 %v1449
        %v1984 = vunpack.c.h.b16 %v1449
        %v1985 = vunpack.c.l.b16 %v1450
        %v1986 = vunpack.c.h.b16 %v1450
        %v1987 = vunpack.c.l.b16 %v1451
        %v1988 = vunpack.c.h.b16 %v1451
        %v1989 = vunpack.c.l.b16 %v1452
        %v1990 = vunpack.c.h.b16 %v1452
        %v1991 = vunpack.c.l.b16 %v1453
        %v1992 = vunpack.c.h.b16 %v1453
        %v1993 = vunpack.c.l.b16 %v1454
        %v1994 = vunpack.c.h.b16 %v1454
        %v1995 = vunpack.c.l.b16 %v1455
        %v1996 = vunpack.c.h.b16 %v1455
        %v1997 = vunpack.c.l.b16 %v1456
        %v1998 = vunpack.c.h.b16 %v1456
        %v1999 = vunpack.c.l.b16 %v1457
        %v2000 = vunpack.c.h.b16 %v1457
        %v2001 = vunpack.c.l.b16 %v1458
        %v2002 = vunpack.c.h.b16 %v1458
        %v2003 = vunpack.c.l.b16 %v1459
        %v2004 = vunpack.c.h.b16 %v1459
        %v2005 = vunpack.c.l.b16 %v1460
        %v2006 = vunpack.c.h.b16 %v1460
        %v2007 = vunpack.c.l.b16 %v1461
        %v2008 = vunpack.c.h.b16 %v1461
        %v2009 = vunpack.c.l.b16 %v1462
        %v2010 = vunpack.c.h.b16 %v1462
        %v2011 = vunpack.c.l.b16 %v1463
        %v2012 = vunpack.c.h.b16 %v1463
        %v2013 = vunpack.c.l.b16 %v1464
        %v2014 = vunpack.c.h.b16 %v1464
        %v2015 = vunpack.c.l.b16 %v1465
        %v2016 = vunpack.c.h.b16 %v1465
        %v2017 = vunpack.c.l.b16 %v1466
        %v2018 = vunpack.c.h.b16 %v1466
        %v2019 = vunpack.c.l.b16 %v1467
        %v2020 = vunpack.c.h.b16 %v1467
        %v2021 = vunpack.c.l.b16 %v1468
        %v2022 = vunpack.c.h.b16 %v1468
        %v2023 = vunpack.c.l.b16 %v1469
        %v2024 = vunpack.c.h.b16 %v1469
        %v2025 = vunpack.c.l.b16 %v1470
        %v2026 = vunpack.c.h.b16 %v1470
        %v2027 = vunpack.c.l.b16 %v1471
        %v2028 = vunpack.c.h.b16 %v1471
        %v2029 = vunpack.c.l.b16 %v1472
        %v2030 = vunpack.c.h.b16 %v1472
        %v2031 = vunpack.c.l.b16 %v1473
        %v2032 = vunpack.c.h.b16 %v1473
        %v2033 = vunpack.c.l.b16 %v1474
        %v2034 = vunpack.c.h.b16 %v1474
        %v2035 = vunpack.c.l.b16 %v1475
        %v2036 = vunpack.c.h.b16 %v1475
        %v2037 = vunpack.c.l.b16 %v1476
        %v2038 = vunpack.c.h.b16 %v1476
        %v2039 = vunpack.c.l.b16 %v1477
        %v2040 = vunpack.c.h.b16 %v1477
        %v2041 = vunpack.c.l.b16 %v1478
        %v2042 = vunpack.c.h.b16 %v1478
        %v2043 = vunpack.c.l.b16 %v1479
        %v2044 = vunpack.c.h.b16 %v1479
        %v2045 = vunpack.c.l.b16 %v1480
        %v2046 = vunpack.c.h.b16 %v1480
        %v2047 = vunpack.c.l.b16 %v1481
        %v2048 = vunpack.c.h.b16 %v1481
        %v2049 = vunpack.c.l.b16 %v1482
        %v2050 = vunpack.c.h.b16 %v1482
        %v2051 = vunpack.c.l.b16 %v1483
        %v2052 = vunpack.c.h.b16 %v1483
        %v2053 = vunpack.c.l.b16 %v1484
        %v2054 = vunpack.c.h.b16 %v1484
        %v2055 = vunpack.c.l.b16 %v1485
        %v2056 = vunpack.c.h.b16 %v1485
        %v2057 = vunpack.c.l.b16 %v1486
        %v2058 = vunpack.c.h.b16 %v1486
        %v2059 = vunpack.c.l.b16 %v1487
        %v2060 = vunpack.c.h.b16 %v1487
        %v2061 = vunpack.c.l.b16 %v1488
        %v2062 = vunpack.c.h.b16 %v1488
        %v2063 = vunpack.c.l.b16 %v1489
        %v2064 = vunpack.c.h.b16 %v1489
        %v2065 = vunpack.c.l.b16 %v1490
        %v2066 = vunpack.c.h.b16 %v1490
        %v2067 = vunpack.c.l.b16 %v1491
        %v2068 = vunpack.c.h.b16 %v1491
        %v2069 = vunpack.c.l.b16 %v1492
        %v2070 = vunpack.c.h.b16 %v1492
        %v2071 = vunpack.c.l.b16 %v1493
        %v2072 = vunpack.c.h.b16 %v1493
        %v2073 = vunpack.c.l.b16 %v1494
        %v2074 = vunpack.c.h.b16 %v1494
        %v2075 = vunpack.c.l.b16 %v1495
        %v2076 = vunpack.c.h.b16 %v1495
        %v2077 = vunpack.c.l.b16 %v1496
        %v2078 = vunpack.c.h.b16 %v1496
        %v2079 = vunpack.c.l.b16 %v1497
        %v2080 = vunpack.c.h.b16 %v1497
        %v2081 = vunpack.c.l.b16 %v1498
        %v2082 = vunpack.c.h.b16 %v1498
        %v2083 = vunpack.c.l.b16 %v1499
        %v2084 = vunpack.c.h.b16 %v1499
        %v2085 = vunpack.c.l.b16 %v1500
        %v2086 = vunpack.c.h.b16 %v1500
        %v2087 = vunpack.c.l.b16 %v1501
        %v2088 = vunpack.c.h.b16 %v1501
        %v2089 = vunpack.c.l.b16 %v1502
        %v2090 = vunpack.c.h.b16 %v1502
        %v2091 = vunpack.c.l.b16 %v1503
        %v2092 = vunpack.c.h.b16 %v1503
        %v2093 = vunpack.c.l.b16 %v1504
        %v2094 = vunpack.c.h.b16 %v1504
        %v2095 = vunpack.c.l.b16 %v1505
        %v2096 = vunpack.c.h.b16 %v1505
        %v2097 = vunpack.c.l.b16 %v1506
        %v2098 = vunpack.c.h.b16 %v1506
        %v2099 = vunpack.c.l.b16 %v1507
        %v2100 = vunpack.c.h.b16 %v1507
        %v2101 = vunpack.c.l.b16 %v1508
        %v2102 = vunpack.c.h.b16 %v1508
        %v2103 = vunpack.c.l.b16 %v1509
        %v2104 = vunpack.c.h.b16 %v1509
        %v2105 = vunpack.c.l.b16 %v1510
        %v2106 = vunpack.c.h.b16 %v1510
        %v2107 = vunpack.c.l.b16 %v1511
        %v2108 = vunpack.c.h.b16 %v1511
        %v2109 = vunpack.c.l.b16 %v1512
        %v2110 = vunpack.c.h.b16 %v1512
        %v2111 = vunpack.c.l.b16 %v1513
        %v2112 = vunpack.c.h.b16 %v1513
        %v2113 = vunpack.c.l.b16 %v1514
        %v2114 = vunpack.c.h.b16 %v1514
        %v2115 = vunpack.c.l.b16 %v1515
        %v2116 = vunpack.c.h.b16 %v1515
        %v2117 = vunpack.c.l.b16 %v1516
        %v2118 = vunpack.c.h.b16 %v1516
        %v2119 = vunpack.c.l.b16 %v1517
        %v2120 = vunpack.c.h.b16 %v1517
        %v2121 = vunpack.c.l.b16 %v1518
        %v2122 = vunpack.c.h.b16 %v1518
        %v2123 = vunpack.c.l.b16 %v1519
        %v2124 = vunpack.c.h.b16 %v1519
        %v2125 = vunpack.c.l.b16 %v1520
        %v2126 = vunpack.c.h.b16 %v1520
        %v2127 = vunpack.c.l.b16 %v1521
        %v2128 = vunpack.c.h.b16 %v1521
        %v2129 = vunpack.c.l.b16 %v1522
        %v2130 = vunpack.c.h.b16 %v1522
        %v2131 = vunpack.c.l.b16 %v1523
        %v2132 = vunpack.c.h.b16 %v1523
        %v2133 = vunpack.c.l.b16 %v1524
        %v2134 = vunpack.c.h.b16 %v1524
        %v2135 = vunpack.c.l.b16 %v1525
        %v2136 = vunpack.c.h.b16 %v1525
        %v2137 = vunpack.c.l.b16 %v1526
        %v2138 = vunpack.c.h.b16 %v1526
        %v2139 = vunpack.c.l.b16 %v1527
        %v2140 = vunpack.c.h.b16 %v1527
        %v2141 = vunpack.c.l.b16 %v1528
        %v2142 = vunpack.c.h.b16 %v1528
        %v2143 = vunpack.c.l.b16 %v1529
        %v2144 = vunpack.c.h.b16 %v1529
        %v2145 = vunpack.c.l.b16 %v1530
        %v2146 = vunpack.c.h.b16 %v1530
        %v2147 = vunpack.c.l.b16 %v1531
        %v2148 = vunpack.c.h.b16 %v1531
        %v2149 = vunpack.c.l.b16 %v1532
        %v2150 = vunpack.c.h.b16 %v1532
        %v2151 = vunpack.c.l.b16 %v1533
        %v2152 = vunpack.c.h.b16 %v1533
        %v2153 = vunpack.c.l.b16 %v1534
        %v2154 = vunpack.c.h.b16 %v1534
        %v2155 = vunpack.c.l.b16 %v1535
        %v2156 = vunpack.c.h.b16 %v1535
        %v2157 = vunpack.c.l.b16 %v1536
        %v2158 = vunpack.c.h.b16 %v1536
        %v2159 = vunpack.c.l.b16 %v1537
        %v2160 = vunpack.c.h.b16 %v1537
        %v2161 = vunpack.c.l.b16 %v1538
        %v2162 = vunpack.c.h.b16 %v1538
        %v2163 = vunpack.c.l.b16 %v1539
        %v2164 = vunpack.c.h.b16 %v1539
        %v2165 = vunpack.c.l.b16 %v1540
        %v2166 = vunpack.c.h.b16 %v1540
        %v2167 = vunpack.c.l.b16 %v1541
        %v2168 = vunpack.c.h.b16 %v1541
        %v2169 = vunpack.c.l.b16 %v1542
        %v2170 = vunpack.c.h.b16 %v1542
        %v2171 = vunpack.c.l.b16 %v1543
        %v2172 = vunpack.c.h.b16 %v1543
        %v2173 = vunpack.c.l.b16 %v1544
        %v2174 = vunpack.c.h.b16 %v1544
        %v2175 = vunpack.c.l.b16 %v1545
        %v2176 = vunpack.c.h.b16 %v1545
        %v2177 = vunpack.c.l.b16 %v1546
        %v2178 = vunpack.c.h.b16 %v1546
        %v2179 = vunpack.c.l.b16 %v1547
        %v2180 = vunpack.c.h.b16 %v1547
        %v2181 = vunpack.c.l.b16 %v1548
        %v2182 = vunpack.c.h.b16 %v1548
        %v2183 = vunpack.c.l.b16 %v1549
        %v2184 = vunpack.c.h.b16 %v1549
        %v2185 = vunpack.c.l.b16 %v1550
        %v2186 = vunpack.c.h.b16 %v1550
        %v2187 = vunpack.c.l.b16 %v1551
        %v2188 = vunpack.c.h.b16 %v1551
        %v2189 = vunpack.c.l.b16 %v1552
        %v2190 = vunpack.c.h.b16 %v1552
        %v2191 = vunpack.c.l.b16 %v1553
        %v2192 = vunpack.c.h.b16 %v1553
        %v2193 = vunpack.c.l.b16 %v1554
        %v2194 = vunpack.c.h.b16 %v1554
        %v2195 = vunpack.c.l.b16 %v1555
        %v2196 = vunpack.c.h.b16 %v1555
        %v2197 = vunpack.c.l.b16 %v1556
        %v2198 = vunpack.c.h.b16 %v1556
        %v2199 = vunpack.c.l.b16 %v1557
        %v2200 = vunpack.c.h.b16 %v1557
        %v2201 = vunpack.c.l.b16 %v1558
        %v2202 = vunpack.c.h.b16 %v1558
        %v2203 = vunpack.c.l.b16 %v1559
        %v2204 = vunpack.c.h.b16 %v1559
        %v2205 = vunpack.c.l.b16 %v1560
        %v2206 = vunpack.c.h.b16 %v1560
        %v2207 = vunpack.c.l.b16 %v1561
        %v2208 = vunpack.c.h.b16 %v1561
        %v2209 = vunpack.c.l.b16 %v1562
        %v2210 = vunpack.c.h.b16 %v1562
        %v2211 = vunpack.c.l.b16 %v1563
        %v2212 = vunpack.c.h.b16 %v1563
        %v2213 = vunpack.c.l.b16 %v1564
        %v2214 = vunpack.c.h.b16 %v1564
        %v2215 = vunpack.c.l.b16 %v1565
        %v2216 = vunpack.c.h.b16 %v1565
        %v2217 = vunpack.c.l.b16 %v1566
        %v2218 = vunpack.c.h.b16 %v1566
        %v2219 = vunpack.c.l.b16 %v1567
        %v2220 = vunpack.c.h.b16 %v1567
        %v2221 = vunpack.c.l.b16 %v1568
        %v2222 = vunpack.c.h.b16 %v1568
        %v2223 = vunpack.c.l.b16 %v1569
        %v2224 = vunpack.c.h.b16 %v1569
        %v2225 = vunpack.c.l.b16 %v1570
        %v2226 = vunpack.c.h.b16 %v1570
        %v2227 = vunpack.c.l.b16 %v1571
        %v2228 = vunpack.c.h.b16 %v1571
        %v2229 = vunpack.c.l.b16 %v1572
        %v2230 = vunpack.c.h.b16 %v1572
        %v2231 = vunpack.c.l.b16 %v1573
        %v2232 = vunpack.c.h.b16 %v1573
        %v2233 = vunpack.c.l.b16 %v1574
        %v2234 = vunpack.c.h.b16 %v1574
        %v2235 = vunpack.c.l.b16 %v1575
        %v2236 = vunpack.c.h.b16 %v1575
        %v2237 = vunpack.c.l.b16 %v1576
        %v2238 = vunpack.c.h.b16 %v1576
        %v2239 = vunpack.c.l.b16 %v1577
        %v2240 = vunpack.c.h.b16 %v1577
        %v2241 = vunpack.c.l.b16 %v1578
        %v2242 = vunpack.c.h.b16 %v1578
        %v2243 = vunpack.c.l.b16 %v1579
        %v2244 = vunpack.c.h.b16 %v1579
        %v2245 = vunpack.c.l.b16 %v1580
        %v2246 = vunpack.c.h.b16 %v1580
        %v2247 = vunpack.c.l.b16 %v1581
        %v2248 = vunpack.c.h.b16 %v1581
        %v2249 = vunpack.c.l.b16 %v1582
        %v2250 = vunpack.c.h.b16 %v1582
        %v2251 = vunpack.c.l.b16 %v1583
        %v2252 = vunpack.c.h.b16 %v1583
        %v2253 = vunpack.c.l.b16 %v1584
        %v2254 = vunpack.c.h.b16 %v1584
        %v2255 = vunpack.c.l.b16 %v1585
        %v2256 = vunpack.c.h.b16 %v1585
        %v2257 = vunpack.c.l.b16 %v1586
        %v2258 = vunpack.c.h.b16 %v1586
        %v2259 = vunpack.c.l.b16 %v1587
        %v2260 = vunpack.c.h.b16 %v1587
        %v2261 = vunpack.c.l.b16 %v1588
        %v2262 = vunpack.c.h.b16 %v1588
        %v2263 = vunpack.c.l.b16 %v1589
        %v2264 = vunpack.c.h.b16 %v1589
        %v2265 = vunpack.c.l.b16 %v1590
        %v2266 = vunpack.c.h.b16 %v1590
        %v2267 = vunpack.c.l.b16 %v1591
        %v2268 = vunpack.c.h.b16 %v1591
        %v2269 = vunpack.c.l.b16 %v1592
        %v2270 = vunpack.c.h.b16 %v1592
        %v2271 = vunpack.c.l.b16 %v1593
        %v2272 = vunpack.c.h.b16 %v1593
        %v2273 = vunpack.c.l.b16 %v1594
        %v2274 = vunpack.c.h.b16 %v1594
        %v2275 = vunpack.c.l.b16 %v1595
        %v2276 = vunpack.c.h.b16 %v1595
        %v2277 = vunpack.c.l.b16 %v1596
        %v2278 = vunpack.c.h.b16 %v1596
        %v2279 = vunpack.c.l.b16 %v1597
        %v2280 = vunpack.c.h.b16 %v1597
        %v2281 = vunpack.c.l.b16 %v1598
        %v2282 = vunpack.c.h.b16 %v1598
        %v2283 = vunpack.c.l.b16 %v1599
        %v2284 = vunpack.c.h.b16 %v1599
        %v2285 = vunpack.c.l.b16 %v1600
        %v2286 = vunpack.c.h.b16 %v1600
        %v2287 = vunpack.c.l.b16 %v1601
        %v2288 = vunpack.c.h.b16 %v1601
        %v2289 = vunpack.c.l.b16 %v1602
        %v2290 = vunpack.c.h.b16 %v1602
        %v2291 = vunpack.c.l.b16 %v1603
        %v2292 = vunpack.c.h.b16 %v1603
        %v2293 = vunpack.c.l.b16 %v1604
        %v2294 = vunpack.c.h.b16 %v1604
        %v2295 = vunpack.c.l.b16 %v1605
        %v2296 = vunpack.c.h.b16 %v1605
        %v2297 = vunpack.c.l.b16 %v1606
        %v2298 = vunpack.c.h.b16 %v1606
        %v2299 = vunpack.c.l.b16 %v1607
        %v2300 = vunpack.c.h.b16 %v1607
        %v2301 = vunpack.c.l.b16 %v1608
        %v2302 = vunpack.c.h.b16 %v1608
        %v2303 = vunpack.c.l.b16 %v1609
        %v2304 = vunpack.c.h.b16 %v1609
        %v2305 = vunpack.c.l.b16 %v1610
        %v2306 = vunpack.c.h.b16 %v1610
        %v2307 = vpack.c.b16 %v1927, %v1923
        %v2308 = vpack.c.b16 %v1928, %v1924
        %v2309 = vpack.c.b16 %v1929, %v1925
        %v2310 = vpack.c.b16 %v1930, %v1926
        %v2311 = vpack.c.b16 %v1935, %v1931
        %v2312 = vpack.c.b16 %v1936, %v1932
        %v2313 = vpack.c.b16 %v1937, %v1933
        %v2314 = vpack.c.b16 %v1938, %v1934
        %v2315 = vpack.c.b16 %v1943, %v1939
        %v2316 = vpack.c.b16 %v1944, %v1940
        %v2317 = vpack.c.b16 %v1945, %v1941
        %v2318 = vpack.c.b16 %v1946, %v1942
        %v2319 = vpack.c.b16 %v1951, %v1947
        %v2320 = vpack.c.b16 %v1952, %v1948
        %v2321 = vpack.c.b16 %v1953, %v1949
        %v2322 = vpack.c.b16 %v1954, %v1950
        %v2323 = vpack.c.b16 %v1959, %v1955
        %v2324 = vpack.c.b16 %v1960, %v1956
        %v2325 = vpack.c.b16 %v1961, %v1957
        %v2326 = vpack.c.b16 %v1962, %v1958
        %v2327 = vpack.c.b16 %v1967, %v1963
        %v2328 = vpack.c.b16 %v1968, %v1964
        %v2329 = vpack.c.b16 %v1969, %v1965
        %v2330 = vpack.c.b16 %v1970, %v1966
        %v2331 = vpack.c.b16 %v1975, %v1971
        %v2332 = vpack.c.b16 %v1976, %v1972
        %v2333 = vpack.c.b16 %v1977, %v1973
        %v2334 = vpack.c.b16 %v1978, %v1974
        %v2335 = vpack.c.b16 %v1983, %v1979
        %v2336 = vpack.c.b16 %v1984, %v1980
        %v2337 = vpack.c.b16 %v1985, %v1981
        %v2338 = vpack.c.b16 %v1986, %v1982
        %v2339 = vpack.c.b16 %v1991, %v1987
        %v2340 = vpack.c.b16 %v1992, %v1988
        %v2341 = vpack.c.b16 %v1993, %v1989
        %v2342 = vpack.c.b16 %v1994, %v1990
        %v2343 = vpack.c.b16 %v1999, %v1995
        %v2344 = vpack.c.b16 %v2000, %v1996
        %v2345 = vpack.c.b16 %v2001, %v1997
        %v2346 = vpack.c.b16 %v2002, %v1998
        %v2347 = vpack.c.b16 %v2007, %v2003
        %v2348 = vpack.c.b16 %v2008, %v2004
        %v2349 = vpack.c.b16 %v2009, %v2005
        %v2350 = vpack.c.b16 %v2010, %v2006
        %v2351 = vpack.c.b16 %v2015, %v2011
        %v2352 = vpack.c.b16 %v2016, %v2012
        %v2353 = vpack.c.b16 %v2017, %v2013
        %v2354 = vpack.c.b16 %v2018, %v2014
        %v2355 = vpack.c.b16 %v2023, %v2019
        %v2356 = vpack.c.b16 %v2024, %v2020
        %v2357 = vpack.c.b16 %v2025, %v2021
        %v2358 = vpack.c.b16 %v2026, %v2022
        %v2359 = vpack.c.b16 %v2031, %v2027
        %v2360 = vpack.c.b16 %v2032, %v2028
        %v2361 = vpack.c.b16 %v2033, %v2029
        %v2362 = vpack.c.b16 %v2034, %v2030
        %v2363 = vpack.c.b16 %v2039, %v2035
        %v2364 = vpack.c.b16 %v2040, %v2036
        %v2365 = vpack.c.b16 %v2041, %v2037
        %v2366 = vpack.c.b16 %v2042, %v2038
        %v2367 = vpack.c.b16 %v2047, %v2043
        %v2368 = vpack.c.b16 %v2048, %v2044
        %v2369 = vpack.c.b16 %v2049, %v2045
        %v2370 = vpack.c.b16 %v2050, %v2046
        %v2371 = vpack.c.b16 %v2055, %v2051
        %v2372 = vpack.c.b16 %v2056, %v2052
        %v2373 = vpack.c.b16 %v2057, %v2053
        %v2374 = vpack.c.b16 %v2058, %v2054
        %v2375 = vpack.c.b16 %v2063, %v2059
        %v2376 = vpack.c.b16 %v2064, %v2060
        %v2377 = vpack.c.b16 %v2065, %v2061
        %v2378 = vpack.c.b16 %v2066, %v2062
        %v2379 = vpack.c.b16 %v2071, %v2067
        %v2380 = vpack.c.b16 %v2072, %v2068
        %v2381 = vpack.c.b16 %v2073, %v2069
        %v2382 = vpack.c.b16 %v2074, %v2070
        %v2383 = vpack.c.b16 %v2079, %v2075
        %v2384 = vpack.c.b16 %v2080, %v2076
        %v2385 = vpack.c.b16 %v2081, %v2077
        %v2386 = vpack.c.b16 %v2082, %v2078
        %v2387 = vpack.c.b16 %v2087, %v2083
        %v2388 = vpack.c.b16 %v2088, %v2084
        %v2389 = vpack.c.b16 %v2089, %v2085
        %v2390 = vpack.c.b16 %v2090, %v2086
        %v2391 = vpack.c.b16 %v2095, %v2091
        %v2392 = vpack.c.b16 %v2096, %v2092
        %v2393 = vpack.c.b16 %v2097, %v2093
        %v2394 = vpack.c.b16 %v2098, %v2094
        %v2395 = vpack.c.b16 %v2103, %v2099
        %v2396 = vpack.c.b16 %v2104, %v2100
        %v2397 = vpack.c.b16 %v2105, %v2101
        %v2398 = vpack.c.b16 %v2106, %v2102
        %v2399 = vpack.c.b16 %v2111, %v2107
        %v2400 = vpack.c.b16 %v2112, %v2108
        %v2401 = vpack.c.b16 %v2113, %v2109
        %v2402 = vpack.c.b16 %v2114, %v2110
        %v2403 = vpack.c.b16 %v2119, %v2115
        %v2404 = vpack.c.b16 %v2120, %v2116
        %v2405 = vpack.c.b16 %v2121, %v2117
        %v2406 = vpack.c.b16 %v2122, %v2118
        %v2407 = vpack.c.b16 %v2127, %v2123
        %v2408 = vpack.c.b16 %v2128, %v2124
        %v2409 = vpack.c.b16 %v2129, %v2125
        %v2410 = vpack.c.b16 %v2130, %v2126
        %v2411 = vpack.c.b16 %v2135, %v2131
        %v2412 = vpack.c.b16 %v2136, %v2132
        %v2413 = vpack.c.b16 %v2137, %v2133
        %v2414 = vpack.c.b16 %v2138, %v2134
        %v2415 = vpack.c.b16 %v2143, %v2139
        %v2416 = vpack.c.b16 %v2144, %v2140
        %v2417 = vpack.c.b16 %v2145, %v2141
        %v2418 = vpack.c.b16 %v2146, %v2142
        %v2419 = vpack.c.b16 %v2151, %v2147
        %v2420 = vpack.c.b16 %v2152, %v2148
        %v2421 = vpack.c.b16 %v2153, %v2149
        %v2422 = vpack.c.b16 %v2154, %v2150
        %v2423 = vpack.c.b16 %v2159, %v2155
        %v2424 = vpack.c.b16 %v2160, %v2156
        %v2425 = vpack.c.b16 %v2161, %v2157
        %v2426 = vpack.c.b16 %v2162, %v2158
        %v2427 = vpack.c.b16 %v2167, %v2163
        %v2428 = vpack.c.b16 %v2168, %v2164
        %v2429 = vpack.c.b16 %v2169, %v2165
        %v2430 = vpack.c.b16 %v2170, %v2166
        %v2431 = vpack.c.b16 %v2175, %v2171
        %v2432 = vpack.c.b16 %v2176, %v2172
        %v2433 = vpack.c.b16 %v2177, %v2173
        %v2434 = vpack.c.b16 %v2178, %v2174
        %v2435 = vpack.c.b16 %v2183, %v2179
        %v2436 = vpack.c.b16 %v2184, %v2180
        %v2437 = vpack.c.b16 %v2185, %v2181
        %v2438 = vpack.c.b16 %v2186, %v2182
        %v2439 = vpack.c.b16 %v2191, %v2187
        %v2440 = vpack.c.b16 %v2192, %v2188
        %v2441 = vpack.c.b16 %v2193, %v2189
        %v2442 = vpack.c.b16 %v2194, %v2190
        %v2443 = vpack.c.b16 %v2199, %v2195
        %v2444 = vpack.c.b16 %v2200, %v2196
        %v2445 = vpack.c.b16 %v2201, %v2197
        %v2446 = vpack.c.b16 %v2202, %v2198
        %v2447 = vpack.c.b16 %v2207, %v2203
        %v2448 = vpack.c.b16 %v2208, %v2204
        %v2449 = vpack.c.b16 %v2209, %v2205
        %v2450 = vpack.c.b16 %v2210, %v2206
        %v2451 = vpack.c.b16 %v2215, %v2211
        %v2452 = vpack.c.b16 %v2216, %v2212
        %v2453 = vpack.c.b16 %v2217, %v2213
        %v2454 = vpack.c.b16 %v2218, %v2214
        %v2455 = vpack.c.b16 %v2223, %v2219
        %v2456 = vpack.c.b16 %v2224, %v2220
        %v2457 = vpack.c.b16 %v2225, %v2221
        %v2458 = vpack.c.b16 %v2226, %v2222
        %v2459 = vpack.c.b16 %v2231, %v2227
        %v2460 = vpack.c.b16 %v2232, %v2228
        %v2461 = vpack.c.b16 %v2233, %v2229
        %v2462 = vpack.c.b16 %v2234, %v2230
        %v2463 = vpack.c.b16 %v2239, %v2235
        %v2464 = vpack.c.b16 %v2240, %v2236
        %v2465 = vpack.c.b16 %v2241, %v2237
        %v2466 = vpack.c.b16 %v2242, %v2238
        %v2467 = vpack.c.b16 %v2247, %v2243
        %v2468 = vpack.c.b16 %v2248, %v2244
        %v2469 = vpack.c.b16 %v2249, %v2245
        %v2470 = vpack.c.b16 %v2250, %v2246
        %v2471 = vpack.c.b16 %v2255, %v2251
        %v2472 = vpack.c.b16 %v2256, %v2252
        %v2473 = vpack.c.b16 %v2257, %v2253
        %v2474 = vpack.c.b16 %v2258, %v2254
        %v2475 = vpack.c.b16 %v2263, %v2259
        %v2476 = vpack.c.b16 %v2264, %v2260
        %v2477 = vpack.c.b16 %v2265, %v2261
        %v2478 = vpack.c.b16 %v2266, %v2262
        %v2479 = vpack.c.b16 %v2271, %v2267
        %v2480 = vpack.c.b16 %v2272, %v2268
        %v2481 = vpack.c.b16 %v2273, %v2269
        %v2482 = vpack.c.b16 %v2274, %v2270
        %v2483 = vpack.c.b16 %v2279, %v2275
        %v2484 = vpack.c.b16 %v2280, %v2276
        %v2485 = vpack.c.b16 %v2281, %v2277
        %v2486 = vpack.c.b16 %v2282, %v2278
        %v2487 = vpack.c.b16 %v2287, %v2283
        %v2488 = vpack.c.b16 %v2288, %v2284
        %v2489 = vpack.c.b16 %v2289, %v2285
        %v2490 = vpack.c.b16 %v2290, %v2286
        %v2491 = vpack.c.b16 %v2295, %v2291
        %v2492 = vpack.c.b16 %v2296, %v2292
        %v2493 = vpack.c.b16 %v2297, %v2293
        %v2494 = vpack.c.b16 %v2298, %v2294
        %v2495 = vpack.c.b16 %v2303, %v2299
        %v2496 = vpack.c.b16 %v2304, %v2300
        %v2497 = vpack.c.b16 %v2305, %v2301
        %v2498 = vpack.c.b16 %v2306, %v2302
        %2691 = vmatprep.subr.bf16.mxu0 %v2336
        %2692 = vmatpush1.bf16.msra.mxu0 %v2335
        %2693 = vmatprep.subr.bf16.mxu0 %v2332
        %2694 = vmatpush1.bf16.msra.mxu0 %v2331
        %2695 = vmatprep.subr.bf16.mxu0 %v2328
        %2696 = vmatpush1.bf16.msra.mxu0 %v2327
        %2697 = vmatprep.subr.bf16.mxu0 %v2324
        %2698 = vmatpush1.bf16.msra.mxu0 %v2323
        %2699 = vmatprep.subr.bf16.mxu0 %v2320
        %2700 = vmatpush1.bf16.msra.mxu0 %v2319
        %2701 = vmatprep.subr.bf16.mxu0 %v2316
        %2702 = vmatpush1.bf16.msra.mxu0 %v2315
        %2703 = vmatprep.subr.bf16.mxu0 %v2312
        %2704 = vmatpush1.bf16.msra.mxu0 %v2311
        %2705 = vmatprep.subr.bf16.mxu0 %v2308
        %2706 = vmatpush1.bf16.msra.mxu0 %v2307
        %2707 = vmatprep.subr.bf16.mxu0 %v2368
        %2708 = vmatpush2.bf16.msra.mxu0 %v2367
        %2709 = vmatprep.subr.bf16.mxu0 %v2364
        %2710 = vmatpush2.bf16.msra.mxu0 %v2363
        %2711 = vmatprep.subr.bf16.mxu0 %v2360
        %2712 = vmatpush2.bf16.msra.mxu0 %v2359
        %2713 = vmatprep.subr.bf16.mxu0 %v2356
        %2714 = vmatpush2.bf16.msra.mxu0 %v2355
        %2715 = vmatprep.subr.bf16.mxu0 %v2352
        %2716 = vmatpush2.bf16.msra.mxu0 %v2351
        %2717 = vmatprep.subr.bf16.mxu0 %v2348
        %2718 = vmatpush2.bf16.msra.mxu0 %v2347
        %2719 = vmatprep.subr.bf16.mxu0 %v2344
        %2720 = vmatpush2.bf16.msra.mxu0 %v2343
        %2721 = vmatprep.subr.bf16.mxu0 %v2340
        %2722 = vmatpush2.bf16.msra.mxu0 %v2339
        %2723 = vmatprep.mubr.bf16.mxu0 %v1684
        %2724 = vmatmul.mubr.bf16.gmra.mxu0 %v1683
        %v2725 = vpop.f32.mrf.mxu0
        %v2726 = vadd.f32 0.0, %v2725
        %v2727 = vpop.f32.mrf.mxu0
        %v2728 = vadd.f32 0.0, %v2727
        %v2729 = vpop.f32.mrf.mxu0
        %v2730 = vadd.f32 0.0, %v2729
        %v2731 = vpop.f32.mrf.mxu0
        %v2732 = vadd.f32 0.0, %v2731
        %2733 = vmatprep.mubr.bf16.mxu0 %v1690
        %2734 = vmatmul.mubr.bf16.gmra.mxu0 %v1689
        %v2735 = vpop.f32.mrf.mxu0
        %v2736 = vadd.f32 0.0, %v2735
        %v2737 = vpop.f32.mrf.mxu0
        %v2738 = vadd.f32 0.0, %v2737
        %v2739 = vpop.f32.mrf.mxu0
        %v2740 = vadd.f32 0.0, %v2739
        %v2741 = vpop.f32.mrf.mxu0
        %v2742 = vadd.f32 0.0, %v2741
        %2743 = vmatprep.mubr.bf16.mxu0 %v1696
        %2744 = vmatmul.mubr.bf16.gmra.mxu0 %v1695
        %v2745 = vpop.f32.mrf.mxu0
        %v2746 = vadd.f32 0.0, %v2745
        %v2747 = vpop.f32.mrf.mxu0
        %v2748 = vadd.f32 0.0, %v2747
        %v2749 = vpop.f32.mrf.mxu0
        %v2750 = vadd.f32 0.0, %v2749
        %v2751 = vpop.f32.mrf.mxu0
        %v2752 = vadd.f32 0.0, %v2751
        %2753 = vmatprep.mubr.bf16.mxu0 %v1702
        %2754 = vmatmul.mubr.bf16.gmra.mxu0 %v1701
        %v2755 = vpop.f32.mrf.mxu0
        %v2756 = vadd.f32 0.0, %v2755
        %v2757 = vpop.f32.mrf.mxu0
        %v2758 = vadd.f32 0.0, %v2757
        %v2759 = vpop.f32.mrf.mxu0
        %v2760 = vadd.f32 0.0, %v2759
        %v2761 = vpop.f32.mrf.mxu0
        %v2762 = vadd.f32 0.0, %v2761
        %2763 = vdwg.mxu0
        %2764 = vmatprep.subr.bf16.mxu0 %v2400
        %2765 = vmatpush1.bf16.msra.mxu0 %v2399
        %2766 = vmatprep.subr.bf16.mxu0 %v2396
        %2767 = vmatpush1.bf16.msra.mxu0 %v2395
        %2768 = vmatprep.subr.bf16.mxu0 %v2392
        %2769 = vmatpush1.bf16.msra.mxu0 %v2391
        %2770 = vmatprep.subr.bf16.mxu0 %v2388
        %2771 = vmatpush1.bf16.msra.mxu0 %v2387
        %2772 = vmatprep.subr.bf16.mxu0 %v2384
        %2773 = vmatpush1.bf16.msra.mxu0 %v2383
        %2774 = vmatprep.subr.bf16.mxu0 %v2380
        %2775 = vmatpush1.bf16.msra.mxu0 %v2379
        %2776 = vmatprep.subr.bf16.mxu0 %v2376
        %2777 = vmatpush1.bf16.msra.mxu0 %v2375
        %2778 = vmatprep.subr.bf16.mxu0 %v2372
        %2779 = vmatpush1.bf16.msra.mxu0 %v2371
        %2780 = vmatprep.subr.bf16.mxu0 %v2432
        %2781 = vmatpush2.bf16.msra.mxu0 %v2431
        %2782 = vmatprep.subr.bf16.mxu0 %v2428
        %2783 = vmatpush2.bf16.msra.mxu0 %v2427
        %2784 = vmatprep.subr.bf16.mxu0 %v2424
        %2785 = vmatpush2.bf16.msra.mxu0 %v2423
        %2786 = vmatprep.subr.bf16.mxu0 %v2420
        %2787 = vmatpush2.bf16.msra.mxu0 %v2419
        %2788 = vmatprep.subr.bf16.mxu0 %v2416
        %2789 = vmatpush2.bf16.msra.mxu0 %v2415
        %2790 = vmatprep.subr.bf16.mxu0 %v2412
        %2791 = vmatpush2.bf16.msra.mxu0 %v2411
        %2792 = vmatprep.subr.bf16.mxu0 %v2408
        %2793 = vmatpush2.bf16.msra.mxu0 %v2407
        %2794 = vmatprep.subr.bf16.mxu0 %v2404
        %2795 = vmatpush2.bf16.msra.mxu0 %v2403
        %2796 = vmatprep.mubr.bf16.mxu0 %v1686
        %2797 = vmatmul.mubr.bf16.gmra.mxu0 %v1685
        %v2798 = vpop.f32.mrf.mxu0
        %v2799 = vadd.f32 %v2726, %v2798
        %v2800 = vpop.f32.mrf.mxu0
        %v2801 = vadd.f32 %v2728, %v2800
        %v2802 = vpop.f32.mrf.mxu0
        %v2803 = vadd.f32 %v2730, %v2802
        %v2804 = vpop.f32.mrf.mxu0
        %v2805 = vadd.f32 %v2732, %v2804
        %2806 = vmatprep.mubr.bf16.mxu0 %v1692
        %2807 = vmatmul.mubr.bf16.gmra.mxu0 %v1691
        %v2808 = vpop.f32.mrf.mxu0
        %v2809 = vadd.f32 %v2736, %v2808
        %v2810 = vpop.f32.mrf.mxu0
        %v2811 = vadd.f32 %v2738, %v2810
        %v2812 = vpop.f32.mrf.mxu0
        %v2813 = vadd.f32 %v2740, %v2812
        %v2814 = vpop.f32.mrf.mxu0
        %v2815 = vadd.f32 %v2742, %v2814
        %2816 = vmatprep.mubr.bf16.mxu0 %v1698
        %2817 = vmatmul.mubr.bf16.gmra.mxu0 %v1697
        %v2818 = vpop.f32.mrf.mxu0
        %v2819 = vadd.f32 %v2746, %v2818
        %v2820 = vpop.f32.mrf.mxu0
        %v2821 = vadd.f32 %v2748, %v2820
        %v2822 = vpop.f32.mrf.mxu0
        %v2823 = vadd.f32 %v2750, %v2822
        %v2824 = vpop.f32.mrf.mxu0
        %v2825 = vadd.f32 %v2752, %v2824
        %2826 = vmatprep.mubr.bf16.mxu0 %v1704
        %2827 = vmatmul.mubr.bf16.gmra.mxu0 %v1703
        %v2828 = vpop.f32.mrf.mxu0
        %v2829 = vadd.f32 %v2756, %v2828
        %v2830 = vpop.f32.mrf.mxu0
        %v2831 = vadd.f32 %v2758, %v2830
        %v2832 = vpop.f32.mrf.mxu0
        %v2833 = vadd.f32 %v2760, %v2832
        %v2834 = vpop.f32.mrf.mxu0
        %v2835 = vadd.f32 %v2762, %v2834
        %2836 = vdwg.mxu0
        %2837 = vmatprep.subr.bf16.mxu0 %v2464
        %2838 = vmatpush1.bf16.msra.mxu0 %v2463
        %2839 = vmatprep.subr.bf16.mxu0 %v2460
        %2840 = vmatpush1.bf16.msra.mxu0 %v2459
        %2841 = vmatprep.subr.bf16.mxu0 %v2456
        %2842 = vmatpush1.bf16.msra.mxu0 %v2455
        %2843 = vmatprep.subr.bf16.mxu0 %v2452
        %2844 = vmatpush1.bf16.msra.mxu0 %v2451
        %2845 = vmatprep.subr.bf16.mxu0 %v2448
        %2846 = vmatpush1.bf16.msra.mxu0 %v2447
        %2847 = vmatprep.subr.bf16.mxu0 %v2444
        %2848 = vmatpush1.bf16.msra.mxu0 %v2443
        %2849 = vmatprep.subr.bf16.mxu0 %v2440
        %2850 = vmatpush1.bf16.msra.mxu0 %v2439
        %2851 = vmatprep.subr.bf16.mxu0 %v2436
        %2852 = vmatpush1.bf16.msra.mxu0 %v2435
        %2853 = vmatprep.subr.bf16.mxu0 %v2496
        %2854 = vmatpush2.bf16.msra.mxu0 %v2495
        %2855 = vmatprep.subr.bf16.mxu0 %v2492
        %2856 = vmatpush2.bf16.msra.mxu0 %v2491
        %2857 = vmatprep.subr.bf16.mxu0 %v2488
        %2858 = vmatpush2.bf16.msra.mxu0 %v2487
        %2859 = vmatprep.subr.bf16.mxu0 %v2484
        %2860 = vmatpush2.bf16.msra.mxu0 %v2483
        %2861 = vmatprep.subr.bf16.mxu0 %v2480
        %2862 = vmatpush2.bf16.msra.mxu0 %v2479
        %2863 = vmatprep.subr.bf16.mxu0 %v2476
        %2864 = vmatpush2.bf16.msra.mxu0 %v2475
        %2865 = vmatprep.subr.bf16.mxu0 %v2472
        %2866 = vmatpush2.bf16.msra.mxu0 %v2471
        %2867 = vmatprep.subr.bf16.mxu0 %v2468
        %2868 = vmatpush2.bf16.msra.mxu0 %v2467
        %2869 = vmatprep.mubr.bf16.mxu0 %v1688
        %2870 = vmatmul.mubr.bf16.gmra.mxu0 %v1687
        %v2871 = vpop.f32.mrf.mxu0
        %v2872 = vadd.f32 %v2799, %v2871
        %v2873 = vpop.f32.mrf.mxu0
        %v2874 = vadd.f32 %v2801, %v2873
        %v2875 = vpop.f32.mrf.mxu0
        %v2876 = vadd.f32 %v2803, %v2875
        %v2877 = vpop.f32.mrf.mxu0
        %v2878 = vadd.f32 %v2805, %v2877
        %2879 = vmatprep.mubr.bf16.mxu0 %v1694
        %2880 = vmatmul.mubr.bf16.gmra.mxu0 %v1693
        %v2881 = vpop.f32.mrf.mxu0
        %v2882 = vadd.f32 %v2809, %v2881
        %v2883 = vpop.f32.mrf.mxu0
        %v2884 = vadd.f32 %v2811, %v2883
        %v2885 = vpop.f32.mrf.mxu0
        %v2886 = vadd.f32 %v2813, %v2885
        %v2887 = vpop.f32.mrf.mxu0
        %v2888 = vadd.f32 %v2815, %v2887
        %2889 = vmatprep.mubr.bf16.mxu0 %v1700
        %2890 = vmatmul.mubr.bf16.gmra.mxu0 %v1699
        %v2891 = vpop.f32.mrf.mxu0
        %v2892 = vadd.f32 %v2819, %v2891
        %v2893 = vpop.f32.mrf.mxu0
        %v2894 = vadd.f32 %v2821, %v2893
        %v2895 = vpop.f32.mrf.mxu0
        %v2896 = vadd.f32 %v2823, %v2895
        %v2897 = vpop.f32.mrf.mxu0
        %v2898 = vadd.f32 %v2825, %v2897
        %2899 = vmatprep.mubr.bf16.mxu0 %v1706
        %2900 = vmatmul.mubr.bf16.gmra.mxu0 %v1705
        %v2901 = vpop.f32.mrf.mxu0
        %v2902 = vadd.f32 %v2829, %v2901
        %v2903 = vpop.f32.mrf.mxu0
        %v2904 = vadd.f32 %v2831, %v2903
        %v2905 = vpop.f32.mrf.mxu0
        %v2906 = vadd.f32 %v2833, %v2905
        %v2907 = vpop.f32.mrf.mxu0
        %v2908 = vadd.f32 %v2835, %v2907
        %2909 = vdwg.mxu0
        %2910 = vmatprep.subr.bf16.mxu0 %v2338
        %2911 = vmatpush1.bf16.msra.mxu0 %v2337
        %2912 = vmatprep.subr.bf16.mxu0 %v2334
        %2913 = vmatpush1.bf16.msra.mxu0 %v2333
        %2914 = vmatprep.subr.bf16.mxu0 %v2330
        %2915 = vmatpush1.bf16.msra.mxu0 %v2329
        %2916 = vmatprep.subr.bf16.mxu0 %v2326
        %2917 = vmatpush1.bf16.msra.mxu0 %v2325
        %2918 = vmatprep.subr.bf16.mxu0 %v2322
        %2919 = vmatpush1.bf16.msra.mxu0 %v2321
        %2920 = vmatprep.subr.bf16.mxu0 %v2318
        %2921 = vmatpush1.bf16.msra.mxu0 %v2317
        %2922 = vmatprep.subr.bf16.mxu0 %v2314
        %2923 = vmatpush1.bf16.msra.mxu0 %v2313
        %2924 = vmatprep.subr.bf16.mxu0 %v2310
        %2925 = vmatpush1.bf16.msra.mxu0 %v2309
        %2926 = vmatprep.subr.bf16.mxu0 %v2370
        %2927 = vmatpush2.bf16.msra.mxu0 %v2369
        %2928 = vmatprep.subr.bf16.mxu0 %v2366
        %2929 = vmatpush2.bf16.msra.mxu0 %v2365
        %2930 = vmatprep.subr.bf16.mxu0 %v2362
        %2931 = vmatpush2.bf16.msra.mxu0 %v2361
        %2932 = vmatprep.subr.bf16.mxu0 %v2358
        %2933 = vmatpush2.bf16.msra.mxu0 %v2357
        %2934 = vmatprep.subr.bf16.mxu0 %v2354
        %2935 = vmatpush2.bf16.msra.mxu0 %v2353
        %2936 = vmatprep.subr.bf16.mxu0 %v2350
        %2937 = vmatpush2.bf16.msra.mxu0 %v2349
        %2938 = vmatprep.subr.bf16.mxu0 %v2346
        %2939 = vmatpush2.bf16.msra.mxu0 %v2345
        %2940 = vmatprep.subr.bf16.mxu0 %v2342
        %2941 = vmatpush2.bf16.msra.mxu0 %v2341
        %2942 = vmatprep.mubr.bf16.mxu0 %v1684
        %2943 = vmatmul.mubr.bf16.gmra.mxu0 %v1683
        %v2944 = vpop.f32.mrf.mxu0
        %v2945 = vadd.f32 0.0, %v2944
        %v2946 = vpop.f32.mrf.mxu0
        %v2947 = vadd.f32 0.0, %v2946
        %v2948 = vpop.f32.mrf.mxu0
        %v2949 = vadd.f32 0.0, %v2948
        %v2950 = vpop.f32.mrf.mxu0
        %v2951 = vadd.f32 0.0, %v2950
        %2952 = vmatprep.mubr.bf16.mxu0 %v1690
        %2953 = vmatmul.mubr.bf16.gmra.mxu0 %v1689
        %v2954 = vpop.f32.mrf.mxu0
        %v2955 = vadd.f32 0.0, %v2954
        %v2956 = vpop.f32.mrf.mxu0
        %v2957 = vadd.f32 0.0, %v2956
        %v2958 = vpop.f32.mrf.mxu0
        %v2959 = vadd.f32 0.0, %v2958
        %v2960 = vpop.f32.mrf.mxu0
        %v2961 = vadd.f32 0.0, %v2960
        %2962 = vmatprep.mubr.bf16.mxu0 %v1696
        %2963 = vmatmul.mubr.bf16.gmra.mxu0 %v1695
        %v2964 = vpop.f32.mrf.mxu0
        %v2965 = vadd.f32 0.0, %v2964
        %v2966 = vpop.f32.mrf.mxu0
        %v2967 = vadd.f32 0.0, %v2966
        %v2968 = vpop.f32.mrf.mxu0
        %v2969 = vadd.f32 0.0, %v2968
        %v2970 = vpop.f32.mrf.mxu0
        %v2971 = vadd.f32 0.0, %v2970
        %2972 = vmatprep.mubr.bf16.mxu0 %v1702
        %2973 = vmatmul.mubr.bf16.gmra.mxu0 %v1701
        %v2974 = vpop.f32.mrf.mxu0
        %v2975 = vadd.f32 0.0, %v2974
        %v2976 = vpop.f32.mrf.mxu0
        %v2977 = vadd.f32 0.0, %v2976
        %v2978 = vpop.f32.mrf.mxu0
        %v2979 = vadd.f32 0.0, %v2978
        %v2980 = vpop.f32.mrf.mxu0
        %v2981 = vadd.f32 0.0, %v2980
        %2982 = vdwg.mxu0
        %2983 = vmatprep.subr.bf16.mxu0 %v2402
        %2984 = vmatpush1.bf16.msra.mxu0 %v2401
        %2985 = vmatprep.subr.bf16.mxu0 %v2398
        %2986 = vmatpush1.bf16.msra.mxu0 %v2397
        %2987 = vmatprep.subr.bf16.mxu0 %v2394
        %2988 = vmatpush1.bf16.msra.mxu0 %v2393
        %2989 = vmatprep.subr.bf16.mxu0 %v2390
        %2990 = vmatpush1.bf16.msra.mxu0 %v2389
        %2991 = vmatprep.subr.bf16.mxu0 %v2386
        %2992 = vmatpush1.bf16.msra.mxu0 %v2385
        %2993 = vmatprep.subr.bf16.mxu0 %v2382
        %2994 = vmatpush1.bf16.msra.mxu0 %v2381
        %2995 = vmatprep.subr.bf16.mxu0 %v2378
        %2996 = vmatpush1.bf16.msra.mxu0 %v2377
        %2997 = vmatprep.subr.bf16.mxu0 %v2374
        %2998 = vmatpush1.bf16.msra.mxu0 %v2373
        %2999 = vmatprep.subr.bf16.mxu0 %v2434
        %3000 = vmatpush2.bf16.msra.mxu0 %v2433
        %3001 = vmatprep.subr.bf16.mxu0 %v2430
        %3002 = vmatpush2.bf16.msra.mxu0 %v2429
        %3003 = vmatprep.subr.bf16.mxu0 %v2426
        %3004 = vmatpush2.bf16.msra.mxu0 %v2425
        %3005 = vmatprep.subr.bf16.mxu0 %v2422
        %3006 = vmatpush2.bf16.msra.mxu0 %v2421
        %3007 = vmatprep.subr.bf16.mxu0 %v2418
        %3008 = vmatpush2.bf16.msra.mxu0 %v2417
        %3009 = vmatprep.subr.bf16.mxu0 %v2414
        %3010 = vmatpush2.bf16.msra.mxu0 %v2413
        %3011 = vmatprep.subr.bf16.mxu0 %v2410
        %3012 = vmatpush2.bf16.msra.mxu0 %v2409
        %3013 = vmatprep.subr.bf16.mxu0 %v2406
        %3014 = vmatpush2.bf16.msra.mxu0 %v2405
        %3015 = vmatprep.mubr.bf16.mxu0 %v1686
        %3016 = vmatmul.mubr.bf16.gmra.mxu0 %v1685
        %v3017 = vpop.f32.mrf.mxu0
        %v3018 = vadd.f32 %v2945, %v3017
        %v3019 = vpop.f32.mrf.mxu0
        %v3020 = vadd.f32 %v2947, %v3019
        %v3021 = vpop.f32.mrf.mxu0
        %v3022 = vadd.f32 %v2949, %v3021
        %v3023 = vpop.f32.mrf.mxu0
        %v3024 = vadd.f32 %v2951, %v3023
        %3025 = vmatprep.mubr.bf16.mxu0 %v1692
        %3026 = vmatmul.mubr.bf16.gmra.mxu0 %v1691
        %v3027 = vpop.f32.mrf.mxu0
        %v3028 = vadd.f32 %v2955, %v3027
        %v3029 = vpop.f32.mrf.mxu0
        %v3030 = vadd.f32 %v2957, %v3029
        %v3031 = vpop.f32.mrf.mxu0
        %v3032 = vadd.f32 %v2959, %v3031
        %v3033 = vpop.f32.mrf.mxu0
        %v3034 = vadd.f32 %v2961, %v3033
        %3035 = vmatprep.mubr.bf16.mxu0 %v1698
        %3036 = vmatmul.mubr.bf16.gmra.mxu0 %v1697
        %v3037 = vpop.f32.mrf.mxu0
        %v3038 = vadd.f32 %v2965, %v3037
        %v3039 = vpop.f32.mrf.mxu0
        %v3040 = vadd.f32 %v2967, %v3039
        %v3041 = vpop.f32.mrf.mxu0
        %v3042 = vadd.f32 %v2969, %v3041
        %v3043 = vpop.f32.mrf.mxu0
        %v3044 = vadd.f32 %v2971, %v3043
        %3045 = vmatprep.mubr.bf16.mxu0 %v1704
        %3046 = vmatmul.mubr.bf16.gmra.mxu0 %v1703
        %v3047 = vpop.f32.mrf.mxu0
        %v3048 = vadd.f32 %v2975, %v3047
        %v3049 = vpop.f32.mrf.mxu0
        %v3050 = vadd.f32 %v2977, %v3049
        %v3051 = vpop.f32.mrf.mxu0
        %v3052 = vadd.f32 %v2979, %v3051
        %v3053 = vpop.f32.mrf.mxu0
        %v3054 = vadd.f32 %v2981, %v3053
        %3055 = vdwg.mxu0
        %3056 = vmatprep.subr.bf16.mxu0 %v2466
        %3057 = vmatpush1.bf16.msra.mxu0 %v2465
        %3058 = vmatprep.subr.bf16.mxu0 %v2462
        %3059 = vmatpush1.bf16.msra.mxu0 %v2461
        %3060 = vmatprep.subr.bf16.mxu0 %v2458
        %3061 = vmatpush1.bf16.msra.mxu0 %v2457
        %3062 = vmatprep.subr.bf16.mxu0 %v2454
        %3063 = vmatpush1.bf16.msra.mxu0 %v2453
        %3064 = vmatprep.subr.bf16.mxu0 %v2450
        %3065 = vmatpush1.bf16.msra.mxu0 %v2449
        %3066 = vmatprep.subr.bf16.mxu0 %v2446
        %3067 = vmatpush1.bf16.msra.mxu0 %v2445
        %3068 = vmatprep.subr.bf16.mxu0 %v2442
        %3069 = vmatpush1.bf16.msra.mxu0 %v2441
        %3070 = vmatprep.subr.bf16.mxu0 %v2438
        %3071 = vmatpush1.bf16.msra.mxu0 %v2437
        %3072 = vmatprep.subr.bf16.mxu0 %v2498
        %3073 = vmatpush2.bf16.msra.mxu0 %v2497
        %3074 = vmatprep.subr.bf16.mxu0 %v2494
        %3075 = vmatpush2.bf16.msra.mxu0 %v2493
        %3076 = vmatprep.subr.bf16.mxu0 %v2490
        %3077 = vmatpush2.bf16.msra.mxu0 %v2489
        %3078 = vmatprep.subr.bf16.mxu0 %v2486
        %3079 = vmatpush2.bf16.msra.mxu0 %v2485
        %3080 = vmatprep.subr.bf16.mxu0 %v2482
        %3081 = vmatpush2.bf16.msra.mxu0 %v2481
        %3082 = vmatprep.subr.bf16.mxu0 %v2478
        %3083 = vmatpush2.bf16.msra.mxu0 %v2477
        %3084 = vmatprep.subr.bf16.mxu0 %v2474
        %3085 = vmatpush2.bf16.msra.mxu0 %v2473
        %3086 = vmatprep.subr.bf16.mxu0 %v2470
        %3087 = vmatpush2.bf16.msra.mxu0 %v2469
        %3088 = vmatprep.mubr.bf16.mxu0 %v1688
        %3089 = vmatmul.mubr.bf16.gmra.mxu0 %v1687
        %v3090 = vpop.f32.mrf.mxu0
        %v3091 = vadd.f32 %v3018, %v3090
        %v3092 = vpop.f32.mrf.mxu0
        %v3093 = vadd.f32 %v3020, %v3092
        %v3094 = vpop.f32.mrf.mxu0
        %v3095 = vadd.f32 %v3022, %v3094
        %v3096 = vpop.f32.mrf.mxu0
        %v3097 = vadd.f32 %v3024, %v3096
        %3098 = vmatprep.mubr.bf16.mxu0 %v1694
        %3099 = vmatmul.mubr.bf16.gmra.mxu0 %v1693
        %v3100 = vpop.f32.mrf.mxu0
        %v3101 = vadd.f32 %v3028, %v3100
        %v3102 = vpop.f32.mrf.mxu0
        %v3103 = vadd.f32 %v3030, %v3102
        %v3104 = vpop.f32.mrf.mxu0
        %v3105 = vadd.f32 %v3032, %v3104
        %v3106 = vpop.f32.mrf.mxu0
        %v3107 = vadd.f32 %v3034, %v3106
        %3108 = vmatprep.mubr.bf16.mxu0 %v1700
        %3109 = vmatmul.mubr.bf16.gmra.mxu0 %v1699
        %v3110 = vpop.f32.mrf.mxu0
        %v3111 = vadd.f32 %v3038, %v3110
        %v3112 = vpop.f32.mrf.mxu0
        %v3113 = vadd.f32 %v3040, %v3112
        %v3114 = vpop.f32.mrf.mxu0
        %v3115 = vadd.f32 %v3042, %v3114
        %v3116 = vpop.f32.mrf.mxu0
        %v3117 = vadd.f32 %v3044, %v3116
        %3118 = vmatprep.mubr.bf16.mxu0 %v1706
        %3119 = vmatmul.mubr.bf16.gmra.mxu0 %v1705
        %v3120 = vpop.f32.mrf.mxu0
        %v3121 = vadd.f32 %v3048, %v3120
        %v3122 = vpop.f32.mrf.mxu0
        %v3123 = vadd.f32 %v3050, %v3122
        %v3124 = vpop.f32.mrf.mxu0
        %v3125 = vadd.f32 %v3052, %v3124
        %v3126 = vpop.f32.mrf.mxu0
        %v3127 = vadd.f32 %v3054, %v3126
        %3128 = vdwg.mxu0
        %v3153 = vunpack.c.l.b16 %v1178
        %v3154 = vunpack.c.h.b16 %v1178
        %v3155 = vunpack.c.l.b16 %v1179
        %v3156 = vunpack.c.h.b16 %v1179
        %v3157 = vunpack.c.l.b16 %v1180
        %v3158 = vunpack.c.h.b16 %v1180
        %v3159 = vunpack.c.l.b16 %v1181
        %v3160 = vunpack.c.h.b16 %v1181
        %v3161 = vunpack.c.l.b16 %v1182
        %v3162 = vunpack.c.h.b16 %v1182
        %v3163 = vunpack.c.l.b16 %v1183
        %v3164 = vunpack.c.h.b16 %v1183
        %v3165 = vunpack.c.l.b16 %v1184
        %v3166 = vunpack.c.h.b16 %v1184
        %v3167 = vunpack.c.l.b16 %v1185
        %v3168 = vunpack.c.h.b16 %v1185
        %v3169 = vunpack.c.l.b16 %v1186
        %v3170 = vunpack.c.h.b16 %v1186
        %v3171 = vunpack.c.l.b16 %v1187
        %v3172 = vunpack.c.h.b16 %v1187
        %v3173 = vunpack.c.l.b16 %v1188
        %v3174 = vunpack.c.h.b16 %v1188
        %v3175 = vunpack.c.l.b16 %v1189
        %v3176 = vunpack.c.h.b16 %v1189
        %v3177 = vunpack.c.l.b16 %v1190
        %v3178 = vunpack.c.h.b16 %v1190
        %v3179 = vunpack.c.l.b16 %v1191
        %v3180 = vunpack.c.h.b16 %v1191
        %v3181 = vunpack.c.l.b16 %v1192
        %v3182 = vunpack.c.h.b16 %v1192
        %v3183 = vunpack.c.l.b16 %v1193
        %v3184 = vunpack.c.h.b16 %v1193
        %v3185 = vunpack.c.l.b16 %v1194
        %v3186 = vunpack.c.h.b16 %v1194
        %v3187 = vunpack.c.l.b16 %v1195
        %v3188 = vunpack.c.h.b16 %v1195
        %v3189 = vunpack.c.l.b16 %v1196
        %v3190 = vunpack.c.h.b16 %v1196
        %v3191 = vunpack.c.l.b16 %v1197
        %v3192 = vunpack.c.h.b16 %v1197
        %v3193 = vunpack.c.l.b16 %v1198
        %v3194 = vunpack.c.h.b16 %v1198
        %v3195 = vunpack.c.l.b16 %v1199
        %v3196 = vunpack.c.h.b16 %v1199
        %v3197 = vunpack.c.l.b16 %v1200
        %v3198 = vunpack.c.h.b16 %v1200
        %v3199 = vunpack.c.l.b16 %v1201
        %v3200 = vunpack.c.h.b16 %v1201
        %v3201 = vpack.c.b16 %v3159, %v3153
        %v3202 = vpack.c.b16 %v3160, %v3154
        %v3203 = vpack.c.b16 %v3161, %v3155
        %v3204 = vpack.c.b16 %v3162, %v3156
        %v3205 = vpack.c.b16 %v3163, %v3157
        %v3206 = vpack.c.b16 %v3164, %v3158
        %v3207 = vpack.c.b16 %v3171, %v3165
        %v3208 = vpack.c.b16 %v3172, %v3166
        %v3209 = vpack.c.b16 %v3173, %v3167
        %v3210 = vpack.c.b16 %v3174, %v3168
        %v3211 = vpack.c.b16 %v3175, %v3169
        %v3212 = vpack.c.b16 %v3176, %v3170
        %v3213 = vpack.c.b16 %v3183, %v3177
        %v3214 = vpack.c.b16 %v3184, %v3178
        %v3215 = vpack.c.b16 %v3185, %v3179
        %v3216 = vpack.c.b16 %v3186, %v3180
        %v3217 = vpack.c.b16 %v3187, %v3181
        %v3218 = vpack.c.b16 %v3188, %v3182
        %v3219 = vpack.c.b16 %v3195, %v3189
        %v3220 = vpack.c.b16 %v3196, %v3190
        %v3221 = vpack.c.b16 %v3197, %v3191
        %v3222 = vpack.c.b16 %v3198, %v3192
        %v3223 = vpack.c.b16 %v3199, %v3193
        %v3224 = vpack.c.b16 %v3200, %v3194
        %v3441 = vunpack.c.l.b16 %v1202
        %v3442 = vunpack.c.h.b16 %v1202
        %v3443 = vunpack.c.l.b16 %v1203
        %v3444 = vunpack.c.h.b16 %v1203
        %v3445 = vunpack.c.l.b16 %v1204
        %v3446 = vunpack.c.h.b16 %v1204
        %v3447 = vunpack.c.l.b16 %v1205
        %v3448 = vunpack.c.h.b16 %v1205
        %v3449 = vunpack.c.l.b16 %v1206
        %v3450 = vunpack.c.h.b16 %v1206
        %v3451 = vunpack.c.l.b16 %v1207
        %v3452 = vunpack.c.h.b16 %v1207
        %v3453 = vunpack.c.l.b16 %v1208
        %v3454 = vunpack.c.h.b16 %v1208
        %v3455 = vunpack.c.l.b16 %v1209
        %v3456 = vunpack.c.h.b16 %v1209
        %v3457 = vunpack.c.l.b16 %v1210
        %v3458 = vunpack.c.h.b16 %v1210
        %v3459 = vunpack.c.l.b16 %v1211
        %v3460 = vunpack.c.h.b16 %v1211
        %v3461 = vunpack.c.l.b16 %v1212
        %v3462 = vunpack.c.h.b16 %v1212
        %v3463 = vunpack.c.l.b16 %v1213
        %v3464 = vunpack.c.h.b16 %v1213
        %v3465 = vunpack.c.l.b16 %v1214
        %v3466 = vunpack.c.h.b16 %v1214
        %v3467 = vunpack.c.l.b16 %v1215
        %v3468 = vunpack.c.h.b16 %v1215
        %v3469 = vunpack.c.l.b16 %v1216
        %v3470 = vunpack.c.h.b16 %v1216
        %v3471 = vunpack.c.l.b16 %v1217
        %v3472 = vunpack.c.h.b16 %v1217
        %v3473 = vunpack.c.l.b16 %v1218
        %v3474 = vunpack.c.h.b16 %v1218
        %v3475 = vunpack.c.l.b16 %v1219
        %v3476 = vunpack.c.h.b16 %v1219
        %v3477 = vunpack.c.l.b16 %v1220
        %v3478 = vunpack.c.h.b16 %v1220
        %v3479 = vunpack.c.l.b16 %v1221
        %v3480 = vunpack.c.h.b16 %v1221
        %v3481 = vunpack.c.l.b16 %v1222
        %v3482 = vunpack.c.h.b16 %v1222
        %v3483 = vunpack.c.l.b16 %v1223
        %v3484 = vunpack.c.h.b16 %v1223
        %v3485 = vunpack.c.l.b16 %v1224
        %v3486 = vunpack.c.h.b16 %v1224
        %v3487 = vunpack.c.l.b16 %v1225
        %v3488 = vunpack.c.h.b16 %v1225
        %v3489 = vunpack.c.l.b16 %v1226
        %v3490 = vunpack.c.h.b16 %v1226
        %v3491 = vunpack.c.l.b16 %v1227
        %v3492 = vunpack.c.h.b16 %v1227
        %v3493 = vunpack.c.l.b16 %v1228
        %v3494 = vunpack.c.h.b16 %v1228
        %v3495 = vunpack.c.l.b16 %v1229
        %v3496 = vunpack.c.h.b16 %v1229
        %v3497 = vunpack.c.l.b16 %v1230
        %v3498 = vunpack.c.h.b16 %v1230
        %v3499 = vunpack.c.l.b16 %v1231
        %v3500 = vunpack.c.h.b16 %v1231
        %v3501 = vunpack.c.l.b16 %v1232
        %v3502 = vunpack.c.h.b16 %v1232
        %v3503 = vunpack.c.l.b16 %v1233
        %v3504 = vunpack.c.h.b16 %v1233
        %v3505 = vunpack.c.l.b16 %v1234
        %v3506 = vunpack.c.h.b16 %v1234
        %v3507 = vunpack.c.l.b16 %v1235
        %v3508 = vunpack.c.h.b16 %v1235
        %v3509 = vunpack.c.l.b16 %v1236
        %v3510 = vunpack.c.h.b16 %v1236
        %v3511 = vunpack.c.l.b16 %v1237
        %v3512 = vunpack.c.h.b16 %v1237
        %v3513 = vunpack.c.l.b16 %v1238
        %v3514 = vunpack.c.h.b16 %v1238
        %v3515 = vunpack.c.l.b16 %v1239
        %v3516 = vunpack.c.h.b16 %v1239
        %v3517 = vunpack.c.l.b16 %v1240
        %v3518 = vunpack.c.h.b16 %v1240
        %v3519 = vunpack.c.l.b16 %v1241
        %v3520 = vunpack.c.h.b16 %v1241
        %v3521 = vunpack.c.l.b16 %v1242
        %v3522 = vunpack.c.h.b16 %v1242
        %v3523 = vunpack.c.l.b16 %v1243
        %v3524 = vunpack.c.h.b16 %v1243
        %v3525 = vunpack.c.l.b16 %v1244
        %v3526 = vunpack.c.h.b16 %v1244
        %v3527 = vunpack.c.l.b16 %v1245
        %v3528 = vunpack.c.h.b16 %v1245
        %v3529 = vunpack.c.l.b16 %v1246
        %v3530 = vunpack.c.h.b16 %v1246
        %v3531 = vunpack.c.l.b16 %v1247
        %v3532 = vunpack.c.h.b16 %v1247
        %v3533 = vunpack.c.l.b16 %v1248
        %v3534 = vunpack.c.h.b16 %v1248
        %v3535 = vunpack.c.l.b16 %v1249
        %v3536 = vunpack.c.h.b16 %v1249
        %v3537 = vunpack.c.l.b16 %v1250
        %v3538 = vunpack.c.h.b16 %v1250
        %v3539 = vunpack.c.l.b16 %v1251
        %v3540 = vunpack.c.h.b16 %v1251
        %v3541 = vunpack.c.l.b16 %v1252
        %v3542 = vunpack.c.h.b16 %v1252
        %v3543 = vunpack.c.l.b16 %v1253
        %v3544 = vunpack.c.h.b16 %v1253
        %v3545 = vunpack.c.l.b16 %v1254
        %v3546 = vunpack.c.h.b16 %v1254
        %v3547 = vunpack.c.l.b16 %v1255
        %v3548 = vunpack.c.h.b16 %v1255
        %v3549 = vunpack.c.l.b16 %v1256
        %v3550 = vunpack.c.h.b16 %v1256
        %v3551 = vunpack.c.l.b16 %v1257
        %v3552 = vunpack.c.h.b16 %v1257
        %v3553 = vunpack.c.l.b16 %v1258
        %v3554 = vunpack.c.h.b16 %v1258
        %v3555 = vunpack.c.l.b16 %v1259
        %v3556 = vunpack.c.h.b16 %v1259
        %v3557 = vunpack.c.l.b16 %v1260
        %v3558 = vunpack.c.h.b16 %v1260
        %v3559 = vunpack.c.l.b16 %v1261
        %v3560 = vunpack.c.h.b16 %v1261
        %v3561 = vunpack.c.l.b16 %v1262
        %v3562 = vunpack.c.h.b16 %v1262
        %v3563 = vunpack.c.l.b16 %v1263
        %v3564 = vunpack.c.h.b16 %v1263
        %v3565 = vunpack.c.l.b16 %v1264
        %v3566 = vunpack.c.h.b16 %v1264
        %v3567 = vunpack.c.l.b16 %v1265
        %v3568 = vunpack.c.h.b16 %v1265
        %v3569 = vunpack.c.l.b16 %v1266
        %v3570 = vunpack.c.h.b16 %v1266
        %v3571 = vunpack.c.l.b16 %v1267
        %v3572 = vunpack.c.h.b16 %v1267
        %v3573 = vunpack.c.l.b16 %v1268
        %v3574 = vunpack.c.h.b16 %v1268
        %v3575 = vunpack.c.l.b16 %v1269
        %v3576 = vunpack.c.h.b16 %v1269
        %v3577 = vunpack.c.l.b16 %v1270
        %v3578 = vunpack.c.h.b16 %v1270
        %v3579 = vunpack.c.l.b16 %v1271
        %v3580 = vunpack.c.h.b16 %v1271
        %v3581 = vunpack.c.l.b16 %v1272
        %v3582 = vunpack.c.h.b16 %v1272
        %v3583 = vunpack.c.l.b16 %v1273
        %v3584 = vunpack.c.h.b16 %v1273
        %v3585 = vunpack.c.l.b16 %v1274
        %v3586 = vunpack.c.h.b16 %v1274
        %v3587 = vunpack.c.l.b16 %v1275
        %v3588 = vunpack.c.h.b16 %v1275
        %v3589 = vunpack.c.l.b16 %v1276
        %v3590 = vunpack.c.h.b16 %v1276
        %v3591 = vunpack.c.l.b16 %v1277
        %v3592 = vunpack.c.h.b16 %v1277
        %v3593 = vunpack.c.l.b16 %v1278
        %v3594 = vunpack.c.h.b16 %v1278
        %v3595 = vunpack.c.l.b16 %v1279
        %v3596 = vunpack.c.h.b16 %v1279
        %v3597 = vunpack.c.l.b16 %v1280
        %v3598 = vunpack.c.h.b16 %v1280
        %v3599 = vunpack.c.l.b16 %v1281
        %v3600 = vunpack.c.h.b16 %v1281
        %v3601 = vunpack.c.l.b16 %v1282
        %v3602 = vunpack.c.h.b16 %v1282
        %v3603 = vunpack.c.l.b16 %v1283
        %v3604 = vunpack.c.h.b16 %v1283
        %v3605 = vunpack.c.l.b16 %v1284
        %v3606 = vunpack.c.h.b16 %v1284
        %v3607 = vunpack.c.l.b16 %v1285
        %v3608 = vunpack.c.h.b16 %v1285
        %v3609 = vunpack.c.l.b16 %v1286
        %v3610 = vunpack.c.h.b16 %v1286
        %v3611 = vunpack.c.l.b16 %v1287
        %v3612 = vunpack.c.h.b16 %v1287
        %v3613 = vunpack.c.l.b16 %v1288
        %v3614 = vunpack.c.h.b16 %v1288
        %v3615 = vunpack.c.l.b16 %v1289
        %v3616 = vunpack.c.h.b16 %v1289
        %v3617 = vunpack.c.l.b16 %v1290
        %v3618 = vunpack.c.h.b16 %v1290
        %v3619 = vunpack.c.l.b16 %v1291
        %v3620 = vunpack.c.h.b16 %v1291
        %v3621 = vunpack.c.l.b16 %v1292
        %v3622 = vunpack.c.h.b16 %v1292
        %v3623 = vunpack.c.l.b16 %v1293
        %v3624 = vunpack.c.h.b16 %v1293
        %v3625 = vunpack.c.l.b16 %v1294
        %v3626 = vunpack.c.h.b16 %v1294
        %v3627 = vunpack.c.l.b16 %v1295
        %v3628 = vunpack.c.h.b16 %v1295
        %v3629 = vunpack.c.l.b16 %v1296
        %v3630 = vunpack.c.h.b16 %v1296
        %v3631 = vunpack.c.l.b16 %v1297
        %v3632 = vunpack.c.h.b16 %v1297
        %v3633 = vunpack.c.l.b16 %v1298
        %v3634 = vunpack.c.h.b16 %v1298
        %v3635 = vunpack.c.l.b16 %v1299
        %v3636 = vunpack.c.h.b16 %v1299
        %v3637 = vunpack.c.l.b16 %v1300
        %v3638 = vunpack.c.h.b16 %v1300
        %v3639 = vunpack.c.l.b16 %v1301
        %v3640 = vunpack.c.h.b16 %v1301
        %v3641 = vunpack.c.l.b16 %v1302
        %v3642 = vunpack.c.h.b16 %v1302
        %v3643 = vunpack.c.l.b16 %v1303
        %v3644 = vunpack.c.h.b16 %v1303
        %v3645 = vunpack.c.l.b16 %v1304
        %v3646 = vunpack.c.h.b16 %v1304
        %v3647 = vunpack.c.l.b16 %v1305
        %v3648 = vunpack.c.h.b16 %v1305
        %v3649 = vunpack.c.l.b16 %v1306
        %v3650 = vunpack.c.h.b16 %v1306
        %v3651 = vunpack.c.l.b16 %v1307
        %v3652 = vunpack.c.h.b16 %v1307
        %v3653 = vunpack.c.l.b16 %v1308
        %v3654 = vunpack.c.h.b16 %v1308
        %v3655 = vunpack.c.l.b16 %v1309
        %v3656 = vunpack.c.h.b16 %v1309
        %v3657 = vunpack.c.l.b16 %v1310
        %v3658 = vunpack.c.h.b16 %v1310
        %v3659 = vunpack.c.l.b16 %v1311
        %v3660 = vunpack.c.h.b16 %v1311
        %v3661 = vunpack.c.l.b16 %v1312
        %v3662 = vunpack.c.h.b16 %v1312
        %v3663 = vunpack.c.l.b16 %v1313
        %v3664 = vunpack.c.h.b16 %v1313
        %v3665 = vunpack.c.l.b16 %v1314
        %v3666 = vunpack.c.h.b16 %v1314
        %v3667 = vunpack.c.l.b16 %v1315
        %v3668 = vunpack.c.h.b16 %v1315
        %v3669 = vunpack.c.l.b16 %v1316
        %v3670 = vunpack.c.h.b16 %v1316
        %v3671 = vunpack.c.l.b16 %v1317
        %v3672 = vunpack.c.h.b16 %v1317
        %v3673 = vunpack.c.l.b16 %v1318
        %v3674 = vunpack.c.h.b16 %v1318
        %v3675 = vunpack.c.l.b16 %v1319
        %v3676 = vunpack.c.h.b16 %v1319
        %v3677 = vunpack.c.l.b16 %v1320
        %v3678 = vunpack.c.h.b16 %v1320
        %v3679 = vunpack.c.l.b16 %v1321
        %v3680 = vunpack.c.h.b16 %v1321
        %v3681 = vunpack.c.l.b16 %v1322
        %v3682 = vunpack.c.h.b16 %v1322
        %v3683 = vunpack.c.l.b16 %v1323
        %v3684 = vunpack.c.h.b16 %v1323
        %v3685 = vunpack.c.l.b16 %v1324
        %v3686 = vunpack.c.h.b16 %v1324
        %v3687 = vunpack.c.l.b16 %v1325
        %v3688 = vunpack.c.h.b16 %v1325
        %v3689 = vunpack.c.l.b16 %v1326
        %v3690 = vunpack.c.h.b16 %v1326
        %v3691 = vunpack.c.l.b16 %v1327
        %v3692 = vunpack.c.h.b16 %v1327
        %v3693 = vunpack.c.l.b16 %v1328
        %v3694 = vunpack.c.h.b16 %v1328
        %v3695 = vunpack.c.l.b16 %v1329
        %v3696 = vunpack.c.h.b16 %v1329
        %v3697 = vunpack.c.l.b16 %v1330
        %v3698 = vunpack.c.h.b16 %v1330
        %v3699 = vunpack.c.l.b16 %v1331
        %v3700 = vunpack.c.h.b16 %v1331
        %v3701 = vunpack.c.l.b16 %v1332
        %v3702 = vunpack.c.h.b16 %v1332
        %v3703 = vunpack.c.l.b16 %v1333
        %v3704 = vunpack.c.h.b16 %v1333
        %v3705 = vunpack.c.l.b16 %v1334
        %v3706 = vunpack.c.h.b16 %v1334
        %v3707 = vunpack.c.l.b16 %v1335
        %v3708 = vunpack.c.h.b16 %v1335
        %v3709 = vunpack.c.l.b16 %v1336
        %v3710 = vunpack.c.h.b16 %v1336
        %v3711 = vunpack.c.l.b16 %v1337
        %v3712 = vunpack.c.h.b16 %v1337
        %v3713 = vunpack.c.l.b16 %v1338
        %v3714 = vunpack.c.h.b16 %v1338
        %v3715 = vunpack.c.l.b16 %v1339
        %v3716 = vunpack.c.h.b16 %v1339
        %v3717 = vunpack.c.l.b16 %v1340
        %v3718 = vunpack.c.h.b16 %v1340
        %v3719 = vunpack.c.l.b16 %v1341
        %v3720 = vunpack.c.h.b16 %v1341
        %v3721 = vunpack.c.l.b16 %v1342
        %v3722 = vunpack.c.h.b16 %v1342
        %v3723 = vunpack.c.l.b16 %v1343
        %v3724 = vunpack.c.h.b16 %v1343
        %v3725 = vunpack.c.l.b16 %v1344
        %v3726 = vunpack.c.h.b16 %v1344
        %v3727 = vunpack.c.l.b16 %v1345
        %v3728 = vunpack.c.h.b16 %v1345
        %v3729 = vunpack.c.l.b16 %v1346
        %v3730 = vunpack.c.h.b16 %v1346
        %v3731 = vunpack.c.l.b16 %v1347
        %v3732 = vunpack.c.h.b16 %v1347
        %v3733 = vunpack.c.l.b16 %v1348
        %v3734 = vunpack.c.h.b16 %v1348
        %v3735 = vunpack.c.l.b16 %v1349
        %v3736 = vunpack.c.h.b16 %v1349
        %v3737 = vunpack.c.l.b16 %v1350
        %v3738 = vunpack.c.h.b16 %v1350
        %v3739 = vunpack.c.l.b16 %v1351
        %v3740 = vunpack.c.h.b16 %v1351
        %v3741 = vunpack.c.l.b16 %v1352
        %v3742 = vunpack.c.h.b16 %v1352
        %v3743 = vunpack.c.l.b16 %v1353
        %v3744 = vunpack.c.h.b16 %v1353
        %v3745 = vunpack.c.l.b16 %v1354
        %v3746 = vunpack.c.h.b16 %v1354
        %v3747 = vunpack.c.l.b16 %v1355
        %v3748 = vunpack.c.h.b16 %v1355
        %v3749 = vunpack.c.l.b16 %v1356
        %v3750 = vunpack.c.h.b16 %v1356
        %v3751 = vunpack.c.l.b16 %v1357
        %v3752 = vunpack.c.h.b16 %v1357
        %v3753 = vunpack.c.l.b16 %v1358
        %v3754 = vunpack.c.h.b16 %v1358
        %v3755 = vunpack.c.l.b16 %v1359
        %v3756 = vunpack.c.h.b16 %v1359
        %v3757 = vunpack.c.l.b16 %v1360
        %v3758 = vunpack.c.h.b16 %v1360
        %v3759 = vunpack.c.l.b16 %v1361
        %v3760 = vunpack.c.h.b16 %v1361
        %v3761 = vunpack.c.l.b16 %v1362
        %v3762 = vunpack.c.h.b16 %v1362
        %v3763 = vunpack.c.l.b16 %v1363
        %v3764 = vunpack.c.h.b16 %v1363
        %v3765 = vunpack.c.l.b16 %v1364
        %v3766 = vunpack.c.h.b16 %v1364
        %v3767 = vunpack.c.l.b16 %v1365
        %v3768 = vunpack.c.h.b16 %v1365
        %v3769 = vunpack.c.l.b16 %v1366
        %v3770 = vunpack.c.h.b16 %v1366
        %v3771 = vunpack.c.l.b16 %v1367
        %v3772 = vunpack.c.h.b16 %v1367
        %v3773 = vunpack.c.l.b16 %v1368
        %v3774 = vunpack.c.h.b16 %v1368
        %v3775 = vunpack.c.l.b16 %v1369
        %v3776 = vunpack.c.h.b16 %v1369
        %v3777 = vunpack.c.l.b16 %v1370
        %v3778 = vunpack.c.h.b16 %v1370
        %v3779 = vunpack.c.l.b16 %v1371
        %v3780 = vunpack.c.h.b16 %v1371
        %v3781 = vunpack.c.l.b16 %v1372
        %v3782 = vunpack.c.h.b16 %v1372
        %v3783 = vunpack.c.l.b16 %v1373
        %v3784 = vunpack.c.h.b16 %v1373
        %v3785 = vunpack.c.l.b16 %v1374
        %v3786 = vunpack.c.h.b16 %v1374
        %v3787 = vunpack.c.l.b16 %v1375
        %v3788 = vunpack.c.h.b16 %v1375
        %v3789 = vunpack.c.l.b16 %v1376
        %v3790 = vunpack.c.h.b16 %v1376
        %v3791 = vunpack.c.l.b16 %v1377
        %v3792 = vunpack.c.h.b16 %v1377
        %v3793 = vunpack.c.l.b16 %v1378
        %v3794 = vunpack.c.h.b16 %v1378
        %v3795 = vunpack.c.l.b16 %v1379
        %v3796 = vunpack.c.h.b16 %v1379
        %v3797 = vunpack.c.l.b16 %v1380
        %v3798 = vunpack.c.h.b16 %v1380
        %v3799 = vunpack.c.l.b16 %v1381
        %v3800 = vunpack.c.h.b16 %v1381
        %v3801 = vunpack.c.l.b16 %v1382
        %v3802 = vunpack.c.h.b16 %v1382
        %v3803 = vunpack.c.l.b16 %v1383
        %v3804 = vunpack.c.h.b16 %v1383
        %v3805 = vunpack.c.l.b16 %v1384
        %v3806 = vunpack.c.h.b16 %v1384
        %v3807 = vunpack.c.l.b16 %v1385
        %v3808 = vunpack.c.h.b16 %v1385
        %v3809 = vunpack.c.l.b16 %v1386
        %v3810 = vunpack.c.h.b16 %v1386
        %v3811 = vunpack.c.l.b16 %v1387
        %v3812 = vunpack.c.h.b16 %v1387
        %v3813 = vunpack.c.l.b16 %v1388
        %v3814 = vunpack.c.h.b16 %v1388
        %v3815 = vunpack.c.l.b16 %v1389
        %v3816 = vunpack.c.h.b16 %v1389
        %v3817 = vunpack.c.l.b16 %v1390
        %v3818 = vunpack.c.h.b16 %v1390
        %v3819 = vunpack.c.l.b16 %v1391
        %v3820 = vunpack.c.h.b16 %v1391
        %v3821 = vunpack.c.l.b16 %v1392
        %v3822 = vunpack.c.h.b16 %v1392
        %v3823 = vunpack.c.l.b16 %v1393
        %v3824 = vunpack.c.h.b16 %v1393
        %v3825 = vpack.c.b16 %v3445, %v3441
        %v3826 = vpack.c.b16 %v3446, %v3442
        %v3827 = vpack.c.b16 %v3447, %v3443
        %v3828 = vpack.c.b16 %v3448, %v3444
        %v3829 = vpack.c.b16 %v3453, %v3449
        %v3830 = vpack.c.b16 %v3454, %v3450
        %v3831 = vpack.c.b16 %v3455, %v3451
        %v3832 = vpack.c.b16 %v3456, %v3452
        %v3833 = vpack.c.b16 %v3461, %v3457
        %v3834 = vpack.c.b16 %v3462, %v3458
        %v3835 = vpack.c.b16 %v3463, %v3459
        %v3836 = vpack.c.b16 %v3464, %v3460
        %v3837 = vpack.c.b16 %v3469, %v3465
        %v3838 = vpack.c.b16 %v3470, %v3466
        %v3839 = vpack.c.b16 %v3471, %v3467
        %v3840 = vpack.c.b16 %v3472, %v3468
        %v3841 = vpack.c.b16 %v3477, %v3473
        %v3842 = vpack.c.b16 %v3478, %v3474
        %v3843 = vpack.c.b16 %v3479, %v3475
        %v3844 = vpack.c.b16 %v3480, %v3476
        %v3845 = vpack.c.b16 %v3485, %v3481
        %v3846 = vpack.c.b16 %v3486, %v3482
        %v3847 = vpack.c.b16 %v3487, %v3483
        %v3848 = vpack.c.b16 %v3488, %v3484
        %v3849 = vpack.c.b16 %v3493, %v3489
        %v3850 = vpack.c.b16 %v3494, %v3490
        %v3851 = vpack.c.b16 %v3495, %v3491
        %v3852 = vpack.c.b16 %v3496, %v3492
        %v3853 = vpack.c.b16 %v3501, %v3497
        %v3854 = vpack.c.b16 %v3502, %v3498
        %v3855 = vpack.c.b16 %v3503, %v3499
        %v3856 = vpack.c.b16 %v3504, %v3500
        %v3857 = vpack.c.b16 %v3509, %v3505
        %v3858 = vpack.c.b16 %v3510, %v3506
        %v3859 = vpack.c.b16 %v3511, %v3507
        %v3860 = vpack.c.b16 %v3512, %v3508
        %v3861 = vpack.c.b16 %v3517, %v3513
        %v3862 = vpack.c.b16 %v3518, %v3514
        %v3863 = vpack.c.b16 %v3519, %v3515
        %v3864 = vpack.c.b16 %v3520, %v3516
        %v3865 = vpack.c.b16 %v3525, %v3521
        %v3866 = vpack.c.b16 %v3526, %v3522
        %v3867 = vpack.c.b16 %v3527, %v3523
        %v3868 = vpack.c.b16 %v3528, %v3524
        %v3869 = vpack.c.b16 %v3533, %v3529
        %v3870 = vpack.c.b16 %v3534, %v3530
        %v3871 = vpack.c.b16 %v3535, %v3531
        %v3872 = vpack.c.b16 %v3536, %v3532
        %v3873 = vpack.c.b16 %v3541, %v3537
        %v3874 = vpack.c.b16 %v3542, %v3538
        %v3875 = vpack.c.b16 %v3543, %v3539
        %v3876 = vpack.c.b16 %v3544, %v3540
        %v3877 = vpack.c.b16 %v3549, %v3545
        %v3878 = vpack.c.b16 %v3550, %v3546
        %v3879 = vpack.c.b16 %v3551, %v3547
        %v3880 = vpack.c.b16 %v3552, %v3548
        %v3881 = vpack.c.b16 %v3557, %v3553
        %v3882 = vpack.c.b16 %v3558, %v3554
        %v3883 = vpack.c.b16 %v3559, %v3555
        %v3884 = vpack.c.b16 %v3560, %v3556
        %v3885 = vpack.c.b16 %v3565, %v3561
        %v3886 = vpack.c.b16 %v3566, %v3562
        %v3887 = vpack.c.b16 %v3567, %v3563
        %v3888 = vpack.c.b16 %v3568, %v3564
        %v3889 = vpack.c.b16 %v3573, %v3569
        %v3890 = vpack.c.b16 %v3574, %v3570
        %v3891 = vpack.c.b16 %v3575, %v3571
        %v3892 = vpack.c.b16 %v3576, %v3572
        %v3893 = vpack.c.b16 %v3581, %v3577
        %v3894 = vpack.c.b16 %v3582, %v3578
        %v3895 = vpack.c.b16 %v3583, %v3579
        %v3896 = vpack.c.b16 %v3584, %v3580
        %v3897 = vpack.c.b16 %v3589, %v3585
        %v3898 = vpack.c.b16 %v3590, %v3586
        %v3899 = vpack.c.b16 %v3591, %v3587
        %v3900 = vpack.c.b16 %v3592, %v3588
        %v3901 = vpack.c.b16 %v3597, %v3593
        %v3902 = vpack.c.b16 %v3598, %v3594
        %v3903 = vpack.c.b16 %v3599, %v3595
        %v3904 = vpack.c.b16 %v3600, %v3596
        %v3905 = vpack.c.b16 %v3605, %v3601
        %v3906 = vpack.c.b16 %v3606, %v3602
        %v3907 = vpack.c.b16 %v3607, %v3603
        %v3908 = vpack.c.b16 %v3608, %v3604
        %v3909 = vpack.c.b16 %v3613, %v3609
        %v3910 = vpack.c.b16 %v3614, %v3610
        %v3911 = vpack.c.b16 %v3615, %v3611
        %v3912 = vpack.c.b16 %v3616, %v3612
        %v3913 = vpack.c.b16 %v3621, %v3617
        %v3914 = vpack.c.b16 %v3622, %v3618
        %v3915 = vpack.c.b16 %v3623, %v3619
        %v3916 = vpack.c.b16 %v3624, %v3620
        %v3917 = vpack.c.b16 %v3629, %v3625
        %v3918 = vpack.c.b16 %v3630, %v3626
        %v3919 = vpack.c.b16 %v3631, %v3627
        %v3920 = vpack.c.b16 %v3632, %v3628
        %v3921 = vpack.c.b16 %v3637, %v3633
        %v3922 = vpack.c.b16 %v3638, %v3634
        %v3923 = vpack.c.b16 %v3639, %v3635
        %v3924 = vpack.c.b16 %v3640, %v3636
        %v3925 = vpack.c.b16 %v3645, %v3641
        %v3926 = vpack.c.b16 %v3646, %v3642
        %v3927 = vpack.c.b16 %v3647, %v3643
        %v3928 = vpack.c.b16 %v3648, %v3644
        %v3929 = vpack.c.b16 %v3653, %v3649
        %v3930 = vpack.c.b16 %v3654, %v3650
        %v3931 = vpack.c.b16 %v3655, %v3651
        %v3932 = vpack.c.b16 %v3656, %v3652
        %v3933 = vpack.c.b16 %v3661, %v3657
        %v3934 = vpack.c.b16 %v3662, %v3658
        %v3935 = vpack.c.b16 %v3663, %v3659
        %v3936 = vpack.c.b16 %v3664, %v3660
        %v3937 = vpack.c.b16 %v3669, %v3665
        %v3938 = vpack.c.b16 %v3670, %v3666
        %v3939 = vpack.c.b16 %v3671, %v3667
        %v3940 = vpack.c.b16 %v3672, %v3668
        %v3941 = vpack.c.b16 %v3677, %v3673
        %v3942 = vpack.c.b16 %v3678, %v3674
        %v3943 = vpack.c.b16 %v3679, %v3675
        %v3944 = vpack.c.b16 %v3680, %v3676
        %v3945 = vpack.c.b16 %v3685, %v3681
        %v3946 = vpack.c.b16 %v3686, %v3682
        %v3947 = vpack.c.b16 %v3687, %v3683
        %v3948 = vpack.c.b16 %v3688, %v3684
        %v3949 = vpack.c.b16 %v3693, %v3689
        %v3950 = vpack.c.b16 %v3694, %v3690
        %v3951 = vpack.c.b16 %v3695, %v3691
        %v3952 = vpack.c.b16 %v3696, %v3692
        %v3953 = vpack.c.b16 %v3701, %v3697
        %v3954 = vpack.c.b16 %v3702, %v3698
        %v3955 = vpack.c.b16 %v3703, %v3699
        %v3956 = vpack.c.b16 %v3704, %v3700
        %v3957 = vpack.c.b16 %v3709, %v3705
        %v3958 = vpack.c.b16 %v3710, %v3706
        %v3959 = vpack.c.b16 %v3711, %v3707
        %v3960 = vpack.c.b16 %v3712, %v3708
        %v3961 = vpack.c.b16 %v3717, %v3713
        %v3962 = vpack.c.b16 %v3718, %v3714
        %v3963 = vpack.c.b16 %v3719, %v3715
        %v3964 = vpack.c.b16 %v3720, %v3716
        %v3965 = vpack.c.b16 %v3725, %v3721
        %v3966 = vpack.c.b16 %v3726, %v3722
        %v3967 = vpack.c.b16 %v3727, %v3723
        %v3968 = vpack.c.b16 %v3728, %v3724
        %v3969 = vpack.c.b16 %v3733, %v3729
        %v3970 = vpack.c.b16 %v3734, %v3730
        %v3971 = vpack.c.b16 %v3735, %v3731
        %v3972 = vpack.c.b16 %v3736, %v3732
        %v3973 = vpack.c.b16 %v3741, %v3737
        %v3974 = vpack.c.b16 %v3742, %v3738
        %v3975 = vpack.c.b16 %v3743, %v3739
        %v3976 = vpack.c.b16 %v3744, %v3740
        %v3977 = vpack.c.b16 %v3749, %v3745
        %v3978 = vpack.c.b16 %v3750, %v3746
        %v3979 = vpack.c.b16 %v3751, %v3747
        %v3980 = vpack.c.b16 %v3752, %v3748
        %v3981 = vpack.c.b16 %v3757, %v3753
        %v3982 = vpack.c.b16 %v3758, %v3754
        %v3983 = vpack.c.b16 %v3759, %v3755
        %v3984 = vpack.c.b16 %v3760, %v3756
        %v3985 = vpack.c.b16 %v3765, %v3761
        %v3986 = vpack.c.b16 %v3766, %v3762
        %v3987 = vpack.c.b16 %v3767, %v3763
        %v3988 = vpack.c.b16 %v3768, %v3764
        %v3989 = vpack.c.b16 %v3773, %v3769
        %v3990 = vpack.c.b16 %v3774, %v3770
        %v3991 = vpack.c.b16 %v3775, %v3771
        %v3992 = vpack.c.b16 %v3776, %v3772
        %v3993 = vpack.c.b16 %v3781, %v3777
        %v3994 = vpack.c.b16 %v3782, %v3778
        %v3995 = vpack.c.b16 %v3783, %v3779
        %v3996 = vpack.c.b16 %v3784, %v3780
        %v3997 = vpack.c.b16 %v3789, %v3785
        %v3998 = vpack.c.b16 %v3790, %v3786
        %v3999 = vpack.c.b16 %v3791, %v3787
        %v4000 = vpack.c.b16 %v3792, %v3788
        %v4001 = vpack.c.b16 %v3797, %v3793
        %v4002 = vpack.c.b16 %v3798, %v3794
        %v4003 = vpack.c.b16 %v3799, %v3795
        %v4004 = vpack.c.b16 %v3800, %v3796
        %v4005 = vpack.c.b16 %v3805, %v3801
        %v4006 = vpack.c.b16 %v3806, %v3802
        %v4007 = vpack.c.b16 %v3807, %v3803
        %v4008 = vpack.c.b16 %v3808, %v3804
        %v4009 = vpack.c.b16 %v3813, %v3809
        %v4010 = vpack.c.b16 %v3814, %v3810
        %v4011 = vpack.c.b16 %v3815, %v3811
        %v4012 = vpack.c.b16 %v3816, %v3812
        %v4013 = vpack.c.b16 %v3821, %v3817
        %v4014 = vpack.c.b16 %v3822, %v3818
        %v4015 = vpack.c.b16 %v3823, %v3819
        %v4016 = vpack.c.b16 %v3824, %v3820
        %4209 = vmatprep.subr.bf16.mxu0 %v3854
        %4210 = vmatpush1.bf16.msra.mxu0 %v3853
        %4211 = vmatprep.subr.bf16.mxu0 %v3850
        %4212 = vmatpush1.bf16.msra.mxu0 %v3849
        %4213 = vmatprep.subr.bf16.mxu0 %v3846
        %4214 = vmatpush1.bf16.msra.mxu0 %v3845
        %4215 = vmatprep.subr.bf16.mxu0 %v3842
        %4216 = vmatpush1.bf16.msra.mxu0 %v3841
        %4217 = vmatprep.subr.bf16.mxu0 %v3838
        %4218 = vmatpush1.bf16.msra.mxu0 %v3837
        %4219 = vmatprep.subr.bf16.mxu0 %v3834
        %4220 = vmatpush1.bf16.msra.mxu0 %v3833
        %4221 = vmatprep.subr.bf16.mxu0 %v3830
        %4222 = vmatpush1.bf16.msra.mxu0 %v3829
        %4223 = vmatprep.subr.bf16.mxu0 %v3826
        %4224 = vmatpush1.bf16.msra.mxu0 %v3825
        %4225 = vmatprep.subr.bf16.mxu0 %v3886
        %4226 = vmatpush2.bf16.msra.mxu0 %v3885
        %4227 = vmatprep.subr.bf16.mxu0 %v3882
        %4228 = vmatpush2.bf16.msra.mxu0 %v3881
        %4229 = vmatprep.subr.bf16.mxu0 %v3878
        %4230 = vmatpush2.bf16.msra.mxu0 %v3877
        %4231 = vmatprep.subr.bf16.mxu0 %v3874
        %4232 = vmatpush2.bf16.msra.mxu0 %v3873
        %4233 = vmatprep.subr.bf16.mxu0 %v3870
        %4234 = vmatpush2.bf16.msra.mxu0 %v3869
        %4235 = vmatprep.subr.bf16.mxu0 %v3866
        %4236 = vmatpush2.bf16.msra.mxu0 %v3865
        %4237 = vmatprep.subr.bf16.mxu0 %v3862
        %4238 = vmatpush2.bf16.msra.mxu0 %v3861
        %4239 = vmatprep.subr.bf16.mxu0 %v3858
        %4240 = vmatpush2.bf16.msra.mxu0 %v3857
        %4241 = vmatprep.mubr.bf16.mxu0 %v3202
        %4242 = vmatmul.mubr.bf16.gmra.mxu0 %v3201
        %v4243 = vpop.f32.mrf.mxu0
        %v4244 = vadd.f32 %v2872, %v4243
        %v4245 = vpop.f32.mrf.mxu0
        %v4246 = vadd.f32 %v2874, %v4245
        %v4247 = vpop.f32.mrf.mxu0
        %v4248 = vadd.f32 %v2876, %v4247
        %v4249 = vpop.f32.mrf.mxu0
        %v4250 = vadd.f32 %v2878, %v4249
        %4251 = vmatprep.mubr.bf16.mxu0 %v3208
        %4252 = vmatmul.mubr.bf16.gmra.mxu0 %v3207
        %v4253 = vpop.f32.mrf.mxu0
        %v4254 = vadd.f32 %v2882, %v4253
        %v4255 = vpop.f32.mrf.mxu0
        %v4256 = vadd.f32 %v2884, %v4255
        %v4257 = vpop.f32.mrf.mxu0
        %v4258 = vadd.f32 %v2886, %v4257
        %v4259 = vpop.f32.mrf.mxu0
        %v4260 = vadd.f32 %v2888, %v4259
        %4261 = vmatprep.mubr.bf16.mxu0 %v3214
        %4262 = vmatmul.mubr.bf16.gmra.mxu0 %v3213
        %v4263 = vpop.f32.mrf.mxu0
        %v4264 = vadd.f32 %v2892, %v4263
        %v4265 = vpop.f32.mrf.mxu0
        %v4266 = vadd.f32 %v2894, %v4265
        %v4267 = vpop.f32.mrf.mxu0
        %v4268 = vadd.f32 %v2896, %v4267
        %v4269 = vpop.f32.mrf.mxu0
        %v4270 = vadd.f32 %v2898, %v4269
        %4271 = vmatprep.mubr.bf16.mxu0 %v3220
        %4272 = vmatmul.mubr.bf16.gmra.mxu0 %v3219
        %v4273 = vpop.f32.mrf.mxu0
        %v4274 = vadd.f32 %v2902, %v4273
        %v4275 = vpop.f32.mrf.mxu0
        %v4276 = vadd.f32 %v2904, %v4275
        %v4277 = vpop.f32.mrf.mxu0
        %v4278 = vadd.f32 %v2906, %v4277
        %v4279 = vpop.f32.mrf.mxu0
        %v4280 = vadd.f32 %v2908, %v4279
        %4281 = vdwg.mxu0
        %4282 = vmatprep.subr.bf16.mxu0 %v3918
        %4283 = vmatpush1.bf16.msra.mxu0 %v3917
        %4284 = vmatprep.subr.bf16.mxu0 %v3914
        %4285 = vmatpush1.bf16.msra.mxu0 %v3913
        %4286 = vmatprep.subr.bf16.mxu0 %v3910
        %4287 = vmatpush1.bf16.msra.mxu0 %v3909
        %4288 = vmatprep.subr.bf16.mxu0 %v3906
        %4289 = vmatpush1.bf16.msra.mxu0 %v3905
        %4290 = vmatprep.subr.bf16.mxu0 %v3902
        %4291 = vmatpush1.bf16.msra.mxu0 %v3901
        %4292 = vmatprep.subr.bf16.mxu0 %v3898
        %4293 = vmatpush1.bf16.msra.mxu0 %v3897
        %4294 = vmatprep.subr.bf16.mxu0 %v3894
        %4295 = vmatpush1.bf16.msra.mxu0 %v3893
        %4296 = vmatprep.subr.bf16.mxu0 %v3890
        %4297 = vmatpush1.bf16.msra.mxu0 %v3889
        %4298 = vmatprep.subr.bf16.mxu0 %v3950
        %4299 = vmatpush2.bf16.msra.mxu0 %v3949
        %4300 = vmatprep.subr.bf16.mxu0 %v3946
        %4301 = vmatpush2.bf16.msra.mxu0 %v3945
        %4302 = vmatprep.subr.bf16.mxu0 %v3942
        %4303 = vmatpush2.bf16.msra.mxu0 %v3941
        %4304 = vmatprep.subr.bf16.mxu0 %v3938
        %4305 = vmatpush2.bf16.msra.mxu0 %v3937
        %4306 = vmatprep.subr.bf16.mxu0 %v3934
        %4307 = vmatpush2.bf16.msra.mxu0 %v3933
        %4308 = vmatprep.subr.bf16.mxu0 %v3930
        %4309 = vmatpush2.bf16.msra.mxu0 %v3929
        %4310 = vmatprep.subr.bf16.mxu0 %v3926
        %4311 = vmatpush2.bf16.msra.mxu0 %v3925
        %4312 = vmatprep.subr.bf16.mxu0 %v3922
        %4313 = vmatpush2.bf16.msra.mxu0 %v3921
        %4314 = vmatprep.mubr.bf16.mxu0 %v3204
        %4315 = vmatmul.mubr.bf16.gmra.mxu0 %v3203
        %v4316 = vpop.f32.mrf.mxu0
        %v4317 = vadd.f32 %v4244, %v4316
        %v4318 = vpop.f32.mrf.mxu0
        %v4319 = vadd.f32 %v4246, %v4318
        %v4320 = vpop.f32.mrf.mxu0
        %v4321 = vadd.f32 %v4248, %v4320
        %v4322 = vpop.f32.mrf.mxu0
        %v4323 = vadd.f32 %v4250, %v4322
        %4324 = vmatprep.mubr.bf16.mxu0 %v3210
        %4325 = vmatmul.mubr.bf16.gmra.mxu0 %v3209
        %v4326 = vpop.f32.mrf.mxu0
        %v4327 = vadd.f32 %v4254, %v4326
        %v4328 = vpop.f32.mrf.mxu0
        %v4329 = vadd.f32 %v4256, %v4328
        %v4330 = vpop.f32.mrf.mxu0
        %v4331 = vadd.f32 %v4258, %v4330
        %v4332 = vpop.f32.mrf.mxu0
        %v4333 = vadd.f32 %v4260, %v4332
        %4334 = vmatprep.mubr.bf16.mxu0 %v3216
        %4335 = vmatmul.mubr.bf16.gmra.mxu0 %v3215
        %v4336 = vpop.f32.mrf.mxu0
        %v4337 = vadd.f32 %v4264, %v4336
        %v4338 = vpop.f32.mrf.mxu0
        %v4339 = vadd.f32 %v4266, %v4338
        %v4340 = vpop.f32.mrf.mxu0
        %v4341 = vadd.f32 %v4268, %v4340
        %v4342 = vpop.f32.mrf.mxu0
        %v4343 = vadd.f32 %v4270, %v4342
        %4344 = vmatprep.mubr.bf16.mxu0 %v3222
        %4345 = vmatmul.mubr.bf16.gmra.mxu0 %v3221
        %v4346 = vpop.f32.mrf.mxu0
        %v4347 = vadd.f32 %v4274, %v4346
        %v4348 = vpop.f32.mrf.mxu0
        %v4349 = vadd.f32 %v4276, %v4348
        %v4350 = vpop.f32.mrf.mxu0
        %v4351 = vadd.f32 %v4278, %v4350
        %v4352 = vpop.f32.mrf.mxu0
        %v4353 = vadd.f32 %v4280, %v4352
        %4354 = vdwg.mxu0
        %4355 = vmatprep.subr.bf16.mxu0 %v3982
        %4356 = vmatpush1.bf16.msra.mxu0 %v3981
        %4357 = vmatprep.subr.bf16.mxu0 %v3978
        %4358 = vmatpush1.bf16.msra.mxu0 %v3977
        %4359 = vmatprep.subr.bf16.mxu0 %v3974
        %4360 = vmatpush1.bf16.msra.mxu0 %v3973
        %4361 = vmatprep.subr.bf16.mxu0 %v3970
        %4362 = vmatpush1.bf16.msra.mxu0 %v3969
        %4363 = vmatprep.subr.bf16.mxu0 %v3966
        %4364 = vmatpush1.bf16.msra.mxu0 %v3965
        %4365 = vmatprep.subr.bf16.mxu0 %v3962
        %4366 = vmatpush1.bf16.msra.mxu0 %v3961
        %4367 = vmatprep.subr.bf16.mxu0 %v3958
        %4368 = vmatpush1.bf16.msra.mxu0 %v3957
        %4369 = vmatprep.subr.bf16.mxu0 %v3954
        %4370 = vmatpush1.bf16.msra.mxu0 %v3953
        %4371 = vmatprep.subr.bf16.mxu0 %v4014
        %4372 = vmatpush2.bf16.msra.mxu0 %v4013
        %4373 = vmatprep.subr.bf16.mxu0 %v4010
        %4374 = vmatpush2.bf16.msra.mxu0 %v4009
        %4375 = vmatprep.subr.bf16.mxu0 %v4006
        %4376 = vmatpush2.bf16.msra.mxu0 %v4005
        %4377 = vmatprep.subr.bf16.mxu0 %v4002
        %4378 = vmatpush2.bf16.msra.mxu0 %v4001
        %4379 = vmatprep.subr.bf16.mxu0 %v3998
        %4380 = vmatpush2.bf16.msra.mxu0 %v3997
        %4381 = vmatprep.subr.bf16.mxu0 %v3994
        %4382 = vmatpush2.bf16.msra.mxu0 %v3993
        %4383 = vmatprep.subr.bf16.mxu0 %v3990
        %4384 = vmatpush2.bf16.msra.mxu0 %v3989
        %4385 = vmatprep.subr.bf16.mxu0 %v3986
        %4386 = vmatpush2.bf16.msra.mxu0 %v3985
        %4387 = vmatprep.mubr.bf16.mxu0 %v3206
        %4388 = vmatmul.mubr.bf16.gmra.mxu0 %v3205
        %v4389 = vpop.f32.mrf.mxu0
        %v4390 = vadd.f32 %v4317, %v4389
        %v4391 = vpop.f32.mrf.mxu0
        %v4392 = vadd.f32 %v4319, %v4391
        %v4393 = vpop.f32.mrf.mxu0
        %v4394 = vadd.f32 %v4321, %v4393
        %v4395 = vpop.f32.mrf.mxu0
        %v4396 = vadd.f32 %v4323, %v4395
        %4397 = vmatprep.mubr.bf16.mxu0 %v3212
        %4398 = vmatmul.mubr.bf16.gmra.mxu0 %v3211
        %v4399 = vpop.f32.mrf.mxu0
        %v4400 = vadd.f32 %v4327, %v4399
        %v4401 = vpop.f32.mrf.mxu0
        %v4402 = vadd.f32 %v4329, %v4401
        %v4403 = vpop.f32.mrf.mxu0
        %v4404 = vadd.f32 %v4331, %v4403
        %v4405 = vpop.f32.mrf.mxu0
        %v4406 = vadd.f32 %v4333, %v4405
        %4407 = vmatprep.mubr.bf16.mxu0 %v3218
        %4408 = vmatmul.mubr.bf16.gmra.mxu0 %v3217
        %v4409 = vpop.f32.mrf.mxu0
        %v4410 = vadd.f32 %v4337, %v4409
        %v4411 = vpop.f32.mrf.mxu0
        %v4412 = vadd.f32 %v4339, %v4411
        %v4413 = vpop.f32.mrf.mxu0
        %v4414 = vadd.f32 %v4341, %v4413
        %v4415 = vpop.f32.mrf.mxu0
        %v4416 = vadd.f32 %v4343, %v4415
        %4417 = vmatprep.mubr.bf16.mxu0 %v3224
        %4418 = vmatmul.mubr.bf16.gmra.mxu0 %v3223
        %v4419 = vpop.f32.mrf.mxu0
        %v4420 = vadd.f32 %v4347, %v4419
        %v4421 = vpop.f32.mrf.mxu0
        %v4422 = vadd.f32 %v4349, %v4421
        %v4423 = vpop.f32.mrf.mxu0
        %v4424 = vadd.f32 %v4351, %v4423
        %v4425 = vpop.f32.mrf.mxu0
        %v4426 = vadd.f32 %v4353, %v4425
        %4427 = vdwg.mxu0
        %4428 = vmatprep.subr.bf16.mxu0 %v3856
        %4429 = vmatpush1.bf16.msra.mxu0 %v3855
        %4430 = vmatprep.subr.bf16.mxu0 %v3852
        %4431 = vmatpush1.bf16.msra.mxu0 %v3851
        %4432 = vmatprep.subr.bf16.mxu0 %v3848
        %4433 = vmatpush1.bf16.msra.mxu0 %v3847
        %4434 = vmatprep.subr.bf16.mxu0 %v3844
        %4435 = vmatpush1.bf16.msra.mxu0 %v3843
        %4436 = vmatprep.subr.bf16.mxu0 %v3840
        %4437 = vmatpush1.bf16.msra.mxu0 %v3839
        %4438 = vmatprep.subr.bf16.mxu0 %v3836
        %4439 = vmatpush1.bf16.msra.mxu0 %v3835
        %4440 = vmatprep.subr.bf16.mxu0 %v3832
        %4441 = vmatpush1.bf16.msra.mxu0 %v3831
        %4442 = vmatprep.subr.bf16.mxu0 %v3828
        %4443 = vmatpush1.bf16.msra.mxu0 %v3827
        %4444 = vmatprep.subr.bf16.mxu0 %v3888
        %4445 = vmatpush2.bf16.msra.mxu0 %v3887
        %4446 = vmatprep.subr.bf16.mxu0 %v3884
        %4447 = vmatpush2.bf16.msra.mxu0 %v3883
        %4448 = vmatprep.subr.bf16.mxu0 %v3880
        %4449 = vmatpush2.bf16.msra.mxu0 %v3879
        %4450 = vmatprep.subr.bf16.mxu0 %v3876
        %4451 = vmatpush2.bf16.msra.mxu0 %v3875
        %4452 = vmatprep.subr.bf16.mxu0 %v3872
        %4453 = vmatpush2.bf16.msra.mxu0 %v3871
        %4454 = vmatprep.subr.bf16.mxu0 %v3868
        %4455 = vmatpush2.bf16.msra.mxu0 %v3867
        %4456 = vmatprep.subr.bf16.mxu0 %v3864
        %4457 = vmatpush2.bf16.msra.mxu0 %v3863
        %4458 = vmatprep.subr.bf16.mxu0 %v3860
        %4459 = vmatpush2.bf16.msra.mxu0 %v3859
        %4460 = vmatprep.mubr.bf16.mxu0 %v3202
        %4461 = vmatmul.mubr.bf16.gmra.mxu0 %v3201
        %v4462 = vpop.f32.mrf.mxu0
        %v4463 = vadd.f32 %v3091, %v4462
        %v4464 = vpop.f32.mrf.mxu0
        %v4465 = vadd.f32 %v3093, %v4464
        %v4466 = vpop.f32.mrf.mxu0
        %v4467 = vadd.f32 %v3095, %v4466
        %v4468 = vpop.f32.mrf.mxu0
        %v4469 = vadd.f32 %v3097, %v4468
        %4470 = vmatprep.mubr.bf16.mxu0 %v3208
        %4471 = vmatmul.mubr.bf16.gmra.mxu0 %v3207
        %v4472 = vpop.f32.mrf.mxu0
        %v4473 = vadd.f32 %v3101, %v4472
        %v4474 = vpop.f32.mrf.mxu0
        %v4475 = vadd.f32 %v3103, %v4474
        %v4476 = vpop.f32.mrf.mxu0
        %v4477 = vadd.f32 %v3105, %v4476
        %v4478 = vpop.f32.mrf.mxu0
        %v4479 = vadd.f32 %v3107, %v4478
        %4480 = vmatprep.mubr.bf16.mxu0 %v3214
        %4481 = vmatmul.mubr.bf16.gmra.mxu0 %v3213
        %v4482 = vpop.f32.mrf.mxu0
        %v4483 = vadd.f32 %v3111, %v4482
        %v4484 = vpop.f32.mrf.mxu0
        %v4485 = vadd.f32 %v3113, %v4484
        %v4486 = vpop.f32.mrf.mxu0
        %v4487 = vadd.f32 %v3115, %v4486
        %v4488 = vpop.f32.mrf.mxu0
        %v4489 = vadd.f32 %v3117, %v4488
        %4490 = vmatprep.mubr.bf16.mxu0 %v3220
        %4491 = vmatmul.mubr.bf16.gmra.mxu0 %v3219
        %v4492 = vpop.f32.mrf.mxu0
        %v4493 = vadd.f32 %v3121, %v4492
        %v4494 = vpop.f32.mrf.mxu0
        %v4495 = vadd.f32 %v3123, %v4494
        %v4496 = vpop.f32.mrf.mxu0
        %v4497 = vadd.f32 %v3125, %v4496
        %v4498 = vpop.f32.mrf.mxu0
        %v4499 = vadd.f32 %v3127, %v4498
        %4500 = vdwg.mxu0
        %4501 = vmatprep.subr.bf16.mxu0 %v3920
        %4502 = vmatpush1.bf16.msra.mxu0 %v3919
        %4503 = vmatprep.subr.bf16.mxu0 %v3916
        %4504 = vmatpush1.bf16.msra.mxu0 %v3915
        %4505 = vmatprep.subr.bf16.mxu0 %v3912
        %4506 = vmatpush1.bf16.msra.mxu0 %v3911
        %4507 = vmatprep.subr.bf16.mxu0 %v3908
        %4508 = vmatpush1.bf16.msra.mxu0 %v3907
        %4509 = vmatprep.subr.bf16.mxu0 %v3904
        %4510 = vmatpush1.bf16.msra.mxu0 %v3903
        %4511 = vmatprep.subr.bf16.mxu0 %v3900
        %4512 = vmatpush1.bf16.msra.mxu0 %v3899
        %4513 = vmatprep.subr.bf16.mxu0 %v3896
        %4514 = vmatpush1.bf16.msra.mxu0 %v3895
        %4515 = vmatprep.subr.bf16.mxu0 %v3892
        %4516 = vmatpush1.bf16.msra.mxu0 %v3891
        %4517 = vmatprep.subr.bf16.mxu0 %v3952
        %4518 = vmatpush2.bf16.msra.mxu0 %v3951
        %4519 = vmatprep.subr.bf16.mxu0 %v3948
        %4520 = vmatpush2.bf16.msra.mxu0 %v3947
        %4521 = vmatprep.subr.bf16.mxu0 %v3944
        %4522 = vmatpush2.bf16.msra.mxu0 %v3943
        %4523 = vmatprep.subr.bf16.mxu0 %v3940
        %4524 = vmatpush2.bf16.msra.mxu0 %v3939
        %4525 = vmatprep.subr.bf16.mxu0 %v3936
        %4526 = vmatpush2.bf16.msra.mxu0 %v3935
        %4527 = vmatprep.subr.bf16.mxu0 %v3932
        %4528 = vmatpush2.bf16.msra.mxu0 %v3931
        %4529 = vmatprep.subr.bf16.mxu0 %v3928
        %4530 = vmatpush2.bf16.msra.mxu0 %v3927
        %4531 = vmatprep.subr.bf16.mxu0 %v3924
        %4532 = vmatpush2.bf16.msra.mxu0 %v3923
        %4533 = vmatprep.mubr.bf16.mxu0 %v3204
        %4534 = vmatmul.mubr.bf16.gmra.mxu0 %v3203
        %v4535 = vpop.f32.mrf.mxu0
        %v4536 = vadd.f32 %v4463, %v4535
        %v4537 = vpop.f32.mrf.mxu0
        %v4538 = vadd.f32 %v4465, %v4537
        %v4539 = vpop.f32.mrf.mxu0
        %v4540 = vadd.f32 %v4467, %v4539
        %v4541 = vpop.f32.mrf.mxu0
        %v4542 = vadd.f32 %v4469, %v4541
        %4543 = vmatprep.mubr.bf16.mxu0 %v3210
        %4544 = vmatmul.mubr.bf16.gmra.mxu0 %v3209
        %v4545 = vpop.f32.mrf.mxu0
        %v4546 = vadd.f32 %v4473, %v4545
        %v4547 = vpop.f32.mrf.mxu0
        %v4548 = vadd.f32 %v4475, %v4547
        %v4549 = vpop.f32.mrf.mxu0
        %v4550 = vadd.f32 %v4477, %v4549
        %v4551 = vpop.f32.mrf.mxu0
        %v4552 = vadd.f32 %v4479, %v4551
        %4553 = vmatprep.mubr.bf16.mxu0 %v3216
        %4554 = vmatmul.mubr.bf16.gmra.mxu0 %v3215
        %v4555 = vpop.f32.mrf.mxu0
        %v4556 = vadd.f32 %v4483, %v4555
        %v4557 = vpop.f32.mrf.mxu0
        %v4558 = vadd.f32 %v4485, %v4557
        %v4559 = vpop.f32.mrf.mxu0
        %v4560 = vadd.f32 %v4487, %v4559
        %v4561 = vpop.f32.mrf.mxu0
        %v4562 = vadd.f32 %v4489, %v4561
        %4563 = vmatprep.mubr.bf16.mxu0 %v3222
        %4564 = vmatmul.mubr.bf16.gmra.mxu0 %v3221
        %v4565 = vpop.f32.mrf.mxu0
        %v4566 = vadd.f32 %v4493, %v4565
        %v4567 = vpop.f32.mrf.mxu0
        %v4568 = vadd.f32 %v4495, %v4567
        %v4569 = vpop.f32.mrf.mxu0
        %v4570 = vadd.f32 %v4497, %v4569
        %v4571 = vpop.f32.mrf.mxu0
        %v4572 = vadd.f32 %v4499, %v4571
        %4573 = vdwg.mxu0
        %4574 = vmatprep.subr.bf16.mxu0 %v3984
        %4575 = vmatpush1.bf16.msra.mxu0 %v3983
        %4576 = vmatprep.subr.bf16.mxu0 %v3980
        %4577 = vmatpush1.bf16.msra.mxu0 %v3979
        %4578 = vmatprep.subr.bf16.mxu0 %v3976
        %4579 = vmatpush1.bf16.msra.mxu0 %v3975
        %4580 = vmatprep.subr.bf16.mxu0 %v3972
        %4581 = vmatpush1.bf16.msra.mxu0 %v3971
        %4582 = vmatprep.subr.bf16.mxu0 %v3968
        %4583 = vmatpush1.bf16.msra.mxu0 %v3967
        %4584 = vmatprep.subr.bf16.mxu0 %v3964
        %4585 = vmatpush1.bf16.msra.mxu0 %v3963
        %4586 = vmatprep.subr.bf16.mxu0 %v3960
        %4587 = vmatpush1.bf16.msra.mxu0 %v3959
        %4588 = vmatprep.subr.bf16.mxu0 %v3956
        %4589 = vmatpush1.bf16.msra.mxu0 %v3955
        %4590 = vmatprep.subr.bf16.mxu0 %v4016
        %4591 = vmatpush2.bf16.msra.mxu0 %v4015
        %4592 = vmatprep.subr.bf16.mxu0 %v4012
        %4593 = vmatpush2.bf16.msra.mxu0 %v4011
        %4594 = vmatprep.subr.bf16.mxu0 %v4008
        %4595 = vmatpush2.bf16.msra.mxu0 %v4007
        %4596 = vmatprep.subr.bf16.mxu0 %v4004
        %4597 = vmatpush2.bf16.msra.mxu0 %v4003
        %4598 = vmatprep.subr.bf16.mxu0 %v4000
        %4599 = vmatpush2.bf16.msra.mxu0 %v3999
        %4600 = vmatprep.subr.bf16.mxu0 %v3996
        %4601 = vmatpush2.bf16.msra.mxu0 %v3995
        %4602 = vmatprep.subr.bf16.mxu0 %v3992
        %4603 = vmatpush2.bf16.msra.mxu0 %v3991
        %4604 = vmatprep.subr.bf16.mxu0 %v3988
        %4605 = vmatpush2.bf16.msra.mxu0 %v3987
        %4606 = vmatprep.mubr.bf16.mxu0 %v3206
        %4607 = vmatmul.mubr.bf16.gmra.mxu0 %v3205
        %v4608 = vpop.f32.mrf.mxu0
        %v4609 = vadd.f32 %v4536, %v4608
        %v4610 = vpop.f32.mrf.mxu0
        %v4611 = vadd.f32 %v4538, %v4610
        %v4612 = vpop.f32.mrf.mxu0
        %v4613 = vadd.f32 %v4540, %v4612
        %v4614 = vpop.f32.mrf.mxu0
        %v4615 = vadd.f32 %v4542, %v4614
        %4616 = vmatprep.mubr.bf16.mxu0 %v3212
        %4617 = vmatmul.mubr.bf16.gmra.mxu0 %v3211
        %v4618 = vpop.f32.mrf.mxu0
        %v4619 = vadd.f32 %v4546, %v4618
        %v4620 = vpop.f32.mrf.mxu0
        %v4621 = vadd.f32 %v4548, %v4620
        %v4622 = vpop.f32.mrf.mxu0
        %v4623 = vadd.f32 %v4550, %v4622
        %v4624 = vpop.f32.mrf.mxu0
        %v4625 = vadd.f32 %v4552, %v4624
        %4626 = vmatprep.mubr.bf16.mxu0 %v3218
        %4627 = vmatmul.mubr.bf16.gmra.mxu0 %v3217
        %v4628 = vpop.f32.mrf.mxu0
        %v4629 = vadd.f32 %v4556, %v4628
        %v4630 = vpop.f32.mrf.mxu0
        %v4631 = vadd.f32 %v4558, %v4630
        %v4632 = vpop.f32.mrf.mxu0
        %v4633 = vadd.f32 %v4560, %v4632
        %v4634 = vpop.f32.mrf.mxu0
        %v4635 = vadd.f32 %v4562, %v4634
        %4636 = vmatprep.mubr.bf16.mxu0 %v3224
        %4637 = vmatmul.mubr.bf16.gmra.mxu0 %v3223
        %v4638 = vpop.f32.mrf.mxu0
        %v4639 = vadd.f32 %v4566, %v4638
        %v4640 = vpop.f32.mrf.mxu0
        %v4641 = vadd.f32 %v4568, %v4640
        %v4642 = vpop.f32.mrf.mxu0
        %v4643 = vadd.f32 %v4570, %v4642
        %v4644 = vpop.f32.mrf.mxu0
        %v4645 = vadd.f32 %v4572, %v4644
        %4646 = vdwg.mxu0
        %s4647 = scalar_lea.vmem [#allocation2], 48
        %v4648 = vld [vmem:[%s4647] sm:$0xff]
        %v4649 = vld [vmem:[%s4647 + $0x8] sm:$0xff]
        %v4650 = vld [vmem:[%s4647 + $0x10] sm:$0xff]
        %v4651 = vld [vmem:[%s4647 + $0x18] sm:$0xff]
        %v4652 = vld [vmem:[%s4647 + $0x20] sm:$0xff]
        %v4653 = vld [vmem:[%s4647 + $0x28] sm:$0xff]
        %v4654 = vld [vmem:[%s4647 + $0x30] sm:$0xff]
        %v4655 = vld [vmem:[%s4647 + $0x38] sm:$0xff]
        %v4656 = vld [vmem:[%s4647 + $0x40] sm:$0xff]
        %v4657 = vld [vmem:[%s4647 + $0x48] sm:$0xff]
        %v4658 = vld [vmem:[%s4647 + $0x50] sm:$0xff]
        %v4659 = vld [vmem:[%s4647 + $0x58] sm:$0xff]
        %v4660 = vld [vmem:[%s4647 + $0x60] sm:$0xff]
        %v4661 = vld [vmem:[%s4647 + $0x68] sm:$0xff]
        %v4662 = vld [vmem:[%s4647 + $0x70] sm:$0xff]
        %v4663 = vld [vmem:[%s4647 + $0x78] sm:$0xff]
        %v4664 = vld [vmem:[%s4647 + $0x80] sm:$0xff]
        %v4665 = vld [vmem:[%s4647 + $0x88] sm:$0xff]
        %v4666 = vld [vmem:[%s4647 + $0x90] sm:$0xff]
        %v4667 = vld [vmem:[%s4647 + $0x98] sm:$0xff]
        %v4668 = vld [vmem:[%s4647 + $0xa0] sm:$0xff]
        %v4669 = vld [vmem:[%s4647 + $0xa8] sm:$0xff]
        %v4670 = vld [vmem:[%s4647 + $0xb0] sm:$0xff]
        %v4671 = vld [vmem:[%s4647 + $0xb8] sm:$0xff]
        %s4672 = scalar_lea.vmem [#allocation9], 3072
        %v4673 = vld [vmem:[%s4672] sm:$0xff]
        %v4674 = vld [vmem:[%s4672 + $0x8] sm:$0xff]
        %v4675 = vld [vmem:[%s4672 + $0x10] sm:$0xff]
        %v4676 = vld [vmem:[%s4672 + $0x18] sm:$0xff]
        %v4677 = vld [vmem:[%s4672 + $0x20] sm:$0xff]
        %v4678 = vld [vmem:[%s4672 + $0x28] sm:$0xff]
        %v4679 = vld [vmem:[%s4672 + $0x30] sm:$0xff]
        %v4680 = vld [vmem:[%s4672 + $0x38] sm:$0xff]
        %v4681 = vld [vmem:[%s4672 + $0x40] sm:$0xff]
        %v4682 = vld [vmem:[%s4672 + $0x48] sm:$0xff]
        %v4683 = vld [vmem:[%s4672 + $0x50] sm:$0xff]
        %v4684 = vld [vmem:[%s4672 + $0x58] sm:$0xff]
        %v4685 = vld [vmem:[%s4672 + $0x60] sm:$0xff]
        %v4686 = vld [vmem:[%s4672 + $0x68] sm:$0xff]
        %v4687 = vld [vmem:[%s4672 + $0x70] sm:$0xff]
        %v4688 = vld [vmem:[%s4672 + $0x78] sm:$0xff]
        %v4689 = vld [vmem:[%s4672 + $0x80] sm:$0xff]
        %v4690 = vld [vmem:[%s4672 + $0x88] sm:$0xff]
        %v4691 = vld [vmem:[%s4672 + $0x90] sm:$0xff]
        %v4692 = vld [vmem:[%s4672 + $0x98] sm:$0xff]
        %v4693 = vld [vmem:[%s4672 + $0xa0] sm:$0xff]
        %v4694 = vld [vmem:[%s4672 + $0xa8] sm:$0xff]
        %v4695 = vld [vmem:[%s4672 + $0xb0] sm:$0xff]
        %v4696 = vld [vmem:[%s4672 + $0xb8] sm:$0xff]
        %v4697 = vld [vmem:[%s4672 + $0xc0] sm:$0xff]
        %v4698 = vld [vmem:[%s4672 + $0xc8] sm:$0xff]
        %v4699 = vld [vmem:[%s4672 + $0xd0] sm:$0xff]
        %v4700 = vld [vmem:[%s4672 + $0xd8] sm:$0xff]
        %v4701 = vld [vmem:[%s4672 + $0xe0] sm:$0xff]
        %v4702 = vld [vmem:[%s4672 + $0xe8] sm:$0xff]
        %v4703 = vld [vmem:[%s4672 + $0xf0] sm:$0xff]
        %v4704 = vld [vmem:[%s4672 + $0xf8] sm:$0xff]
        %v4705 = vld [vmem:[%s4672 + $0x100] sm:$0xff]
        %v4706 = vld [vmem:[%s4672 + $0x108] sm:$0xff]
        %v4707 = vld [vmem:[%s4672 + $0x110] sm:$0xff]
        %v4708 = vld [vmem:[%s4672 + $0x118] sm:$0xff]
        %v4709 = vld [vmem:[%s4672 + $0x120] sm:$0xff]
        %v4710 = vld [vmem:[%s4672 + $0x128] sm:$0xff]
        %v4711 = vld [vmem:[%s4672 + $0x130] sm:$0xff]
        %v4712 = vld [vmem:[%s4672 + $0x138] sm:$0xff]
        %v4713 = vld [vmem:[%s4672 + $0x140] sm:$0xff]
        %v4714 = vld [vmem:[%s4672 + $0x148] sm:$0xff]
        %v4715 = vld [vmem:[%s4672 + $0x150] sm:$0xff]
        %v4716 = vld [vmem:[%s4672 + $0x158] sm:$0xff]
        %v4717 = vld [vmem:[%s4672 + $0x160] sm:$0xff]
        %v4718 = vld [vmem:[%s4672 + $0x168] sm:$0xff]
        %v4719 = vld [vmem:[%s4672 + $0x170] sm:$0xff]
        %v4720 = vld [vmem:[%s4672 + $0x178] sm:$0xff]
        %v4721 = vld [vmem:[%s4672 + $0x180] sm:$0xff]
        %v4722 = vld [vmem:[%s4672 + $0x188] sm:$0xff]
        %v4723 = vld [vmem:[%s4672 + $0x190] sm:$0xff]
        %v4724 = vld [vmem:[%s4672 + $0x198] sm:$0xff]
        %v4725 = vld [vmem:[%s4672 + $0x1a0] sm:$0xff]
        %v4726 = vld [vmem:[%s4672 + $0x1a8] sm:$0xff]
        %v4727 = vld [vmem:[%s4672 + $0x1b0] sm:$0xff]
        %v4728 = vld [vmem:[%s4672 + $0x1b8] sm:$0xff]
        %v4729 = vld [vmem:[%s4672 + $0x1c0] sm:$0xff]
        %v4730 = vld [vmem:[%s4672 + $0x1c8] sm:$0xff]
        %v4731 = vld [vmem:[%s4672 + $0x1d0] sm:$0xff]
        %v4732 = vld [vmem:[%s4672 + $0x1d8] sm:$0xff]
        %v4733 = vld [vmem:[%s4672 + $0x1e0] sm:$0xff]
        %v4734 = vld [vmem:[%s4672 + $0x1e8] sm:$0xff]
        %v4735 = vld [vmem:[%s4672 + $0x1f0] sm:$0xff]
        %v4736 = vld [vmem:[%s4672 + $0x1f8] sm:$0xff]
        %v4737 = vld [vmem:[%s4672 + $0x200] sm:$0xff]
        %v4738 = vld [vmem:[%s4672 + $0x208] sm:$0xff]
        %v4739 = vld [vmem:[%s4672 + $0x210] sm:$0xff]
        %v4740 = vld [vmem:[%s4672 + $0x218] sm:$0xff]
        %v4741 = vld [vmem:[%s4672 + $0x220] sm:$0xff]
        %v4742 = vld [vmem:[%s4672 + $0x228] sm:$0xff]
        %v4743 = vld [vmem:[%s4672 + $0x230] sm:$0xff]
        %v4744 = vld [vmem:[%s4672 + $0x238] sm:$0xff]
        %v4745 = vld [vmem:[%s4672 + $0x240] sm:$0xff]
        %v4746 = vld [vmem:[%s4672 + $0x248] sm:$0xff]
        %v4747 = vld [vmem:[%s4672 + $0x250] sm:$0xff]
        %v4748 = vld [vmem:[%s4672 + $0x258] sm:$0xff]
        %v4749 = vld [vmem:[%s4672 + $0x260] sm:$0xff]
        %v4750 = vld [vmem:[%s4672 + $0x268] sm:$0xff]
        %v4751 = vld [vmem:[%s4672 + $0x270] sm:$0xff]
        %v4752 = vld [vmem:[%s4672 + $0x278] sm:$0xff]
        %v4753 = vld [vmem:[%s4672 + $0x280] sm:$0xff]
        %v4754 = vld [vmem:[%s4672 + $0x288] sm:$0xff]
        %v4755 = vld [vmem:[%s4672 + $0x290] sm:$0xff]
        %v4756 = vld [vmem:[%s4672 + $0x298] sm:$0xff]
        %v4757 = vld [vmem:[%s4672 + $0x2a0] sm:$0xff]
        %v4758 = vld [vmem:[%s4672 + $0x2a8] sm:$0xff]
        %v4759 = vld [vmem:[%s4672 + $0x2b0] sm:$0xff]
        %v4760 = vld [vmem:[%s4672 + $0x2b8] sm:$0xff]
        %v4761 = vld [vmem:[%s4672 + $0x2c0] sm:$0xff]
        %v4762 = vld [vmem:[%s4672 + $0x2c8] sm:$0xff]
        %v4763 = vld [vmem:[%s4672 + $0x2d0] sm:$0xff]
        %v4764 = vld [vmem:[%s4672 + $0x2d8] sm:$0xff]
        %v4765 = vld [vmem:[%s4672 + $0x2e0] sm:$0xff]
        %v4766 = vld [vmem:[%s4672 + $0x2e8] sm:$0xff]
        %v4767 = vld [vmem:[%s4672 + $0x2f0] sm:$0xff]
        %v4768 = vld [vmem:[%s4672 + $0x2f8] sm:$0xff]
        %v4769 = vld [vmem:[%s4672 + $0x300] sm:$0xff]
        %v4770 = vld [vmem:[%s4672 + $0x308] sm:$0xff]
        %v4771 = vld [vmem:[%s4672 + $0x310] sm:$0xff]
        %v4772 = vld [vmem:[%s4672 + $0x318] sm:$0xff]
        %v4773 = vld [vmem:[%s4672 + $0x320] sm:$0xff]
        %v4774 = vld [vmem:[%s4672 + $0x328] sm:$0xff]
        %v4775 = vld [vmem:[%s4672 + $0x330] sm:$0xff]
        %v4776 = vld [vmem:[%s4672 + $0x338] sm:$0xff]
        %v4777 = vld [vmem:[%s4672 + $0x340] sm:$0xff]
        %v4778 = vld [vmem:[%s4672 + $0x348] sm:$0xff]
        %v4779 = vld [vmem:[%s4672 + $0x350] sm:$0xff]
        %v4780 = vld [vmem:[%s4672 + $0x358] sm:$0xff]
        %v4781 = vld [vmem:[%s4672 + $0x360] sm:$0xff]
        %v4782 = vld [vmem:[%s4672 + $0x368] sm:$0xff]
        %v4783 = vld [vmem:[%s4672 + $0x370] sm:$0xff]
        %v4784 = vld [vmem:[%s4672 + $0x378] sm:$0xff]
        %v4785 = vld [vmem:[%s4672 + $0x380] sm:$0xff]
        %v4786 = vld [vmem:[%s4672 + $0x388] sm:$0xff]
        %v4787 = vld [vmem:[%s4672 + $0x390] sm:$0xff]
        %v4788 = vld [vmem:[%s4672 + $0x398] sm:$0xff]
        %v4789 = vld [vmem:[%s4672 + $0x3a0] sm:$0xff]
        %v4790 = vld [vmem:[%s4672 + $0x3a8] sm:$0xff]
        %v4791 = vld [vmem:[%s4672 + $0x3b0] sm:$0xff]
        %v4792 = vld [vmem:[%s4672 + $0x3b8] sm:$0xff]
        %v4793 = vld [vmem:[%s4672 + $0x3c0] sm:$0xff]
        %v4794 = vld [vmem:[%s4672 + $0x3c8] sm:$0xff]
        %v4795 = vld [vmem:[%s4672 + $0x3d0] sm:$0xff]
        %v4796 = vld [vmem:[%s4672 + $0x3d8] sm:$0xff]
        %v4797 = vld [vmem:[%s4672 + $0x3e0] sm:$0xff]
        %v4798 = vld [vmem:[%s4672 + $0x3e8] sm:$0xff]
        %v4799 = vld [vmem:[%s4672 + $0x3f0] sm:$0xff]
        %v4800 = vld [vmem:[%s4672 + $0x3f8] sm:$0xff]
        %v4801 = vld [vmem:[%s4672 + $0x400] sm:$0xff]
        %v4802 = vld [vmem:[%s4672 + $0x408] sm:$0xff]
        %v4803 = vld [vmem:[%s4672 + $0x410] sm:$0xff]
        %v4804 = vld [vmem:[%s4672 + $0x418] sm:$0xff]
        %v4805 = vld [vmem:[%s4672 + $0x420] sm:$0xff]
        %v4806 = vld [vmem:[%s4672 + $0x428] sm:$0xff]
        %v4807 = vld [vmem:[%s4672 + $0x430] sm:$0xff]
        %v4808 = vld [vmem:[%s4672 + $0x438] sm:$0xff]
        %v4809 = vld [vmem:[%s4672 + $0x440] sm:$0xff]
        %v4810 = vld [vmem:[%s4672 + $0x448] sm:$0xff]
        %v4811 = vld [vmem:[%s4672 + $0x450] sm:$0xff]
        %v4812 = vld [vmem:[%s4672 + $0x458] sm:$0xff]
        %v4813 = vld [vmem:[%s4672 + $0x460] sm:$0xff]
        %v4814 = vld [vmem:[%s4672 + $0x468] sm:$0xff]
        %v4815 = vld [vmem:[%s4672 + $0x470] sm:$0xff]
        %v4816 = vld [vmem:[%s4672 + $0x478] sm:$0xff]
        %v4817 = vld [vmem:[%s4672 + $0x480] sm:$0xff]
        %v4818 = vld [vmem:[%s4672 + $0x488] sm:$0xff]
        %v4819 = vld [vmem:[%s4672 + $0x490] sm:$0xff]
        %v4820 = vld [vmem:[%s4672 + $0x498] sm:$0xff]
        %v4821 = vld [vmem:[%s4672 + $0x4a0] sm:$0xff]
        %v4822 = vld [vmem:[%s4672 + $0x4a8] sm:$0xff]
        %v4823 = vld [vmem:[%s4672 + $0x4b0] sm:$0xff]
        %v4824 = vld [vmem:[%s4672 + $0x4b8] sm:$0xff]
        %v4825 = vld [vmem:[%s4672 + $0x4c0] sm:$0xff]
        %v4826 = vld [vmem:[%s4672 + $0x4c8] sm:$0xff]
        %v4827 = vld [vmem:[%s4672 + $0x4d0] sm:$0xff]
        %v4828 = vld [vmem:[%s4672 + $0x4d8] sm:$0xff]
        %v4829 = vld [vmem:[%s4672 + $0x4e0] sm:$0xff]
        %v4830 = vld [vmem:[%s4672 + $0x4e8] sm:$0xff]
        %v4831 = vld [vmem:[%s4672 + $0x4f0] sm:$0xff]
        %v4832 = vld [vmem:[%s4672 + $0x4f8] sm:$0xff]
        %v4833 = vld [vmem:[%s4672 + $0x500] sm:$0xff]
        %v4834 = vld [vmem:[%s4672 + $0x508] sm:$0xff]
        %v4835 = vld [vmem:[%s4672 + $0x510] sm:$0xff]
        %v4836 = vld [vmem:[%s4672 + $0x518] sm:$0xff]
        %v4837 = vld [vmem:[%s4672 + $0x520] sm:$0xff]
        %v4838 = vld [vmem:[%s4672 + $0x528] sm:$0xff]
        %v4839 = vld [vmem:[%s4672 + $0x530] sm:$0xff]
        %v4840 = vld [vmem:[%s4672 + $0x538] sm:$0xff]
        %v4841 = vld [vmem:[%s4672 + $0x540] sm:$0xff]
        %v4842 = vld [vmem:[%s4672 + $0x548] sm:$0xff]
        %v4843 = vld [vmem:[%s4672 + $0x550] sm:$0xff]
        %v4844 = vld [vmem:[%s4672 + $0x558] sm:$0xff]
        %v4845 = vld [vmem:[%s4672 + $0x560] sm:$0xff]
        %v4846 = vld [vmem:[%s4672 + $0x568] sm:$0xff]
        %v4847 = vld [vmem:[%s4672 + $0x570] sm:$0xff]
        %v4848 = vld [vmem:[%s4672 + $0x578] sm:$0xff]
        %v4849 = vld [vmem:[%s4672 + $0x580] sm:$0xff]
        %v4850 = vld [vmem:[%s4672 + $0x588] sm:$0xff]
        %v4851 = vld [vmem:[%s4672 + $0x590] sm:$0xff]
        %v4852 = vld [vmem:[%s4672 + $0x598] sm:$0xff]
        %v4853 = vld [vmem:[%s4672 + $0x5a0] sm:$0xff]
        %v4854 = vld [vmem:[%s4672 + $0x5a8] sm:$0xff]
        %v4855 = vld [vmem:[%s4672 + $0x5b0] sm:$0xff]
        %v4856 = vld [vmem:[%s4672 + $0x5b8] sm:$0xff]
        %v4857 = vld [vmem:[%s4672 + $0x5c0] sm:$0xff]
        %v4858 = vld [vmem:[%s4672 + $0x5c8] sm:$0xff]
        %v4859 = vld [vmem:[%s4672 + $0x5d0] sm:$0xff]
        %v4860 = vld [vmem:[%s4672 + $0x5d8] sm:$0xff]
        %v4861 = vld [vmem:[%s4672 + $0x5e0] sm:$0xff]
        %v4862 = vld [vmem:[%s4672 + $0x5e8] sm:$0xff]
        %v4863 = vld [vmem:[%s4672 + $0x5f0] sm:$0xff]
        %v4864 = vld [vmem:[%s4672 + $0x5f8] sm:$0xff]
        %v4889 = vunpack.c.l.b16 %v4648
        %v4890 = vunpack.c.h.b16 %v4648
        %v4891 = vunpack.c.l.b16 %v4649
        %v4892 = vunpack.c.h.b16 %v4649
        %v4893 = vunpack.c.l.b16 %v4650
        %v4894 = vunpack.c.h.b16 %v4650
        %v4895 = vunpack.c.l.b16 %v4651
        %v4896 = vunpack.c.h.b16 %v4651
        %v4897 = vunpack.c.l.b16 %v4652
        %v4898 = vunpack.c.h.b16 %v4652
        %v4899 = vunpack.c.l.b16 %v4653
        %v4900 = vunpack.c.h.b16 %v4653
        %v4901 = vunpack.c.l.b16 %v4654
        %v4902 = vunpack.c.h.b16 %v4654
        %v4903 = vunpack.c.l.b16 %v4655
        %v4904 = vunpack.c.h.b16 %v4655
        %v4905 = vunpack.c.l.b16 %v4656
        %v4906 = vunpack.c.h.b16 %v4656
        %v4907 = vunpack.c.l.b16 %v4657
        %v4908 = vunpack.c.h.b16 %v4657
        %v4909 = vunpack.c.l.b16 %v4658
        %v4910 = vunpack.c.h.b16 %v4658
        %v4911 = vunpack.c.l.b16 %v4659
        %v4912 = vunpack.c.h.b16 %v4659
        %v4913 = vunpack.c.l.b16 %v4660
        %v4914 = vunpack.c.h.b16 %v4660
        %v4915 = vunpack.c.l.b16 %v4661
        %v4916 = vunpack.c.h.b16 %v4661
        %v4917 = vunpack.c.l.b16 %v4662
        %v4918 = vunpack.c.h.b16 %v4662
        %v4919 = vunpack.c.l.b16 %v4663
        %v4920 = vunpack.c.h.b16 %v4663
        %v4921 = vunpack.c.l.b16 %v4664
        %v4922 = vunpack.c.h.b16 %v4664
        %v4923 = vunpack.c.l.b16 %v4665
        %v4924 = vunpack.c.h.b16 %v4665
        %v4925 = vunpack.c.l.b16 %v4666
        %v4926 = vunpack.c.h.b16 %v4666
        %v4927 = vunpack.c.l.b16 %v4667
        %v4928 = vunpack.c.h.b16 %v4667
        %v4929 = vunpack.c.l.b16 %v4668
        %v4930 = vunpack.c.h.b16 %v4668
        %v4931 = vunpack.c.l.b16 %v4669
        %v4932 = vunpack.c.h.b16 %v4669
        %v4933 = vunpack.c.l.b16 %v4670
        %v4934 = vunpack.c.h.b16 %v4670
        %v4935 = vunpack.c.l.b16 %v4671
        %v4936 = vunpack.c.h.b16 %v4671
        %v4937 = vpack.c.b16 %v4895, %v4889
        %v4938 = vpack.c.b16 %v4896, %v4890
        %v4939 = vpack.c.b16 %v4897, %v4891
        %v4940 = vpack.c.b16 %v4898, %v4892
        %v4941 = vpack.c.b16 %v4899, %v4893
        %v4942 = vpack.c.b16 %v4900, %v4894
        %v4943 = vpack.c.b16 %v4907, %v4901
        %v4944 = vpack.c.b16 %v4908, %v4902
        %v4945 = vpack.c.b16 %v4909, %v4903
        %v4946 = vpack.c.b16 %v4910, %v4904
        %v4947 = vpack.c.b16 %v4911, %v4905
        %v4948 = vpack.c.b16 %v4912, %v4906
        %v4949 = vpack.c.b16 %v4919, %v4913
        %v4950 = vpack.c.b16 %v4920, %v4914
        %v4951 = vpack.c.b16 %v4921, %v4915
        %v4952 = vpack.c.b16 %v4922, %v4916
        %v4953 = vpack.c.b16 %v4923, %v4917
        %v4954 = vpack.c.b16 %v4924, %v4918
        %v4955 = vpack.c.b16 %v4931, %v4925
        %v4956 = vpack.c.b16 %v4932, %v4926
        %v4957 = vpack.c.b16 %v4933, %v4927
        %v4958 = vpack.c.b16 %v4934, %v4928
        %v4959 = vpack.c.b16 %v4935, %v4929
        %v4960 = vpack.c.b16 %v4936, %v4930
        %v5177 = vunpack.c.l.b16 %v4673
        %v5178 = vunpack.c.h.b16 %v4673
        %v5179 = vunpack.c.l.b16 %v4674
        %v5180 = vunpack.c.h.b16 %v4674
        %v5181 = vunpack.c.l.b16 %v4675
        %v5182 = vunpack.c.h.b16 %v4675
        %v5183 = vunpack.c.l.b16 %v4676
        %v5184 = vunpack.c.h.b16 %v4676
        %v5185 = vunpack.c.l.b16 %v4677
        %v5186 = vunpack.c.h.b16 %v4677
        %v5187 = vunpack.c.l.b16 %v4678
        %v5188 = vunpack.c.h.b16 %v4678
        %v5189 = vunpack.c.l.b16 %v4679
        %v5190 = vunpack.c.h.b16 %v4679
        %v5191 = vunpack.c.l.b16 %v4680
        %v5192 = vunpack.c.h.b16 %v4680
        %v5193 = vunpack.c.l.b16 %v4681
        %v5194 = vunpack.c.h.b16 %v4681
        %v5195 = vunpack.c.l.b16 %v4682
        %v5196 = vunpack.c.h.b16 %v4682
        %v5197 = vunpack.c.l.b16 %v4683
        %v5198 = vunpack.c.h.b16 %v4683
        %v5199 = vunpack.c.l.b16 %v4684
        %v5200 = vunpack.c.h.b16 %v4684
        %v5201 = vunpack.c.l.b16 %v4685
        %v5202 = vunpack.c.h.b16 %v4685
        %v5203 = vunpack.c.l.b16 %v4686
        %v5204 = vunpack.c.h.b16 %v4686
        %v5205 = vunpack.c.l.b16 %v4687
        %v5206 = vunpack.c.h.b16 %v4687
        %v5207 = vunpack.c.l.b16 %v4688
        %v5208 = vunpack.c.h.b16 %v4688
        %v5209 = vunpack.c.l.b16 %v4689
        %v5210 = vunpack.c.h.b16 %v4689
        %v5211 = vunpack.c.l.b16 %v4690
        %v5212 = vunpack.c.h.b16 %v4690
        %v5213 = vunpack.c.l.b16 %v4691
        %v5214 = vunpack.c.h.b16 %v4691
        %v5215 = vunpack.c.l.b16 %v4692
        %v5216 = vunpack.c.h.b16 %v4692
        %v5217 = vunpack.c.l.b16 %v4693
        %v5218 = vunpack.c.h.b16 %v4693
        %v5219 = vunpack.c.l.b16 %v4694
        %v5220 = vunpack.c.h.b16 %v4694
        %v5221 = vunpack.c.l.b16 %v4695
        %v5222 = vunpack.c.h.b16 %v4695
        %v5223 = vunpack.c.l.b16 %v4696
        %v5224 = vunpack.c.h.b16 %v4696
        %v5225 = vunpack.c.l.b16 %v4697
        %v5226 = vunpack.c.h.b16 %v4697
        %v5227 = vunpack.c.l.b16 %v4698
        %v5228 = vunpack.c.h.b16 %v4698
        %v5229 = vunpack.c.l.b16 %v4699
        %v5230 = vunpack.c.h.b16 %v4699
        %v5231 = vunpack.c.l.b16 %v4700
        %v5232 = vunpack.c.h.b16 %v4700
        %v5233 = vunpack.c.l.b16 %v4701
        %v5234 = vunpack.c.h.b16 %v4701
        %v5235 = vunpack.c.l.b16 %v4702
        %v5236 = vunpack.c.h.b16 %v4702
        %v5237 = vunpack.c.l.b16 %v4703
        %v5238 = vunpack.c.h.b16 %v4703
        %v5239 = vunpack.c.l.b16 %v4704
        %v5240 = vunpack.c.h.b16 %v4704
        %v5241 = vunpack.c.l.b16 %v4705
        %v5242 = vunpack.c.h.b16 %v4705
        %v5243 = vunpack.c.l.b16 %v4706
        %v5244 = vunpack.c.h.b16 %v4706
        %v5245 = vunpack.c.l.b16 %v4707
        %v5246 = vunpack.c.h.b16 %v4707
        %v5247 = vunpack.c.l.b16 %v4708
        %v5248 = vunpack.c.h.b16 %v4708
        %v5249 = vunpack.c.l.b16 %v4709
        %v5250 = vunpack.c.h.b16 %v4709
        %v5251 = vunpack.c.l.b16 %v4710
        %v5252 = vunpack.c.h.b16 %v4710
        %v5253 = vunpack.c.l.b16 %v4711
        %v5254 = vunpack.c.h.b16 %v4711
        %v5255 = vunpack.c.l.b16 %v4712
        %v5256 = vunpack.c.h.b16 %v4712
        %v5257 = vunpack.c.l.b16 %v4713
        %v5258 = vunpack.c.h.b16 %v4713
        %v5259 = vunpack.c.l.b16 %v4714
        %v5260 = vunpack.c.h.b16 %v4714
        %v5261 = vunpack.c.l.b16 %v4715
        %v5262 = vunpack.c.h.b16 %v4715
        %v5263 = vunpack.c.l.b16 %v4716
        %v5264 = vunpack.c.h.b16 %v4716
        %v5265 = vunpack.c.l.b16 %v4717
        %v5266 = vunpack.c.h.b16 %v4717
        %v5267 = vunpack.c.l.b16 %v4718
        %v5268 = vunpack.c.h.b16 %v4718
        %v5269 = vunpack.c.l.b16 %v4719
        %v5270 = vunpack.c.h.b16 %v4719
        %v5271 = vunpack.c.l.b16 %v4720
        %v5272 = vunpack.c.h.b16 %v4720
        %v5273 = vunpack.c.l.b16 %v4721
        %v5274 = vunpack.c.h.b16 %v4721
        %v5275 = vunpack.c.l.b16 %v4722
        %v5276 = vunpack.c.h.b16 %v4722
        %v5277 = vunpack.c.l.b16 %v4723
        %v5278 = vunpack.c.h.b16 %v4723
        %v5279 = vunpack.c.l.b16 %v4724
        %v5280 = vunpack.c.h.b16 %v4724
        %v5281 = vunpack.c.l.b16 %v4725
        %v5282 = vunpack.c.h.b16 %v4725
        %v5283 = vunpack.c.l.b16 %v4726
        %v5284 = vunpack.c.h.b16 %v4726
        %v5285 = vunpack.c.l.b16 %v4727
        %v5286 = vunpack.c.h.b16 %v4727
        %v5287 = vunpack.c.l.b16 %v4728
        %v5288 = vunpack.c.h.b16 %v4728
        %v5289 = vunpack.c.l.b16 %v4729
        %v5290 = vunpack.c.h.b16 %v4729
        %v5291 = vunpack.c.l.b16 %v4730
        %v5292 = vunpack.c.h.b16 %v4730
        %v5293 = vunpack.c.l.b16 %v4731
        %v5294 = vunpack.c.h.b16 %v4731
        %v5295 = vunpack.c.l.b16 %v4732
        %v5296 = vunpack.c.h.b16 %v4732
        %v5297 = vunpack.c.l.b16 %v4733
        %v5298 = vunpack.c.h.b16 %v4733
        %v5299 = vunpack.c.l.b16 %v4734
        %v5300 = vunpack.c.h.b16 %v4734
        %v5301 = vunpack.c.l.b16 %v4735
        %v5302 = vunpack.c.h.b16 %v4735
        %v5303 = vunpack.c.l.b16 %v4736
        %v5304 = vunpack.c.h.b16 %v4736
        %v5305 = vunpack.c.l.b16 %v4737
        %v5306 = vunpack.c.h.b16 %v4737
        %v5307 = vunpack.c.l.b16 %v4738
        %v5308 = vunpack.c.h.b16 %v4738
        %v5309 = vunpack.c.l.b16 %v4739
        %v5310 = vunpack.c.h.b16 %v4739
        %v5311 = vunpack.c.l.b16 %v4740
        %v5312 = vunpack.c.h.b16 %v4740
        %v5313 = vunpack.c.l.b16 %v4741
        %v5314 = vunpack.c.h.b16 %v4741
        %v5315 = vunpack.c.l.b16 %v4742
        %v5316 = vunpack.c.h.b16 %v4742
        %v5317 = vunpack.c.l.b16 %v4743
        %v5318 = vunpack.c.h.b16 %v4743
        %v5319 = vunpack.c.l.b16 %v4744
        %v5320 = vunpack.c.h.b16 %v4744
        %v5321 = vunpack.c.l.b16 %v4745
        %v5322 = vunpack.c.h.b16 %v4745
        %v5323 = vunpack.c.l.b16 %v4746
        %v5324 = vunpack.c.h.b16 %v4746
        %v5325 = vunpack.c.l.b16 %v4747
        %v5326 = vunpack.c.h.b16 %v4747
        %v5327 = vunpack.c.l.b16 %v4748
        %v5328 = vunpack.c.h.b16 %v4748
        %v5329 = vunpack.c.l.b16 %v4749
        %v5330 = vunpack.c.h.b16 %v4749
        %v5331 = vunpack.c.l.b16 %v4750
        %v5332 = vunpack.c.h.b16 %v4750
        %v5333 = vunpack.c.l.b16 %v4751
        %v5334 = vunpack.c.h.b16 %v4751
        %v5335 = vunpack.c.l.b16 %v4752
        %v5336 = vunpack.c.h.b16 %v4752
        %v5337 = vunpack.c.l.b16 %v4753
        %v5338 = vunpack.c.h.b16 %v4753
        %v5339 = vunpack.c.l.b16 %v4754
        %v5340 = vunpack.c.h.b16 %v4754
        %v5341 = vunpack.c.l.b16 %v4755
        %v5342 = vunpack.c.h.b16 %v4755
        %v5343 = vunpack.c.l.b16 %v4756
        %v5344 = vunpack.c.h.b16 %v4756
        %v5345 = vunpack.c.l.b16 %v4757
        %v5346 = vunpack.c.h.b16 %v4757
        %v5347 = vunpack.c.l.b16 %v4758
        %v5348 = vunpack.c.h.b16 %v4758
        %v5349 = vunpack.c.l.b16 %v4759
        %v5350 = vunpack.c.h.b16 %v4759
        %v5351 = vunpack.c.l.b16 %v4760
        %v5352 = vunpack.c.h.b16 %v4760
        %v5353 = vunpack.c.l.b16 %v4761
        %v5354 = vunpack.c.h.b16 %v4761
        %v5355 = vunpack.c.l.b16 %v4762
        %v5356 = vunpack.c.h.b16 %v4762
        %v5357 = vunpack.c.l.b16 %v4763
        %v5358 = vunpack.c.h.b16 %v4763
        %v5359 = vunpack.c.l.b16 %v4764
        %v5360 = vunpack.c.h.b16 %v4764
        %v5361 = vunpack.c.l.b16 %v4765
        %v5362 = vunpack.c.h.b16 %v4765
        %v5363 = vunpack.c.l.b16 %v4766
        %v5364 = vunpack.c.h.b16 %v4766
        %v5365 = vunpack.c.l.b16 %v4767
        %v5366 = vunpack.c.h.b16 %v4767
        %v5367 = vunpack.c.l.b16 %v4768
        %v5368 = vunpack.c.h.b16 %v4768
        %v5369 = vunpack.c.l.b16 %v4769
        %v5370 = vunpack.c.h.b16 %v4769
        %v5371 = vunpack.c.l.b16 %v4770
        %v5372 = vunpack.c.h.b16 %v4770
        %v5373 = vunpack.c.l.b16 %v4771
        %v5374 = vunpack.c.h.b16 %v4771
        %v5375 = vunpack.c.l.b16 %v4772
        %v5376 = vunpack.c.h.b16 %v4772
        %v5377 = vunpack.c.l.b16 %v4773
        %v5378 = vunpack.c.h.b16 %v4773
        %v5379 = vunpack.c.l.b16 %v4774
        %v5380 = vunpack.c.h.b16 %v4774
        %v5381 = vunpack.c.l.b16 %v4775
        %v5382 = vunpack.c.h.b16 %v4775
        %v5383 = vunpack.c.l.b16 %v4776
        %v5384 = vunpack.c.h.b16 %v4776
        %v5385 = vunpack.c.l.b16 %v4777
        %v5386 = vunpack.c.h.b16 %v4777
        %v5387 = vunpack.c.l.b16 %v4778
        %v5388 = vunpack.c.h.b16 %v4778
        %v5389 = vunpack.c.l.b16 %v4779
        %v5390 = vunpack.c.h.b16 %v4779
        %v5391 = vunpack.c.l.b16 %v4780
        %v5392 = vunpack.c.h.b16 %v4780
        %v5393 = vunpack.c.l.b16 %v4781
        %v5394 = vunpack.c.h.b16 %v4781
        %v5395 = vunpack.c.l.b16 %v4782
        %v5396 = vunpack.c.h.b16 %v4782
        %v5397 = vunpack.c.l.b16 %v4783
        %v5398 = vunpack.c.h.b16 %v4783
        %v5399 = vunpack.c.l.b16 %v4784
        %v5400 = vunpack.c.h.b16 %v4784
        %v5401 = vunpack.c.l.b16 %v4785
        %v5402 = vunpack.c.h.b16 %v4785
        %v5403 = vunpack.c.l.b16 %v4786
        %v5404 = vunpack.c.h.b16 %v4786
        %v5405 = vunpack.c.l.b16 %v4787
        %v5406 = vunpack.c.h.b16 %v4787
        %v5407 = vunpack.c.l.b16 %v4788
        %v5408 = vunpack.c.h.b16 %v4788
        %v5409 = vunpack.c.l.b16 %v4789
        %v5410 = vunpack.c.h.b16 %v4789
        %v5411 = vunpack.c.l.b16 %v4790
        %v5412 = vunpack.c.h.b16 %v4790
        %v5413 = vunpack.c.l.b16 %v4791
        %v5414 = vunpack.c.h.b16 %v4791
        %v5415 = vunpack.c.l.b16 %v4792
        %v5416 = vunpack.c.h.b16 %v4792
        %v5417 = vunpack.c.l.b16 %v4793
        %v5418 = vunpack.c.h.b16 %v4793
        %v5419 = vunpack.c.l.b16 %v4794
        %v5420 = vunpack.c.h.b16 %v4794
        %v5421 = vunpack.c.l.b16 %v4795
        %v5422 = vunpack.c.h.b16 %v4795
        %v5423 = vunpack.c.l.b16 %v4796
        %v5424 = vunpack.c.h.b16 %v4796
        %v5425 = vunpack.c.l.b16 %v4797
        %v5426 = vunpack.c.h.b16 %v4797
        %v5427 = vunpack.c.l.b16 %v4798
        %v5428 = vunpack.c.h.b16 %v4798
        %v5429 = vunpack.c.l.b16 %v4799
        %v5430 = vunpack.c.h.b16 %v4799
        %v5431 = vunpack.c.l.b16 %v4800
        %v5432 = vunpack.c.h.b16 %v4800
        %v5433 = vunpack.c.l.b16 %v4801
        %v5434 = vunpack.c.h.b16 %v4801
        %v5435 = vunpack.c.l.b16 %v4802
        %v5436 = vunpack.c.h.b16 %v4802
        %v5437 = vunpack.c.l.b16 %v4803
        %v5438 = vunpack.c.h.b16 %v4803
        %v5439 = vunpack.c.l.b16 %v4804
        %v5440 = vunpack.c.h.b16 %v4804
        %v5441 = vunpack.c.l.b16 %v4805
        %v5442 = vunpack.c.h.b16 %v4805
        %v5443 = vunpack.c.l.b16 %v4806
        %v5444 = vunpack.c.h.b16 %v4806
        %v5445 = vunpack.c.l.b16 %v4807
        %v5446 = vunpack.c.h.b16 %v4807
        %v5447 = vunpack.c.l.b16 %v4808
        %v5448 = vunpack.c.h.b16 %v4808
        %v5449 = vunpack.c.l.b16 %v4809
        %v5450 = vunpack.c.h.b16 %v4809
        %v5451 = vunpack.c.l.b16 %v4810
        %v5452 = vunpack.c.h.b16 %v4810
        %v5453 = vunpack.c.l.b16 %v4811
        %v5454 = vunpack.c.h.b16 %v4811
        %v5455 = vunpack.c.l.b16 %v4812
        %v5456 = vunpack.c.h.b16 %v4812
        %v5457 = vunpack.c.l.b16 %v4813
        %v5458 = vunpack.c.h.b16 %v4813
        %v5459 = vunpack.c.l.b16 %v4814
        %v5460 = vunpack.c.h.b16 %v4814
        %v5461 = vunpack.c.l.b16 %v4815
        %v5462 = vunpack.c.h.b16 %v4815
        %v5463 = vunpack.c.l.b16 %v4816
        %v5464 = vunpack.c.h.b16 %v4816
        %v5465 = vunpack.c.l.b16 %v4817
        %v5466 = vunpack.c.h.b16 %v4817
        %v5467 = vunpack.c.l.b16 %v4818
        %v5468 = vunpack.c.h.b16 %v4818
        %v5469 = vunpack.c.l.b16 %v4819
        %v5470 = vunpack.c.h.b16 %v4819
        %v5471 = vunpack.c.l.b16 %v4820
        %v5472 = vunpack.c.h.b16 %v4820
        %v5473 = vunpack.c.l.b16 %v4821
        %v5474 = vunpack.c.h.b16 %v4821
        %v5475 = vunpack.c.l.b16 %v4822
        %v5476 = vunpack.c.h.b16 %v4822
        %v5477 = vunpack.c.l.b16 %v4823
        %v5478 = vunpack.c.h.b16 %v4823
        %v5479 = vunpack.c.l.b16 %v4824
        %v5480 = vunpack.c.h.b16 %v4824
        %v5481 = vunpack.c.l.b16 %v4825
        %v5482 = vunpack.c.h.b16 %v4825
        %v5483 = vunpack.c.l.b16 %v4826
        %v5484 = vunpack.c.h.b16 %v4826
        %v5485 = vunpack.c.l.b16 %v4827
        %v5486 = vunpack.c.h.b16 %v4827
        %v5487 = vunpack.c.l.b16 %v4828
        %v5488 = vunpack.c.h.b16 %v4828
        %v5489 = vunpack.c.l.b16 %v4829
        %v5490 = vunpack.c.h.b16 %v4829
        %v5491 = vunpack.c.l.b16 %v4830
        %v5492 = vunpack.c.h.b16 %v4830
        %v5493 = vunpack.c.l.b16 %v4831
        %v5494 = vunpack.c.h.b16 %v4831
        %v5495 = vunpack.c.l.b16 %v4832
        %v5496 = vunpack.c.h.b16 %v4832
        %v5497 = vunpack.c.l.b16 %v4833
        %v5498 = vunpack.c.h.b16 %v4833
        %v5499 = vunpack.c.l.b16 %v4834
        %v5500 = vunpack.c.h.b16 %v4834
        %v5501 = vunpack.c.l.b16 %v4835
        %v5502 = vunpack.c.h.b16 %v4835
        %v5503 = vunpack.c.l.b16 %v4836
        %v5504 = vunpack.c.h.b16 %v4836
        %v5505 = vunpack.c.l.b16 %v4837
        %v5506 = vunpack.c.h.b16 %v4837
        %v5507 = vunpack.c.l.b16 %v4838
        %v5508 = vunpack.c.h.b16 %v4838
        %v5509 = vunpack.c.l.b16 %v4839
        %v5510 = vunpack.c.h.b16 %v4839
        %v5511 = vunpack.c.l.b16 %v4840
        %v5512 = vunpack.c.h.b16 %v4840
        %v5513 = vunpack.c.l.b16 %v4841
        %v5514 = vunpack.c.h.b16 %v4841
        %v5515 = vunpack.c.l.b16 %v4842
        %v5516 = vunpack.c.h.b16 %v4842
        %v5517 = vunpack.c.l.b16 %v4843
        %v5518 = vunpack.c.h.b16 %v4843
        %v5519 = vunpack.c.l.b16 %v4844
        %v5520 = vunpack.c.h.b16 %v4844
        %v5521 = vunpack.c.l.b16 %v4845
        %v5522 = vunpack.c.h.b16 %v4845
        %v5523 = vunpack.c.l.b16 %v4846
        %v5524 = vunpack.c.h.b16 %v4846
        %v5525 = vunpack.c.l.b16 %v4847
        %v5526 = vunpack.c.h.b16 %v4847
        %v5527 = vunpack.c.l.b16 %v4848
        %v5528 = vunpack.c.h.b16 %v4848
        %v5529 = vunpack.c.l.b16 %v4849
        %v5530 = vunpack.c.h.b16 %v4849
        %v5531 = vunpack.c.l.b16 %v4850
        %v5532 = vunpack.c.h.b16 %v4850
        %v5533 = vunpack.c.l.b16 %v4851
        %v5534 = vunpack.c.h.b16 %v4851
        %v5535 = vunpack.c.l.b16 %v4852
        %v5536 = vunpack.c.h.b16 %v4852
        %v5537 = vunpack.c.l.b16 %v4853
        %v5538 = vunpack.c.h.b16 %v4853
        %v5539 = vunpack.c.l.b16 %v4854
        %v5540 = vunpack.c.h.b16 %v4854
        %v5541 = vunpack.c.l.b16 %v4855
        %v5542 = vunpack.c.h.b16 %v4855
        %v5543 = vunpack.c.l.b16 %v4856
        %v5544 = vunpack.c.h.b16 %v4856
        %v5545 = vunpack.c.l.b16 %v4857
        %v5546 = vunpack.c.h.b16 %v4857
        %v5547 = vunpack.c.l.b16 %v4858
        %v5548 = vunpack.c.h.b16 %v4858
        %v5549 = vunpack.c.l.b16 %v4859
        %v5550 = vunpack.c.h.b16 %v4859
        %v5551 = vunpack.c.l.b16 %v4860
        %v5552 = vunpack.c.h.b16 %v4860
        %v5553 = vunpack.c.l.b16 %v4861
        %v5554 = vunpack.c.h.b16 %v4861
        %v5555 = vunpack.c.l.b16 %v4862
        %v5556 = vunpack.c.h.b16 %v4862
        %v5557 = vunpack.c.l.b16 %v4863
        %v5558 = vunpack.c.h.b16 %v4863
        %v5559 = vunpack.c.l.b16 %v4864
        %v5560 = vunpack.c.h.b16 %v4864
        %v5561 = vpack.c.b16 %v5181, %v5177
        %v5562 = vpack.c.b16 %v5182, %v5178
        %v5563 = vpack.c.b16 %v5183, %v5179
        %v5564 = vpack.c.b16 %v5184, %v5180
        %v5565 = vpack.c.b16 %v5189, %v5185
        %v5566 = vpack.c.b16 %v5190, %v5186
        %v5567 = vpack.c.b16 %v5191, %v5187
        %v5568 = vpack.c.b16 %v5192, %v5188
        %v5569 = vpack.c.b16 %v5197, %v5193
        %v5570 = vpack.c.b16 %v5198, %v5194
        %v5571 = vpack.c.b16 %v5199, %v5195
        %v5572 = vpack.c.b16 %v5200, %v5196
        %v5573 = vpack.c.b16 %v5205, %v5201
        %v5574 = vpack.c.b16 %v5206, %v5202
        %v5575 = vpack.c.b16 %v5207, %v5203
        %v5576 = vpack.c.b16 %v5208, %v5204
        %v5577 = vpack.c.b16 %v5213, %v5209
        %v5578 = vpack.c.b16 %v5214, %v5210
        %v5579 = vpack.c.b16 %v5215, %v5211
        %v5580 = vpack.c.b16 %v5216, %v5212
        %v5581 = vpack.c.b16 %v5221, %v5217
        %v5582 = vpack.c.b16 %v5222, %v5218
        %v5583 = vpack.c.b16 %v5223, %v5219
        %v5584 = vpack.c.b16 %v5224, %v5220
        %v5585 = vpack.c.b16 %v5229, %v5225
        %v5586 = vpack.c.b16 %v5230, %v5226
        %v5587 = vpack.c.b16 %v5231, %v5227
        %v5588 = vpack.c.b16 %v5232, %v5228
        %v5589 = vpack.c.b16 %v5237, %v5233
        %v5590 = vpack.c.b16 %v5238, %v5234
        %v5591 = vpack.c.b16 %v5239, %v5235
        %v5592 = vpack.c.b16 %v5240, %v5236
        %v5593 = vpack.c.b16 %v5245, %v5241
        %v5594 = vpack.c.b16 %v5246, %v5242
        %v5595 = vpack.c.b16 %v5247, %v5243
        %v5596 = vpack.c.b16 %v5248, %v5244
        %v5597 = vpack.c.b16 %v5253, %v5249
        %v5598 = vpack.c.b16 %v5254, %v5250
        %v5599 = vpack.c.b16 %v5255, %v5251
        %v5600 = vpack.c.b16 %v5256, %v5252
        %v5601 = vpack.c.b16 %v5261, %v5257
        %v5602 = vpack.c.b16 %v5262, %v5258
        %v5603 = vpack.c.b16 %v5263, %v5259
        %v5604 = vpack.c.b16 %v5264, %v5260
        %v5605 = vpack.c.b16 %v5269, %v5265
        %v5606 = vpack.c.b16 %v5270, %v5266
        %v5607 = vpack.c.b16 %v5271, %v5267
        %v5608 = vpack.c.b16 %v5272, %v5268
        %v5609 = vpack.c.b16 %v5277, %v5273
        %v5610 = vpack.c.b16 %v5278, %v5274
        %v5611 = vpack.c.b16 %v5279, %v5275
        %v5612 = vpack.c.b16 %v5280, %v5276
        %v5613 = vpack.c.b16 %v5285, %v5281
        %v5614 = vpack.c.b16 %v5286, %v5282
        %v5615 = vpack.c.b16 %v5287, %v5283
        %v5616 = vpack.c.b16 %v5288, %v5284
        %v5617 = vpack.c.b16 %v5293, %v5289
        %v5618 = vpack.c.b16 %v5294, %v5290
        %v5619 = vpack.c.b16 %v5295, %v5291
        %v5620 = vpack.c.b16 %v5296, %v5292
        %v5621 = vpack.c.b16 %v5301, %v5297
        %v5622 = vpack.c.b16 %v5302, %v5298
        %v5623 = vpack.c.b16 %v5303, %v5299
        %v5624 = vpack.c.b16 %v5304, %v5300
        %v5625 = vpack.c.b16 %v5309, %v5305
        %v5626 = vpack.c.b16 %v5310, %v5306
        %v5627 = vpack.c.b16 %v5311, %v5307
        %v5628 = vpack.c.b16 %v5312, %v5308
        %v5629 = vpack.c.b16 %v5317, %v5313
        %v5630 = vpack.c.b16 %v5318, %v5314
        %v5631 = vpack.c.b16 %v5319, %v5315
        %v5632 = vpack.c.b16 %v5320, %v5316
        %v5633 = vpack.c.b16 %v5325, %v5321
        %v5634 = vpack.c.b16 %v5326, %v5322
        %v5635 = vpack.c.b16 %v5327, %v5323
        %v5636 = vpack.c.b16 %v5328, %v5324
        %v5637 = vpack.c.b16 %v5333, %v5329
        %v5638 = vpack.c.b16 %v5334, %v5330
        %v5639 = vpack.c.b16 %v5335, %v5331
        %v5640 = vpack.c.b16 %v5336, %v5332
        %v5641 = vpack.c.b16 %v5341, %v5337
        %v5642 = vpack.c.b16 %v5342, %v5338
        %v5643 = vpack.c.b16 %v5343, %v5339
        %v5644 = vpack.c.b16 %v5344, %v5340
        %v5645 = vpack.c.b16 %v5349, %v5345
        %v5646 = vpack.c.b16 %v5350, %v5346
        %v5647 = vpack.c.b16 %v5351, %v5347
        %v5648 = vpack.c.b16 %v5352, %v5348
        %v5649 = vpack.c.b16 %v5357, %v5353
        %v5650 = vpack.c.b16 %v5358, %v5354
        %v5651 = vpack.c.b16 %v5359, %v5355
        %v5652 = vpack.c.b16 %v5360, %v5356
        %v5653 = vpack.c.b16 %v5365, %v5361
        %v5654 = vpack.c.b16 %v5366, %v5362
        %v5655 = vpack.c.b16 %v5367, %v5363
        %v5656 = vpack.c.b16 %v5368, %v5364
        %v5657 = vpack.c.b16 %v5373, %v5369
        %v5658 = vpack.c.b16 %v5374, %v5370
        %v5659 = vpack.c.b16 %v5375, %v5371
        %v5660 = vpack.c.b16 %v5376, %v5372
        %v5661 = vpack.c.b16 %v5381, %v5377
        %v5662 = vpack.c.b16 %v5382, %v5378
        %v5663 = vpack.c.b16 %v5383, %v5379
        %v5664 = vpack.c.b16 %v5384, %v5380
        %v5665 = vpack.c.b16 %v5389, %v5385
        %v5666 = vpack.c.b16 %v5390, %v5386
        %v5667 = vpack.c.b16 %v5391, %v5387
        %v5668 = vpack.c.b16 %v5392, %v5388
        %v5669 = vpack.c.b16 %v5397, %v5393
        %v5670 = vpack.c.b16 %v5398, %v5394
        %v5671 = vpack.c.b16 %v5399, %v5395
        %v5672 = vpack.c.b16 %v5400, %v5396
        %v5673 = vpack.c.b16 %v5405, %v5401
        %v5674 = vpack.c.b16 %v5406, %v5402
        %v5675 = vpack.c.b16 %v5407, %v5403
        %v5676 = vpack.c.b16 %v5408, %v5404
        %v5677 = vpack.c.b16 %v5413, %v5409
        %v5678 = vpack.c.b16 %v5414, %v5410
        %v5679 = vpack.c.b16 %v5415, %v5411
        %v5680 = vpack.c.b16 %v5416, %v5412
        %v5681 = vpack.c.b16 %v5421, %v5417
        %v5682 = vpack.c.b16 %v5422, %v5418
        %v5683 = vpack.c.b16 %v5423, %v5419
        %v5684 = vpack.c.b16 %v5424, %v5420
        %v5685 = vpack.c.b16 %v5429, %v5425
        %v5686 = vpack.c.b16 %v5430, %v5426
        %v5687 = vpack.c.b16 %v5431, %v5427
        %v5688 = vpack.c.b16 %v5432, %v5428
        %v5689 = vpack.c.b16 %v5437, %v5433
        %v5690 = vpack.c.b16 %v5438, %v5434
        %v5691 = vpack.c.b16 %v5439, %v5435
        %v5692 = vpack.c.b16 %v5440, %v5436
        %v5693 = vpack.c.b16 %v5445, %v5441
        %v5694 = vpack.c.b16 %v5446, %v5442
        %v5695 = vpack.c.b16 %v5447, %v5443
        %v5696 = vpack.c.b16 %v5448, %v5444
        %v5697 = vpack.c.b16 %v5453, %v5449
        %v5698 = vpack.c.b16 %v5454, %v5450
        %v5699 = vpack.c.b16 %v5455, %v5451
        %v5700 = vpack.c.b16 %v5456, %v5452
        %v5701 = vpack.c.b16 %v5461, %v5457
        %v5702 = vpack.c.b16 %v5462, %v5458
        %v5703 = vpack.c.b16 %v5463, %v5459
        %v5704 = vpack.c.b16 %v5464, %v5460
        %v5705 = vpack.c.b16 %v5469, %v5465
        %v5706 = vpack.c.b16 %v5470, %v5466
        %v5707 = vpack.c.b16 %v5471, %v5467
        %v5708 = vpack.c.b16 %v5472, %v5468
        %v5709 = vpack.c.b16 %v5477, %v5473
        %v5710 = vpack.c.b16 %v5478, %v5474
        %v5711 = vpack.c.b16 %v5479, %v5475
        %v5712 = vpack.c.b16 %v5480, %v5476
        %v5713 = vpack.c.b16 %v5485, %v5481
        %v5714 = vpack.c.b16 %v5486, %v5482
        %v5715 = vpack.c.b16 %v5487, %v5483
        %v5716 = vpack.c.b16 %v5488, %v5484
        %v5717 = vpack.c.b16 %v5493, %v5489
        %v5718 = vpack.c.b16 %v5494, %v5490
        %v5719 = vpack.c.b16 %v5495, %v5491
        %v5720 = vpack.c.b16 %v5496, %v5492
        %v5721 = vpack.c.b16 %v5501, %v5497
        %v5722 = vpack.c.b16 %v5502, %v5498
        %v5723 = vpack.c.b16 %v5503, %v5499
        %v5724 = vpack.c.b16 %v5504, %v5500
        %v5725 = vpack.c.b16 %v5509, %v5505
        %v5726 = vpack.c.b16 %v5510, %v5506
        %v5727 = vpack.c.b16 %v5511, %v5507
        %v5728 = vpack.c.b16 %v5512, %v5508
        %v5729 = vpack.c.b16 %v5517, %v5513
        %v5730 = vpack.c.b16 %v5518, %v5514
        %v5731 = vpack.c.b16 %v5519, %v5515
        %v5732 = vpack.c.b16 %v5520, %v5516
        %v5733 = vpack.c.b16 %v5525, %v5521
        %v5734 = vpack.c.b16 %v5526, %v5522
        %v5735 = vpack.c.b16 %v5527, %v5523
        %v5736 = vpack.c.b16 %v5528, %v5524
        %v5737 = vpack.c.b16 %v5533, %v5529
        %v5738 = vpack.c.b16 %v5534, %v5530
        %v5739 = vpack.c.b16 %v5535, %v5531
        %v5740 = vpack.c.b16 %v5536, %v5532
        %v5741 = vpack.c.b16 %v5541, %v5537
        %v5742 = vpack.c.b16 %v5542, %v5538
        %v5743 = vpack.c.b16 %v5543, %v5539
        %v5744 = vpack.c.b16 %v5544, %v5540
        %v5745 = vpack.c.b16 %v5549, %v5545
        %v5746 = vpack.c.b16 %v5550, %v5546
        %v5747 = vpack.c.b16 %v5551, %v5547
        %v5748 = vpack.c.b16 %v5552, %v5548
        %v5749 = vpack.c.b16 %v5557, %v5553
        %v5750 = vpack.c.b16 %v5558, %v5554
        %v5751 = vpack.c.b16 %v5559, %v5555
        %v5752 = vpack.c.b16 %v5560, %v5556
        %5945 = vmatprep.subr.bf16.mxu0 %v5590
        %5946 = vmatpush1.bf16.msra.mxu0 %v5589
        %5947 = vmatprep.subr.bf16.mxu0 %v5586
        %5948 = vmatpush1.bf16.msra.mxu0 %v5585
        %5949 = vmatprep.subr.bf16.mxu0 %v5582
        %5950 = vmatpush1.bf16.msra.mxu0 %v5581
        %5951 = vmatprep.subr.bf16.mxu0 %v5578
        %5952 = vmatpush1.bf16.msra.mxu0 %v5577
        %5953 = vmatprep.subr.bf16.mxu0 %v5574
        %5954 = vmatpush1.bf16.msra.mxu0 %v5573
        %5955 = vmatprep.subr.bf16.mxu0 %v5570
        %5956 = vmatpush1.bf16.msra.mxu0 %v5569
        %5957 = vmatprep.subr.bf16.mxu0 %v5566
        %5958 = vmatpush1.bf16.msra.mxu0 %v5565
        %5959 = vmatprep.subr.bf16.mxu0 %v5562
        %5960 = vmatpush1.bf16.msra.mxu0 %v5561
        %5961 = vmatprep.subr.bf16.mxu0 %v5622
        %5962 = vmatpush2.bf16.msra.mxu0 %v5621
        %5963 = vmatprep.subr.bf16.mxu0 %v5618
        %5964 = vmatpush2.bf16.msra.mxu0 %v5617
        %5965 = vmatprep.subr.bf16.mxu0 %v5614
        %5966 = vmatpush2.bf16.msra.mxu0 %v5613
        %5967 = vmatprep.subr.bf16.mxu0 %v5610
        %5968 = vmatpush2.bf16.msra.mxu0 %v5609
        %5969 = vmatprep.subr.bf16.mxu0 %v5606
        %5970 = vmatpush2.bf16.msra.mxu0 %v5605
        %5971 = vmatprep.subr.bf16.mxu0 %v5602
        %5972 = vmatpush2.bf16.msra.mxu0 %v5601
        %5973 = vmatprep.subr.bf16.mxu0 %v5598
        %5974 = vmatpush2.bf16.msra.mxu0 %v5597
        %5975 = vmatprep.subr.bf16.mxu0 %v5594
        %5976 = vmatpush2.bf16.msra.mxu0 %v5593
        %5977 = vmatprep.mubr.bf16.mxu0 %v4938
        %5978 = vmatmul.mubr.bf16.gmra.mxu0 %v4937
        %v5979 = vpop.f32.mrf.mxu0
        %v5980 = vadd.f32 0.0, %v5979
        %v5981 = vpop.f32.mrf.mxu0
        %v5982 = vadd.f32 0.0, %v5981
        %v5983 = vpop.f32.mrf.mxu0
        %v5984 = vadd.f32 0.0, %v5983
        %v5985 = vpop.f32.mrf.mxu0
        %v5986 = vadd.f32 0.0, %v5985
        %5987 = vmatprep.mubr.bf16.mxu0 %v4944
        %5988 = vmatmul.mubr.bf16.gmra.mxu0 %v4943
        %v5989 = vpop.f32.mrf.mxu0
        %v5990 = vadd.f32 0.0, %v5989
        %v5991 = vpop.f32.mrf.mxu0
        %v5992 = vadd.f32 0.0, %v5991
        %v5993 = vpop.f32.mrf.mxu0
        %v5994 = vadd.f32 0.0, %v5993
        %v5995 = vpop.f32.mrf.mxu0
        %v5996 = vadd.f32 0.0, %v5995
        %5997 = vmatprep.mubr.bf16.mxu0 %v4950
        %5998 = vmatmul.mubr.bf16.gmra.mxu0 %v4949
        %v5999 = vpop.f32.mrf.mxu0
        %v6000 = vadd.f32 0.0, %v5999
        %v6001 = vpop.f32.mrf.mxu0
        %v6002 = vadd.f32 0.0, %v6001
        %v6003 = vpop.f32.mrf.mxu0
        %v6004 = vadd.f32 0.0, %v6003
        %v6005 = vpop.f32.mrf.mxu0
        %v6006 = vadd.f32 0.0, %v6005
        %6007 = vmatprep.mubr.bf16.mxu0 %v4956
        %6008 = vmatmul.mubr.bf16.gmra.mxu0 %v4955
        %v6009 = vpop.f32.mrf.mxu0
        %v6010 = vadd.f32 0.0, %v6009
        %v6011 = vpop.f32.mrf.mxu0
        %v6012 = vadd.f32 0.0, %v6011
        %v6013 = vpop.f32.mrf.mxu0
        %v6014 = vadd.f32 0.0, %v6013
        %v6015 = vpop.f32.mrf.mxu0
        %v6016 = vadd.f32 0.0, %v6015
        %6017 = vdwg.mxu0
        %6018 = vmatprep.subr.bf16.mxu0 %v5654
        %6019 = vmatpush1.bf16.msra.mxu0 %v5653
        %6020 = vmatprep.subr.bf16.mxu0 %v5650
        %6021 = vmatpush1.bf16.msra.mxu0 %v5649
        %6022 = vmatprep.subr.bf16.mxu0 %v5646
        %6023 = vmatpush1.bf16.msra.mxu0 %v5645
        %6024 = vmatprep.subr.bf16.mxu0 %v5642
        %6025 = vmatpush1.bf16.msra.mxu0 %v5641
        %6026 = vmatprep.subr.bf16.mxu0 %v5638
        %6027 = vmatpush1.bf16.msra.mxu0 %v5637
        %6028 = vmatprep.subr.bf16.mxu0 %v5634
        %6029 = vmatpush1.bf16.msra.mxu0 %v5633
        %6030 = vmatprep.subr.bf16.mxu0 %v5630
        %6031 = vmatpush1.bf16.msra.mxu0 %v5629
        %6032 = vmatprep.subr.bf16.mxu0 %v5626
        %6033 = vmatpush1.bf16.msra.mxu0 %v5625
        %6034 = vmatprep.subr.bf16.mxu0 %v5686
        %6035 = vmatpush2.bf16.msra.mxu0 %v5685
        %6036 = vmatprep.subr.bf16.mxu0 %v5682
        %6037 = vmatpush2.bf16.msra.mxu0 %v5681
        %6038 = vmatprep.subr.bf16.mxu0 %v5678
        %6039 = vmatpush2.bf16.msra.mxu0 %v5677
        %6040 = vmatprep.subr.bf16.mxu0 %v5674
        %6041 = vmatpush2.bf16.msra.mxu0 %v5673
        %6042 = vmatprep.subr.bf16.mxu0 %v5670
        %6043 = vmatpush2.bf16.msra.mxu0 %v5669
        %6044 = vmatprep.subr.bf16.mxu0 %v5666
        %6045 = vmatpush2.bf16.msra.mxu0 %v5665
        %6046 = vmatprep.subr.bf16.mxu0 %v5662
        %6047 = vmatpush2.bf16.msra.mxu0 %v5661
        %6048 = vmatprep.subr.bf16.mxu0 %v5658
        %6049 = vmatpush2.bf16.msra.mxu0 %v5657
        %6050 = vmatprep.mubr.bf16.mxu0 %v4940
        %6051 = vmatmul.mubr.bf16.gmra.mxu0 %v4939
        %v6052 = vpop.f32.mrf.mxu0
        %v6053 = vadd.f32 %v5980, %v6052
        %v6054 = vpop.f32.mrf.mxu0
        %v6055 = vadd.f32 %v5982, %v6054
        %v6056 = vpop.f32.mrf.mxu0
        %v6057 = vadd.f32 %v5984, %v6056
        %v6058 = vpop.f32.mrf.mxu0
        %v6059 = vadd.f32 %v5986, %v6058
        %6060 = vmatprep.mubr.bf16.mxu0 %v4946
        %6061 = vmatmul.mubr.bf16.gmra.mxu0 %v4945
        %v6062 = vpop.f32.mrf.mxu0
        %v6063 = vadd.f32 %v5990, %v6062
        %v6064 = vpop.f32.mrf.mxu0
        %v6065 = vadd.f32 %v5992, %v6064
        %v6066 = vpop.f32.mrf.mxu0
        %v6067 = vadd.f32 %v5994, %v6066
        %v6068 = vpop.f32.mrf.mxu0
        %v6069 = vadd.f32 %v5996, %v6068
        %6070 = vmatprep.mubr.bf16.mxu0 %v4952
        %6071 = vmatmul.mubr.bf16.gmra.mxu0 %v4951
        %v6072 = vpop.f32.mrf.mxu0
        %v6073 = vadd.f32 %v6000, %v6072
        %v6074 = vpop.f32.mrf.mxu0
        %v6075 = vadd.f32 %v6002, %v6074
        %v6076 = vpop.f32.mrf.mxu0
        %v6077 = vadd.f32 %v6004, %v6076
        %v6078 = vpop.f32.mrf.mxu0
        %v6079 = vadd.f32 %v6006, %v6078
        %6080 = vmatprep.mubr.bf16.mxu0 %v4958
        %6081 = vmatmul.mubr.bf16.gmra.mxu0 %v4957
        %v6082 = vpop.f32.mrf.mxu0
        %v6083 = vadd.f32 %v6010, %v6082
        %v6084 = vpop.f32.mrf.mxu0
        %v6085 = vadd.f32 %v6012, %v6084
        %v6086 = vpop.f32.mrf.mxu0
        %v6087 = vadd.f32 %v6014, %v6086
        %v6088 = vpop.f32.mrf.mxu0
        %v6089 = vadd.f32 %v6016, %v6088
        %6090 = vdwg.mxu0
        %6091 = vmatprep.subr.bf16.mxu0 %v5718
        %6092 = vmatpush1.bf16.msra.mxu0 %v5717
        %6093 = vmatprep.subr.bf16.mxu0 %v5714
        %6094 = vmatpush1.bf16.msra.mxu0 %v5713
        %6095 = vmatprep.subr.bf16.mxu0 %v5710
        %6096 = vmatpush1.bf16.msra.mxu0 %v5709
        %6097 = vmatprep.subr.bf16.mxu0 %v5706
        %6098 = vmatpush1.bf16.msra.mxu0 %v5705
        %6099 = vmatprep.subr.bf16.mxu0 %v5702
        %6100 = vmatpush1.bf16.msra.mxu0 %v5701
        %6101 = vmatprep.subr.bf16.mxu0 %v5698
        %6102 = vmatpush1.bf16.msra.mxu0 %v5697
        %6103 = vmatprep.subr.bf16.mxu0 %v5694
        %6104 = vmatpush1.bf16.msra.mxu0 %v5693
        %6105 = vmatprep.subr.bf16.mxu0 %v5690
        %6106 = vmatpush1.bf16.msra.mxu0 %v5689
        %6107 = vmatprep.subr.bf16.mxu0 %v5750
        %6108 = vmatpush2.bf16.msra.mxu0 %v5749
        %6109 = vmatprep.subr.bf16.mxu0 %v5746
        %6110 = vmatpush2.bf16.msra.mxu0 %v5745
        %6111 = vmatprep.subr.bf16.mxu0 %v5742
        %6112 = vmatpush2.bf16.msra.mxu0 %v5741
        %6113 = vmatprep.subr.bf16.mxu0 %v5738
        %6114 = vmatpush2.bf16.msra.mxu0 %v5737
        %6115 = vmatprep.subr.bf16.mxu0 %v5734
        %6116 = vmatpush2.bf16.msra.mxu0 %v5733
        %6117 = vmatprep.subr.bf16.mxu0 %v5730
        %6118 = vmatpush2.bf16.msra.mxu0 %v5729
        %6119 = vmatprep.subr.bf16.mxu0 %v5726
        %6120 = vmatpush2.bf16.msra.mxu0 %v5725
        %6121 = vmatprep.subr.bf16.mxu0 %v5722
        %6122 = vmatpush2.bf16.msra.mxu0 %v5721
        %6123 = vmatprep.mubr.bf16.mxu0 %v4942
        %6124 = vmatmul.mubr.bf16.gmra.mxu0 %v4941
        %v6125 = vpop.f32.mrf.mxu0
        %v6126 = vadd.f32 %v6053, %v6125
        %v6127 = vpop.f32.mrf.mxu0
        %v6128 = vadd.f32 %v6055, %v6127
        %v6129 = vpop.f32.mrf.mxu0
        %v6130 = vadd.f32 %v6057, %v6129
        %v6131 = vpop.f32.mrf.mxu0
        %v6132 = vadd.f32 %v6059, %v6131
        %6133 = vmatprep.mubr.bf16.mxu0 %v4948
        %6134 = vmatmul.mubr.bf16.gmra.mxu0 %v4947
        %v6135 = vpop.f32.mrf.mxu0
        %v6136 = vadd.f32 %v6063, %v6135
        %v6137 = vpop.f32.mrf.mxu0
        %v6138 = vadd.f32 %v6065, %v6137
        %v6139 = vpop.f32.mrf.mxu0
        %v6140 = vadd.f32 %v6067, %v6139
        %v6141 = vpop.f32.mrf.mxu0
        %v6142 = vadd.f32 %v6069, %v6141
        %6143 = vmatprep.mubr.bf16.mxu0 %v4954
        %6144 = vmatmul.mubr.bf16.gmra.mxu0 %v4953
        %v6145 = vpop.f32.mrf.mxu0
        %v6146 = vadd.f32 %v6073, %v6145
        %v6147 = vpop.f32.mrf.mxu0
        %v6148 = vadd.f32 %v6075, %v6147
        %v6149 = vpop.f32.mrf.mxu0
        %v6150 = vadd.f32 %v6077, %v6149
        %v6151 = vpop.f32.mrf.mxu0
        %v6152 = vadd.f32 %v6079, %v6151
        %6153 = vmatprep.mubr.bf16.mxu0 %v4960
        %6154 = vmatmul.mubr.bf16.gmra.mxu0 %v4959
        %v6155 = vpop.f32.mrf.mxu0
        %v6156 = vadd.f32 %v6083, %v6155
        %v6157 = vpop.f32.mrf.mxu0
        %v6158 = vadd.f32 %v6085, %v6157
        %v6159 = vpop.f32.mrf.mxu0
        %v6160 = vadd.f32 %v6087, %v6159
        %v6161 = vpop.f32.mrf.mxu0
        %v6162 = vadd.f32 %v6089, %v6161
        %6163 = vdwg.mxu0
        %6164 = vmatprep.subr.bf16.mxu0 %v5592
        %6165 = vmatpush1.bf16.msra.mxu0 %v5591
        %6166 = vmatprep.subr.bf16.mxu0 %v5588
        %6167 = vmatpush1.bf16.msra.mxu0 %v5587
        %6168 = vmatprep.subr.bf16.mxu0 %v5584
        %6169 = vmatpush1.bf16.msra.mxu0 %v5583
        %6170 = vmatprep.subr.bf16.mxu0 %v5580
        %6171 = vmatpush1.bf16.msra.mxu0 %v5579
        %6172 = vmatprep.subr.bf16.mxu0 %v5576
        %6173 = vmatpush1.bf16.msra.mxu0 %v5575
        %6174 = vmatprep.subr.bf16.mxu0 %v5572
        %6175 = vmatpush1.bf16.msra.mxu0 %v5571
        %6176 = vmatprep.subr.bf16.mxu0 %v5568
        %6177 = vmatpush1.bf16.msra.mxu0 %v5567
        %6178 = vmatprep.subr.bf16.mxu0 %v5564
        %6179 = vmatpush1.bf16.msra.mxu0 %v5563
        %6180 = vmatprep.subr.bf16.mxu0 %v5624
        %6181 = vmatpush2.bf16.msra.mxu0 %v5623
        %6182 = vmatprep.subr.bf16.mxu0 %v5620
        %6183 = vmatpush2.bf16.msra.mxu0 %v5619
        %6184 = vmatprep.subr.bf16.mxu0 %v5616
        %6185 = vmatpush2.bf16.msra.mxu0 %v5615
        %6186 = vmatprep.subr.bf16.mxu0 %v5612
        %6187 = vmatpush2.bf16.msra.mxu0 %v5611
        %6188 = vmatprep.subr.bf16.mxu0 %v5608
        %6189 = vmatpush2.bf16.msra.mxu0 %v5607
        %6190 = vmatprep.subr.bf16.mxu0 %v5604
        %6191 = vmatpush2.bf16.msra.mxu0 %v5603
        %6192 = vmatprep.subr.bf16.mxu0 %v5600
        %6193 = vmatpush2.bf16.msra.mxu0 %v5599
        %6194 = vmatprep.subr.bf16.mxu0 %v5596
        %6195 = vmatpush2.bf16.msra.mxu0 %v5595
        %6196 = vmatprep.mubr.bf16.mxu0 %v4938
        %6197 = vmatmul.mubr.bf16.gmra.mxu0 %v4937
        %v6198 = vpop.f32.mrf.mxu0
        %v6199 = vadd.f32 0.0, %v6198
        %v6200 = vpop.f32.mrf.mxu0
        %v6201 = vadd.f32 0.0, %v6200
        %v6202 = vpop.f32.mrf.mxu0
        %v6203 = vadd.f32 0.0, %v6202
        %v6204 = vpop.f32.mrf.mxu0
        %v6205 = vadd.f32 0.0, %v6204
        %6206 = vmatprep.mubr.bf16.mxu0 %v4944
        %6207 = vmatmul.mubr.bf16.gmra.mxu0 %v4943
        %v6208 = vpop.f32.mrf.mxu0
        %v6209 = vadd.f32 0.0, %v6208
        %v6210 = vpop.f32.mrf.mxu0
        %v6211 = vadd.f32 0.0, %v6210
        %v6212 = vpop.f32.mrf.mxu0
        %v6213 = vadd.f32 0.0, %v6212
        %v6214 = vpop.f32.mrf.mxu0
        %v6215 = vadd.f32 0.0, %v6214
        %6216 = vmatprep.mubr.bf16.mxu0 %v4950
        %6217 = vmatmul.mubr.bf16.gmra.mxu0 %v4949
        %v6218 = vpop.f32.mrf.mxu0
        %v6219 = vadd.f32 0.0, %v6218
        %v6220 = vpop.f32.mrf.mxu0
        %v6221 = vadd.f32 0.0, %v6220
        %v6222 = vpop.f32.mrf.mxu0
        %v6223 = vadd.f32 0.0, %v6222
        %v6224 = vpop.f32.mrf.mxu0
        %v6225 = vadd.f32 0.0, %v6224
        %6226 = vmatprep.mubr.bf16.mxu0 %v4956
        %6227 = vmatmul.mubr.bf16.gmra.mxu0 %v4955
        %v6228 = vpop.f32.mrf.mxu0
        %v6229 = vadd.f32 0.0, %v6228
        %v6230 = vpop.f32.mrf.mxu0
        %v6231 = vadd.f32 0.0, %v6230
        %v6232 = vpop.f32.mrf.mxu0
        %v6233 = vadd.f32 0.0, %v6232
        %v6234 = vpop.f32.mrf.mxu0
        %v6235 = vadd.f32 0.0, %v6234
        %6236 = vdwg.mxu0
        %6237 = vmatprep.subr.bf16.mxu0 %v5656
        %6238 = vmatpush1.bf16.msra.mxu0 %v5655
        %6239 = vmatprep.subr.bf16.mxu0 %v5652
        %6240 = vmatpush1.bf16.msra.mxu0 %v5651
        %6241 = vmatprep.subr.bf16.mxu0 %v5648
        %6242 = vmatpush1.bf16.msra.mxu0 %v5647
        %6243 = vmatprep.subr.bf16.mxu0 %v5644
        %6244 = vmatpush1.bf16.msra.mxu0 %v5643
        %6245 = vmatprep.subr.bf16.mxu0 %v5640
        %6246 = vmatpush1.bf16.msra.mxu0 %v5639
        %6247 = vmatprep.subr.bf16.mxu0 %v5636
        %6248 = vmatpush1.bf16.msra.mxu0 %v5635
        %6249 = vmatprep.subr.bf16.mxu0 %v5632
        %6250 = vmatpush1.bf16.msra.mxu0 %v5631
        %6251 = vmatprep.subr.bf16.mxu0 %v5628
        %6252 = vmatpush1.bf16.msra.mxu0 %v5627
        %6253 = vmatprep.subr.bf16.mxu0 %v5688
        %6254 = vmatpush2.bf16.msra.mxu0 %v5687
        %6255 = vmatprep.subr.bf16.mxu0 %v5684
        %6256 = vmatpush2.bf16.msra.mxu0 %v5683
        %6257 = vmatprep.subr.bf16.mxu0 %v5680
        %6258 = vmatpush2.bf16.msra.mxu0 %v5679
        %6259 = vmatprep.subr.bf16.mxu0 %v5676
        %6260 = vmatpush2.bf16.msra.mxu0 %v5675
        %6261 = vmatprep.subr.bf16.mxu0 %v5672
        %6262 = vmatpush2.bf16.msra.mxu0 %v5671
        %6263 = vmatprep.subr.bf16.mxu0 %v5668
        %6264 = vmatpush2.bf16.msra.mxu0 %v5667
        %6265 = vmatprep.subr.bf16.mxu0 %v5664
        %6266 = vmatpush2.bf16.msra.mxu0 %v5663
        %6267 = vmatprep.subr.bf16.mxu0 %v5660
        %6268 = vmatpush2.bf16.msra.mxu0 %v5659
        %6269 = vmatprep.mubr.bf16.mxu0 %v4940
        %6270 = vmatmul.mubr.bf16.gmra.mxu0 %v4939
        %v6271 = vpop.f32.mrf.mxu0
        %v6272 = vadd.f32 %v6199, %v6271
        %v6273 = vpop.f32.mrf.mxu0
        %v6274 = vadd.f32 %v6201, %v6273
        %v6275 = vpop.f32.mrf.mxu0
        %v6276 = vadd.f32 %v6203, %v6275
        %v6277 = vpop.f32.mrf.mxu0
        %v6278 = vadd.f32 %v6205, %v6277
        %6279 = vmatprep.mubr.bf16.mxu0 %v4946
        %6280 = vmatmul.mubr.bf16.gmra.mxu0 %v4945
        %v6281 = vpop.f32.mrf.mxu0
        %v6282 = vadd.f32 %v6209, %v6281
        %v6283 = vpop.f32.mrf.mxu0
        %v6284 = vadd.f32 %v6211, %v6283
        %v6285 = vpop.f32.mrf.mxu0
        %v6286 = vadd.f32 %v6213, %v6285
        %v6287 = vpop.f32.mrf.mxu0
        %v6288 = vadd.f32 %v6215, %v6287
        %6289 = vmatprep.mubr.bf16.mxu0 %v4952
        %6290 = vmatmul.mubr.bf16.gmra.mxu0 %v4951
        %v6291 = vpop.f32.mrf.mxu0
        %v6292 = vadd.f32 %v6219, %v6291
        %v6293 = vpop.f32.mrf.mxu0
        %v6294 = vadd.f32 %v6221, %v6293
        %v6295 = vpop.f32.mrf.mxu0
        %v6296 = vadd.f32 %v6223, %v6295
        %v6297 = vpop.f32.mrf.mxu0
        %v6298 = vadd.f32 %v6225, %v6297
        %6299 = vmatprep.mubr.bf16.mxu0 %v4958
        %6300 = vmatmul.mubr.bf16.gmra.mxu0 %v4957
        %v6301 = vpop.f32.mrf.mxu0
        %v6302 = vadd.f32 %v6229, %v6301
        %v6303 = vpop.f32.mrf.mxu0
        %v6304 = vadd.f32 %v6231, %v6303
        %v6305 = vpop.f32.mrf.mxu0
        %v6306 = vadd.f32 %v6233, %v6305
        %v6307 = vpop.f32.mrf.mxu0
        %v6308 = vadd.f32 %v6235, %v6307
        %6309 = vdwg.mxu0
        %6310 = vmatprep.subr.bf16.mxu0 %v5720
        %6311 = vmatpush1.bf16.msra.mxu0 %v5719
        %6312 = vmatprep.subr.bf16.mxu0 %v5716
        %6313 = vmatpush1.bf16.msra.mxu0 %v5715
        %6314 = vmatprep.subr.bf16.mxu0 %v5712
        %6315 = vmatpush1.bf16.msra.mxu0 %v5711
        %6316 = vmatprep.subr.bf16.mxu0 %v5708
        %6317 = vmatpush1.bf16.msra.mxu0 %v5707
        %6318 = vmatprep.subr.bf16.mxu0 %v5704
        %6319 = vmatpush1.bf16.msra.mxu0 %v5703
        %6320 = vmatprep.subr.bf16.mxu0 %v5700
        %6321 = vmatpush1.bf16.msra.mxu0 %v5699
        %6322 = vmatprep.subr.bf16.mxu0 %v5696
        %6323 = vmatpush1.bf16.msra.mxu0 %v5695
        %6324 = vmatprep.subr.bf16.mxu0 %v5692
        %6325 = vmatpush1.bf16.msra.mxu0 %v5691
        %6326 = vmatprep.subr.bf16.mxu0 %v5752
        %6327 = vmatpush2.bf16.msra.mxu0 %v5751
        %6328 = vmatprep.subr.bf16.mxu0 %v5748
        %6329 = vmatpush2.bf16.msra.mxu0 %v5747
        %6330 = vmatprep.subr.bf16.mxu0 %v5744
        %6331 = vmatpush2.bf16.msra.mxu0 %v5743
        %6332 = vmatprep.subr.bf16.mxu0 %v5740
        %6333 = vmatpush2.bf16.msra.mxu0 %v5739
        %6334 = vmatprep.subr.bf16.mxu0 %v5736
        %6335 = vmatpush2.bf16.msra.mxu0 %v5735
        %6336 = vmatprep.subr.bf16.mxu0 %v5732
        %6337 = vmatpush2.bf16.msra.mxu0 %v5731
        %6338 = vmatprep.subr.bf16.mxu0 %v5728
        %6339 = vmatpush2.bf16.msra.mxu0 %v5727
        %6340 = vmatprep.subr.bf16.mxu0 %v5724
        %6341 = vmatpush2.bf16.msra.mxu0 %v5723
        %6342 = vmatprep.mubr.bf16.mxu0 %v4942
        %6343 = vmatmul.mubr.bf16.gmra.mxu0 %v4941
        %v6344 = vpop.f32.mrf.mxu0
        %v6345 = vadd.f32 %v6272, %v6344
        %v6346 = vpop.f32.mrf.mxu0
        %v6347 = vadd.f32 %v6274, %v6346
        %v6348 = vpop.f32.mrf.mxu0
        %v6349 = vadd.f32 %v6276, %v6348
        %v6350 = vpop.f32.mrf.mxu0
        %v6351 = vadd.f32 %v6278, %v6350
        %6352 = vmatprep.mubr.bf16.mxu0 %v4948
        %6353 = vmatmul.mubr.bf16.gmra.mxu0 %v4947
        %v6354 = vpop.f32.mrf.mxu0
        %v6355 = vadd.f32 %v6282, %v6354
        %v6356 = vpop.f32.mrf.mxu0
        %v6357 = vadd.f32 %v6284, %v6356
        %v6358 = vpop.f32.mrf.mxu0
        %v6359 = vadd.f32 %v6286, %v6358
        %v6360 = vpop.f32.mrf.mxu0
        %v6361 = vadd.f32 %v6288, %v6360
        %6362 = vmatprep.mubr.bf16.mxu0 %v4954
        %6363 = vmatmul.mubr.bf16.gmra.mxu0 %v4953
        %v6364 = vpop.f32.mrf.mxu0
        %v6365 = vadd.f32 %v6292, %v6364
        %v6366 = vpop.f32.mrf.mxu0
        %v6367 = vadd.f32 %v6294, %v6366
        %v6368 = vpop.f32.mrf.mxu0
        %v6369 = vadd.f32 %v6296, %v6368
        %v6370 = vpop.f32.mrf.mxu0
        %v6371 = vadd.f32 %v6298, %v6370
        %6372 = vmatprep.mubr.bf16.mxu0 %v4960
        %6373 = vmatmul.mubr.bf16.gmra.mxu0 %v4959
        %v6374 = vpop.f32.mrf.mxu0
        %v6375 = vadd.f32 %v6302, %v6374
        %v6376 = vpop.f32.mrf.mxu0
        %v6377 = vadd.f32 %v6304, %v6376
        %v6378 = vpop.f32.mrf.mxu0
        %v6379 = vadd.f32 %v6306, %v6378
        %v6380 = vpop.f32.mrf.mxu0
        %v6381 = vadd.f32 %v6308, %v6380
        %6382 = vdwg.mxu0
        %v6383 = vadd.f32 %v4390, %v6126
        %v6384 = vadd.f32 %v4392, %v6128
        %v6385 = vadd.f32 %v4609, %v6345
        %v6386 = vadd.f32 %v4611, %v6347
        %v6387 = vadd.f32 %v4394, %v6130
        %v6388 = vadd.f32 %v4396, %v6132
        %v6389 = vadd.f32 %v4613, %v6349
        %v6390 = vadd.f32 %v4615, %v6351
        %v6391 = vadd.f32 %v4400, %v6136
        %v6392 = vadd.f32 %v4402, %v6138
        %v6393 = vadd.f32 %v4619, %v6355
        %v6394 = vadd.f32 %v4621, %v6357
        %v6395 = vadd.f32 %v4404, %v6140
        %v6396 = vadd.f32 %v4406, %v6142
        %v6397 = vadd.f32 %v4623, %v6359
        %v6398 = vadd.f32 %v4625, %v6361
        %v6399 = vadd.f32 %v4410, %v6146
        %v6400 = vadd.f32 %v4412, %v6148
        %v6401 = vadd.f32 %v4629, %v6365
        %v6402 = vadd.f32 %v4631, %v6367
        %v6403 = vadd.f32 %v4414, %v6150
        %v6404 = vadd.f32 %v4416, %v6152
        %v6405 = vadd.f32 %v4633, %v6369
        %v6406 = vadd.f32 %v4635, %v6371
        %v6407 = vadd.f32 %v4420, %v6156
        %v6408 = vadd.f32 %v4422, %v6158
        %v6409 = vadd.f32 %v4639, %v6375
        %v6410 = vadd.f32 %v4641, %v6377
        %v6411 = vadd.f32 %v4424, %v6160
        %v6412 = vadd.f32 %v4426, %v6162
        %v6413 = vadd.f32 %v4643, %v6379
        %v6414 = vadd.f32 %v4645, %v6381
        %v6415 = vld [vmem:[#allocation11] sm:$0xf]
        %v6417 = vlaneseq
        %v6418 = vshrl.u32 %v6417, 7
        %v6419 = vsub.s32 0, %v6418
        %v6420 = vrot.slane %v6415, %v6419
        %v6421 = vlaneseq
        %v6422 = vshrl.u32 %v6421, 7
        %v6423 = vsub.s32 1, %v6422
        %v6424 = vrot.slane %v6415, %v6423
        %v6425 = vlaneseq
        %v6426 = vshrl.u32 %v6425, 7
        %v6427 = vsub.s32 2, %v6426
        %v6428 = vrot.slane %v6415, %v6427
        %v6429 = vlaneseq
        %v6430 = vshrl.u32 %v6429, 7
        %v6431 = vsub.s32 3, %v6430
        %v6432 = vrot.slane %v6415, %v6431
        %v6437 = vadd.f32 %v6383, %v6420
        %v6438 = vadd.f32 %v6384, %v6424
        %v6439 = vadd.f32 %v6385, %v6428
        %v6440 = vadd.f32 %v6386, %v6432
        %v6441 = vadd.f32 %v6387, %v6420
        %v6442 = vadd.f32 %v6388, %v6424
        %v6443 = vadd.f32 %v6389, %v6428
        %v6444 = vadd.f32 %v6390, %v6432
        %v6445 = vadd.f32 %v6391, %v6420
        %v6446 = vadd.f32 %v6392, %v6424
        %v6447 = vadd.f32 %v6393, %v6428
        %v6448 = vadd.f32 %v6394, %v6432
        %v6449 = vadd.f32 %v6395, %v6420
        %v6450 = vadd.f32 %v6396, %v6424
        %v6451 = vadd.f32 %v6397, %v6428
        %v6452 = vadd.f32 %v6398, %v6432
        %v6453 = vadd.f32 %v6399, %v6420
        %v6454 = vadd.f32 %v6400, %v6424
        %v6455 = vadd.f32 %v6401, %v6428
        %v6456 = vadd.f32 %v6402, %v6432
        %v6457 = vadd.f32 %v6403, %v6420
        %v6458 = vadd.f32 %v6404, %v6424
        %v6459 = vadd.f32 %v6405, %v6428
        %v6460 = vadd.f32 %v6406, %v6432
        %v6461 = vadd.f32 %v6407, %v6420
        %v6462 = vadd.f32 %v6408, %v6424
        %v6463 = vadd.f32 %v6409, %v6428
        %v6464 = vadd.f32 %v6410, %v6432
        %v6465 = vadd.f32 %v6411, %v6420
        %v6466 = vadd.f32 %v6412, %v6424
        %v6467 = vadd.f32 %v6413, %v6428
        %v6468 = vadd.f32 %v6414, %v6432
        %v6469 = vmax.f32 %v6437, 0.0
        %v6470 = vmax.f32 %v6438, 0.0
        %v6471 = vmax.f32 %v6439, 0.0
        %v6472 = vmax.f32 %v6440, 0.0
        %v6473 = vmax.f32 %v6441, 0.0
        %v6474 = vmax.f32 %v6442, 0.0
        %v6475 = vmax.f32 %v6443, 0.0
        %v6476 = vmax.f32 %v6444, 0.0
        %v6477 = vmax.f32 %v6445, 0.0
        %v6478 = vmax.f32 %v6446, 0.0
        %v6479 = vmax.f32 %v6447, 0.0
        %v6480 = vmax.f32 %v6448, 0.0
        %v6481 = vmax.f32 %v6449, 0.0
        %v6482 = vmax.f32 %v6450, 0.0
        %v6483 = vmax.f32 %v6451, 0.0
        %v6484 = vmax.f32 %v6452, 0.0
        %v6485 = vmax.f32 %v6453, 0.0
        %v6486 = vmax.f32 %v6454, 0.0
        %v6487 = vmax.f32 %v6455, 0.0
        %v6488 = vmax.f32 %v6456, 0.0
        %v6489 = vmax.f32 %v6457, 0.0
        %v6490 = vmax.f32 %v6458, 0.0
        %v6491 = vmax.f32 %v6459, 0.0
        %v6492 = vmax.f32 %v6460, 0.0
        %v6493 = vmax.f32 %v6461, 0.0
        %v6494 = vmax.f32 %v6462, 0.0
        %v6495 = vmax.f32 %v6463, 0.0
        %v6496 = vmax.f32 %v6464, 0.0
        %v6497 = vmax.f32 %v6465, 0.0
        %v6498 = vmax.f32 %v6466, 0.0
        %v6499 = vmax.f32 %v6467, 0.0
        %v6500 = vmax.f32 %v6468, 0.0
        %v6501 = vadd.f32 %v6469, %v6470
        %v6502 = vadd.f32 %v6501, %v6471
        %v6503 = vadd.f32 %v6502, %v6472
        %6504 = vadd.xlane.f32.xlu0 %v6503
        %v6505 = vpop.xlane.xlu0 %6504
        %v6506 = vadd.f32 %v6473, %v6474
        %v6507 = vadd.f32 %v6506, %v6475
        %v6508 = vadd.f32 %v6507, %v6476
        %6509 = vadd.xlane.f32.xlu0 %v6508
        %v6510 = vpop.xlane.xlu0 %6509
        %v6511 = vadd.f32 %v6477, %v6478
        %v6512 = vadd.f32 %v6511, %v6479
        %v6513 = vadd.f32 %v6512, %v6480
        %6514 = vadd.xlane.f32.xlu0 %v6513
        %v6515 = vpop.xlane.xlu0 %6514
        %v6516 = vadd.f32 %v6481, %v6482
        %v6517 = vadd.f32 %v6516, %v6483
        %v6518 = vadd.f32 %v6517, %v6484
        %6519 = vadd.xlane.f32.xlu0 %v6518
        %v6520 = vpop.xlane.xlu0 %6519
        %v6521 = vadd.f32 %v6485, %v6486
        %v6522 = vadd.f32 %v6521, %v6487
        %v6523 = vadd.f32 %v6522, %v6488
        %6524 = vadd.xlane.f32.xlu0 %v6523
        %v6525 = vpop.xlane.xlu0 %6524
        %v6526 = vadd.f32 %v6489, %v6490
        %v6527 = vadd.f32 %v6526, %v6491
        %v6528 = vadd.f32 %v6527, %v6492
        %6529 = vadd.xlane.f32.xlu0 %v6528
        %v6530 = vpop.xlane.xlu0 %6529
        %v6531 = vadd.f32 %v6493, %v6494
        %v6532 = vadd.f32 %v6531, %v6495
        %v6533 = vadd.f32 %v6532, %v6496
        %6534 = vadd.xlane.f32.xlu0 %v6533
        %v6535 = vpop.xlane.xlu0 %6534
        %v6536 = vadd.f32 %v6497, %v6498
        %v6537 = vadd.f32 %v6536, %v6499
        %v6538 = vadd.f32 %v6537, %v6500
        %6539 = vadd.xlane.f32.xlu0 %v6538
        %v6540 = vpop.xlane.xlu0 %6539
        %v6541 = vld [vmem:[%s254] sm:$0xff]
        %v6542 = vld [vmem:[%s254 + $0x8] sm:$0xff]
        %v6543 = vld [vmem:[%s254 + $0x10] sm:$0xff]
        %v6544 = vld [vmem:[%s254 + $0x18] sm:$0xff]
        %v6545 = vld [vmem:[%s254 + $0x20] sm:$0xff]
        %v6546 = vld [vmem:[%s254 + $0x28] sm:$0xff]
        %v6547 = vld [vmem:[%s254 + $0x30] sm:$0xff]
        %v6548 = vld [vmem:[%s254 + $0x38] sm:$0xff]
        %v6549 = vld [vmem:[%s254 + $0x40] sm:$0xff]
        %v6550 = vld [vmem:[%s254 + $0x48] sm:$0xff]
        %v6551 = vld [vmem:[%s254 + $0x50] sm:$0xff]
        %v6552 = vld [vmem:[%s254 + $0x58] sm:$0xff]
        %v6553 = vld [vmem:[%s254 + $0x60] sm:$0xff]
        %v6554 = vld [vmem:[%s254 + $0x68] sm:$0xff]
        %v6555 = vld [vmem:[%s254 + $0x70] sm:$0xff]
        %v6556 = vld [vmem:[%s254 + $0x78] sm:$0xff]
        %v6557 = vld [vmem:[%s254 + $0x80] sm:$0xff]
        %v6558 = vld [vmem:[%s254 + $0x88] sm:$0xff]
        %v6559 = vld [vmem:[%s254 + $0x90] sm:$0xff]
        %v6560 = vld [vmem:[%s254 + $0x98] sm:$0xff]
        %v6561 = vld [vmem:[%s254 + $0xa0] sm:$0xff]
        %v6562 = vld [vmem:[%s254 + $0xa8] sm:$0xff]
        %v6563 = vld [vmem:[%s254 + $0xb0] sm:$0xff]
        %v6564 = vld [vmem:[%s254 + $0xb8] sm:$0xff]
        %v6565 = vld [vmem:[%s254 + $0xc0] sm:$0xff]
        %v6566 = vld [vmem:[%s254 + $0xc8] sm:$0xff]
        %v6567 = vld [vmem:[%s254 + $0xd0] sm:$0xff]
        %v6568 = vld [vmem:[%s254 + $0xd8] sm:$0xff]
        %v6569 = vld [vmem:[%s254 + $0xe0] sm:$0xff]
        %v6570 = vld [vmem:[%s254 + $0xe8] sm:$0xff]
        %v6571 = vld [vmem:[%s254 + $0xf0] sm:$0xff]
        %v6572 = vld [vmem:[%s254 + $0xf8] sm:$0xff]
        %v6573 = vmul.f32 %v6541, %v6505
        %v6574 = vmul.f32 %v6542, %v6505
        %v6575 = vmul.f32 %v6543, %v6505
        %v6576 = vmul.f32 %v6544, %v6505
        %v6577 = vmul.f32 %v6545, %v6510
        %v6578 = vmul.f32 %v6546, %v6510
        %v6579 = vmul.f32 %v6547, %v6510
        %v6580 = vmul.f32 %v6548, %v6510
        %v6581 = vmul.f32 %v6549, %v6515
        %v6582 = vmul.f32 %v6550, %v6515
        %v6583 = vmul.f32 %v6551, %v6515
        %v6584 = vmul.f32 %v6552, %v6515
        %v6585 = vmul.f32 %v6553, %v6520
        %v6586 = vmul.f32 %v6554, %v6520
        %v6587 = vmul.f32 %v6555, %v6520
        %v6588 = vmul.f32 %v6556, %v6520
        %v6589 = vmul.f32 %v6557, %v6525
        %v6590 = vmul.f32 %v6558, %v6525
        %v6591 = vmul.f32 %v6559, %v6525
        %v6592 = vmul.f32 %v6560, %v6525
        %v6593 = vmul.f32 %v6561, %v6530
        %v6594 = vmul.f32 %v6562, %v6530
        %v6595 = vmul.f32 %v6563, %v6530
        %v6596 = vmul.f32 %v6564, %v6530
        %v6597 = vmul.f32 %v6565, %v6535
        %v6598 = vmul.f32 %v6566, %v6535
        %v6599 = vmul.f32 %v6567, %v6535
        %v6600 = vmul.f32 %v6568, %v6535
        %v6601 = vmul.f32 %v6569, %v6540
        %v6602 = vmul.f32 %v6570, %v6540
        %v6603 = vmul.f32 %v6571, %v6540
        %v6604 = vmul.f32 %v6572, %v6540
        %6605 = vst [vmem:[%s296] sm:$0xff] %v6573
        %6606 = vst [vmem:[%s296 + $0x8] sm:$0xff] %v6574
        %6607 = vst [vmem:[%s296 + $0x10] sm:$0xff] %v6575
        %6608 = vst [vmem:[%s296 + $0x18] sm:$0xff] %v6576
        %6609 = vst [vmem:[%s296 + $0x20] sm:$0xff] %v6577
        %6610 = vst [vmem:[%s296 + $0x28] sm:$0xff] %v6578
        %6611 = vst [vmem:[%s296 + $0x30] sm:$0xff] %v6579
        %6612 = vst [vmem:[%s296 + $0x38] sm:$0xff] %v6580
        %6613 = vst [vmem:[%s296 + $0x40] sm:$0xff] %v6581
        %6614 = vst [vmem:[%s296 + $0x48] sm:$0xff] %v6582
        %6615 = vst [vmem:[%s296 + $0x50] sm:$0xff] %v6583
        %6616 = vst [vmem:[%s296 + $0x58] sm:$0xff] %v6584
        %6617 = vst [vmem:[%s296 + $0x60] sm:$0xff] %v6585
        %6618 = vst [vmem:[%s296 + $0x68] sm:$0xff] %v6586
        %6619 = vst [vmem:[%s296 + $0x70] sm:$0xff] %v6587
        %6620 = vst [vmem:[%s296 + $0x78] sm:$0xff] %v6588
        %6621 = vst [vmem:[%s296 + $0x80] sm:$0xff] %v6589
        %6622 = vst [vmem:[%s296 + $0x88] sm:$0xff] %v6590
        %6623 = vst [vmem:[%s296 + $0x90] sm:$0xff] %v6591
        %6624 = vst [vmem:[%s296 + $0x98] sm:$0xff] %v6592
        %6625 = vst [vmem:[%s296 + $0xa0] sm:$0xff] %v6593
        %6626 = vst [vmem:[%s296 + $0xa8] sm:$0xff] %v6594
        %6627 = vst [vmem:[%s296 + $0xb0] sm:$0xff] %v6595
        %6628 = vst [vmem:[%s296 + $0xb8] sm:$0xff] %v6596
        %6629 = vst [vmem:[%s296 + $0xc0] sm:$0xff] %v6597
        %6630 = vst [vmem:[%s296 + $0xc8] sm:$0xff] %v6598
        %6631 = vst [vmem:[%s296 + $0xd0] sm:$0xff] %v6599
        %6632 = vst [vmem:[%s296 + $0xd8] sm:$0xff] %v6600
        %6633 = vst [vmem:[%s296 + $0xe0] sm:$0xff] %v6601
        %6634 = vst [vmem:[%s296 + $0xe8] sm:$0xff] %v6602
        %6635 = vst [vmem:[%s296 + $0xf0] sm:$0xff] %v6603
        %6636 = vst [vmem:[%s296 + $0xf8] sm:$0xff] %v6604
        %s6637 = sand.u32 %s142, 1
        %s6638 = scalar_lea.sflag [#allocation5], %s6637
        %s6639 = sand.u32 %s142, 1
        %s6640 = smul.addr %s6639, 256
        %s6641 = scalar_lea.vmem [#allocation12], %s6640
        // Predicated region
        $region61: #{tpu_custom_call.1} parent=39 // pred_check
          %p6642 = pneg %p152
        $region62: #{tpu_custom_call.1} parent=39 // pred_check_branch
          %6644 = sbr.rel (%p6642) target = $region64
        $region63: #{tpu_custom_call.1} parent=39 // pred_region
          %s6646 = ssub.s32 4096, 4096
          %6647 = vsyncadd %s6638, %s6646
          %s6648 = smul.addr %s24, 32
          %s6649 = smul.addr %s6648, 128
          %s6650 = scalar_lea.hbm %s5, %s6649
          %s6651 = sshll.u32 %s6641, 4
          %s6652 = int_to_ptr.vmem [resolvable:$true] %s6651
          %6657 = dma.vmem_to_hbm [thread:$0]  %s6652, 4096, %s6650, %s6638, 512, 512, 32
        $region64: #{tpu_custom_call.1} parent=39 // pred_fallthru
          _
      $region40: #{tpu_custom_call.1} parent=5 // pred_fallthru
        _
      %p6658 = scmp.le.s32.totalorder 2, %s19
      // Predicated region
      $region65: #{tpu_custom_call.1} parent=5 // pred_check
        %p6659 = pneg %p6658
      $region66: #{tpu_custom_call.1} parent=5 // pred_check_branch
        %6661 = sbr.rel (%p6659) target = $region68
      $region67: #{tpu_custom_call.1} parent=5 // pred_region
        %s6662 = ssub.s32 %s19, 2
        // Predicated region
        $region69: #{tpu_custom_call.1} parent=67 // pred_check
          %p6663 = pneg %p158
        $region70: #{tpu_custom_call.1} parent=67 // pred_check_branch
          %6665 = sbr.rel (%p6663) target = $region72
        $region71: #{tpu_custom_call.1} parent=67 // pred_region
          %s6666 = sand.u32 %s143, 1
          %s6667 = scalar_lea.sflag [#allocation5], %s6666
          %s6668 = sand.u32 %s143, 1
          %s6669 = smul.addr %s6668, 256
          %s6670 = scalar_lea.vmem [#allocation12], %s6669
          %6671 = dma.done %s6667, 4096
        $region72: #{tpu_custom_call.1} parent=67 // pred_fallthru
          _
      $region68: #{tpu_custom_call.1} parent=5 // pred_fallthru
        _
    $region6: #{tpu_custom_call.1} parent=1 // loop_footer
      %s23 = sadd.s32 1, %s19
    $region7: #{tpu_custom_call.1} parent=1 // loop_footer_branch
      %18 = sbr.rel target = $region3
    $region8: #{tpu_custom_call.1} parent=1 // loop_exit
      _
    %6672 = vsyncpa [#allocation4], 1
    %s6673 = scalar_lea.sflag [#allocation4], 1
    %6674 = vsyncpa %s6673, 1
    %6675 = vsyncpa [#allocation7], 1
    %6676 = vsyncpa [#allocation10], 1
    %6677 = vsyncpa [#allocation5], 1
    %s6678 = scalar_lea.sflag [#allocation5], 1
    %6679 = vsyncpa %s6678, 1

</llo_original>
